<compile_context>
chip_gen: v5e
topology: v5e:2x2
jax: 0.10.0
libtpu: 0.0.40
codegen_flags: <defaults>
</compile_context>

<pallas_src>
import functools
import math

import jax
import jax.numpy as jnp
from jax import lax
from jax.experimental import pallas as pl
from jax.experimental.pallas import tpu as pltpu


def _round_up(x, m):
    return (x + m - 1) // m * m


# ----------------------------------------------------------------------------
# Fused kernel: all RNN layers + final Linear in a single pallas_call
# ----------------------------------------------------------------------------
def _fused_rnn_kernel(
    n_layers,
    x_ref,       # (T, Bp, Dp)        layer-0 input (time-major, zero padded)
    h0_ref,      # (L, Bp, Hp)        initial hidden states
    wih0_ref,    # (Dp, Hp)           layer-0 W_ih^T
    wih_ref,     # (max(L-1,1),Hp,Hp) W_ih^T for layers 1..L-1
    whh_ref,     # (L, Hp, Hp)        W_hh^T
    b_ref,       # (L, 1, Hp)         b_ih + b_hh per layer
    fcw_ref,     # (Hp, Op)           fc weight^T
    fcb_ref,     # (1, Op)            fc bias
    out_ref,     # (T, Bp, Op)        fc(r_out) per timestep (lane-dense)
    hT_ref,      # (L, Bp, Hp)        final hidden state per layer
    seq_ref,     # scratch (T, Bp, Hp): current layer's hidden sequence
    xw_ref,      # scratch (T, Bp, Hp): hoisted input projection (+ bias)
):
    T, Bp, Hp = seq_ref.shape
    Dp = x_ref.shape[2]

    def run_layer(layer_idx):
        # Hoist weight / initial-hidden loads out of the time loop.
        whh = whh_ref[layer_idx]          # (Hp, Hp) — stays register/VMEM resident
        h0 = h0_ref[layer_idx]            # (Bp, Hp)

        def step(t, h):
            # Only one small matmul on the serial critical path per step.
            pre = xw_ref[t] + jnp.dot(h, whh, preferred_element_type=jnp.float32)
            h_new = jnp.tanh(pre)
            seq_ref[t] = h_new
            return h_new

        hT = lax.fori_loop(0, T, step, h0, unroll=True)
        hT_ref[layer_idx] = hT

    # ---- Layer 0: hoisted input projection over the whole sequence ----------
    x2 = x_ref[...].reshape(T * Bp, Dp)                    # layout-preserving
    xw_ref[...] = (
        jnp.dot(x2, wih0_ref[...], preferred_element_type=jnp.float32) + b_ref[0]
    ).reshape(T, Bp, Hp)
    run_layer(0)

    # ---- Layers 1 .. L-1 (input = previous layer's hidden sequence) ---------
    for l in range(1, n_layers):
        s2 = seq_ref[...].reshape(T * Bp, Hp)
        xw_ref[...] = (
            jnp.dot(s2, wih_ref[l - 1], preferred_element_type=jnp.float32) + b_ref[l]
        ).reshape(T, Bp, Hp)
        run_layer(l)

    # ---- Final Linear on the top layer's sequence (lane-dense output) -------
    top = seq_ref[...].reshape(T * Bp, Hp)
    y = jnp.dot(top, fcw_ref[...], preferred_element_type=jnp.float32) + fcb_ref[...]
    out_ref[...] = y.reshape(T, Bp, out_ref.shape[2])


# ----------------------------------------------------------------------------
# Model wrapper (padding + single pallas_call)
# ----------------------------------------------------------------------------
def rnn_forward(params, x, hidden):
    """x: (B, T, input_size) f32; hidden: (n_layers, B, H) f32.

    Returns (output, hidden_out) with output: (B, T, 1), hidden_out: (n_layers, B, H),
    matching PyTorch nn.RNN(batch_first=True) + nn.Linear semantics.
    """
    f32 = jnp.float32
    B, T, Din = x.shape
    L = len(params["w_ih"])
    H = params["w_hh"][0].shape[0]
    O = params["fc_w"].shape[0]

    # Lane/sublane-dense padded sizes.
    Bp = _round_up(max(B, 8), 8)
    Hp = _round_up(H, 128)
    Dp = _round_up(Din, 128)
    Op = _round_up(O, 128)

    # Time-major, zero-padded layer-0 input: (T, Bp, Dp).
    x_t = jnp.transpose(x.astype(f32), (1, 0, 2))
    x_p = jnp.zeros((T, Bp, Dp), f32).at[:, :B, :Din].set(x_t)

    h0_p = jnp.zeros((L, Bp, Hp), f32).at[:, :B, :H].set(hidden.astype(f32))

    # Zero-padded, pre-transposed weights (padding keeps the math exact:
    # padded lanes of h stay identically 0 through tanh(0) since the padded
    # weight rows/cols and biases are 0).
    wih0 = jnp.zeros((Dp, Hp), f32).at[:Din, :H].set(params["w_ih"][0].T.astype(f32))
    wih_rest = jnp.zeros((max(L - 1, 1), Hp, Hp), f32)
    for l in range(1, L):
        wih_rest = wih_rest.at[l - 1, :H, :H].set(params["w_ih"][l].T.astype(f32))
    whh = jnp.zeros((L, Hp, Hp), f32)
    bias = jnp.zeros((L, 1, Hp), f32)
    for l in range(L):
        whh = whh.at[l, :H, :H].set(params["w_hh"][l].T.astype(f32))
        bias = bias.at[l, 0, :H].set((params["b_ih"][l] + params["b_hh"][l]).astype(f32))

    fcw = jnp.zeros((Hp, Op), f32).at[:H, :O].set(params["fc_w"].T.astype(f32))
    fcb = jnp.zeros((1, Op), f32).at[0, :O].set(params["fc_b"].astype(f32))

    vmem = pl.BlockSpec(memory_space=pltpu.MemorySpace.VMEM)

    out_p, hT_p = pl.pallas_call(
        functools.partial(_fused_rnn_kernel, L),
        out_shape=(
            jax.ShapeDtypeStruct((T, Bp, Op), f32),
            jax.ShapeDtypeStruct((L, Bp, Hp), f32),
        ),
        in_specs=[vmem] * 8,
        out_specs=(vmem, vmem),
        scratch_shapes=[
            pltpu.VMEM((T, Bp, Hp), f32),   # current layer hidden sequence
            pltpu.VMEM((T, Bp, Hp), f32),   # hoisted input projection (+ bias)
        ],
        compiler_params=pltpu.CompilerParams(
            vmem_limit_bytes=32 * 1024 * 1024,
        ),
    )(x_p, h0_p, wih0, wih_rest, whh, bias, fcw, fcb)

    # TODO(synk): for long sequences / large batches, tile over T (grid axis
    # marked "arbitrary") with double-buffered BlockSpecs and shard the batch
    # axis over v7x's two TensorCores instead of the whole-sequence-in-VMEM
    # layout used here (which comfortably fits these shapes).

    output = jnp.transpose(out_p[:, :B, :O], (1, 0, 2))   # (B, T, O)
    hidden_out = hT_p[:, :B, :H]                          # (L, B, H)
    return output, hidden_out


# ----------------------------------------------------------------------------
# Deterministic parameter init (PyTorch-style U(-1/sqrt(H), 1/sqrt(H)))
# ----------------------------------------------------------------------------
def init_params(key, input_size, hidden_dim, n_layers, output_size):
    k = 1.0 / math.sqrt(hidden_dim)
    params = {"w_ih": [], "w_hh": [], "b_ih": [], "b_hh": []}
    for l in range(n_layers):
        din = input_size if l == 0 else hidden_dim
        key, k1, k2, k3, k4 = jax.random.split(key, 5)
        params["w_ih"].append(jax.random.uniform(k1, (hidden_dim, din), jnp.float32, -k, k))
        params["w_hh"].append(jax.random.uniform(k2, (hidden_dim, hidden_dim), jnp.float32, -k, k))
        params["b_ih"].append(jax.random.uniform(k3, (hidden_dim,), jnp.float32, -k, k))
        params["b_hh"].append(jax.random.uniform(k4, (hidden_dim,), jnp.float32, -k, k))
    key, k5, k6 = jax.random.split(key, 3)
    params["fc_w"] = jax.random.uniform(k5, (output_size, hidden_dim), jnp.float32, -k, k)
    params["fc_b"] = jax.random.uniform(k6, (output_size,), jnp.float32, -k, k)
    return params


# ----------------------------------------------------------------------------
# Pure-JAX reference (for the correctness check)
# ----------------------------------------------------------------------------
def rnn_forward_ref(params, x, hidden):
    hp = jax.lax.Precision.HIGHEST
    x_t = jnp.transpose(x, (1, 0, 2))
    layer_in = x_t
    finals = []
    for l in range(len(params["w_ih"])):
        h = hidden[l]
        outs = []
        for t in range(layer_in.shape[0]):
            h = jnp.tanh(
                jnp.dot(layer_in[t], params["w_ih"][l].T, precision=hp)
                + jnp.dot(h, params["w_hh"][l].T, precision=hp)
                + params["b_ih"][l] + params["b_hh"][l])
            outs.append(h)
        layer_in = jnp.stack(outs, axis=0)
        finals.append(h)
    out_t = jnp.dot(layer_in, params["fc_w"].T, precision=hp) + params["fc_b"]
    return jnp.transpose(out_t, (1, 0, 2)), jnp.stack(finals, axis=0)


if __name__ == "__main__":
    # Small shapes consistent with the module's defaults:
    #   x: (batch, seq, input_size_tweet), hidden: (n_layers, batch, hidden_dim)
    batch, seq = 2, 8
    input_size, hidden_dim, n_layers, output_size = 1000, 100, 5, 1

    key = jax.random.PRNGKey(0)
    key, kx, kh = jax.random.split(key, 3)
    params = init_params(key, input_size, hidden_dim, n_layers, output_size)
    x = jax.random.normal(kx, (batch, seq, input_size), jnp.float32)
    hidden0 = jax.random.normal(kh, (n_layers, batch, hidden_dim), jnp.float32)

    fwd = jax.jit(rnn_forward)
    output, hidden_out = fwd(params, x, hidden0)
    jax.block_until_ready((output, hidden_out))

    # Sanity check against pure-JAX reference.
    ref_out, ref_hid = rnn_forward_ref(params, x, hidden0)
    assert output.shape == (batch, seq, output_size)
    assert hidden_out.shape == (n_layers, batch, hidden_dim)
    assert jnp.allclose(output, ref_out, rtol=1e-3, atol=1e-3), \
        float(jnp.max(jnp.abs(output - ref_out)))
    assert jnp.allclose(hidden_out, ref_hid, rtol=1e-3, atol=1e-3), \
        float(jnp.max(jnp.abs(hidden_out - ref_hid)))

    print("KERNEL_OK")
</pallas_src>

<mosaic_0001>
module attributes {stable_mosaic.version = 11 : i64} {
  func.func @_fused_rnn_kernel(%arg0: memref<8x8x1024xf32, #tpu.memory_space<vmem>>, %arg1: memref<5x8x128xf32, #tpu.memory_space<vmem>>, %arg2: memref<1024x128xf32, #tpu.memory_space<vmem>>, %arg3: memref<4x128x128xf32, #tpu.memory_space<vmem>>, %arg4: memref<5x128x128xf32, #tpu.memory_space<vmem>>, %arg5: memref<5x1x128xf32, #tpu.memory_space<vmem>>, %arg6: memref<128x128xf32, #tpu.memory_space<vmem>>, %arg7: memref<1x128xf32, #tpu.memory_space<vmem>>, %arg8: memref<8x8x128xf32, #tpu.memory_space<vmem>>, %arg9: memref<5x8x128xf32, #tpu.memory_space<vmem>>, %arg10: memref<8x8x128xf32, #tpu.memory_space<vmem>>, %arg11: memref<8x8x128xf32, #tpu.memory_space<vmem>>) attributes {dimension_semantics = [], scalar_prefetch = 0 : i64, scratch_operands = 2 : i64, tpu.core_type = #tpu.core_type<tc>} {
    %c0 = arith.constant 0 : index
    %c0_0 = arith.constant 0 : index
    %c0_1 = arith.constant 0 : index
    %0 = vector.load %arg0[%c0, %c0_0, %c0_1] : memref<8x8x1024xf32, #tpu.memory_space<vmem>>, vector<8x8x1024xf32>
    %1 = vector.shape_cast %0 : vector<8x8x1024xf32> to vector<64x1024xf32>
    %c0_2 = arith.constant 0 : index
    %c0_3 = arith.constant 0 : index
    %2 = vector.load %arg2[%c0_2, %c0_3] : memref<1024x128xf32, #tpu.memory_space<vmem>>, vector<1024x128xf32>
    %cst = arith.constant dense<0.000000e+00> : vector<64x128xf32>
    %3 = tpu.matmul %1, %2, %cst {dimension_numbers = #tpu.dot_dimension_numbers<[1], [0], [0], [1], [0, 0, 1, 1], [], []>} : vector<64x1024xf32>, vector<1024x128xf32>, vector<64x128xf32> -> vector<64x128xf32>
    %c0_4 = arith.constant 0 : index
    %c0_5 = arith.constant 0 : index
    %c0_6 = arith.constant 0 : index
    %4 = vector.load %arg5[%c0_4, %c0_5, %c0_6] : memref<5x1x128xf32, #tpu.memory_space<vmem>>, vector<1x1x128xf32>
    %5 = vector.shape_cast %4 : vector<1x1x128xf32> to vector<1x128xf32>
    %6 = vector.broadcast %5 : vector<1x128xf32> to vector<64x128xf32>
    %7 = arith.addf %3, %6 : vector<64x128xf32>
    %8 = vector.shape_cast %7 : vector<64x128xf32> to vector<8x8x128xf32>
    %c0_7 = arith.constant 0 : index
    %c0_8 = arith.constant 0 : index
    %c0_9 = arith.constant 0 : index
    %9 = vector.load %arg11[%c0_7, %c0_8, %c0_9] : memref<8x8x128xf32, #tpu.memory_space<vmem>>, vector<8x8x128xf32>
    tpu.vector_store %arg11[%c0_7, %c0_8, %c0_9], %8 {strides = array<i32>} : memref<8x8x128xf32, #tpu.memory_space<vmem>>, vector<8x8x128xf32>,
    %c0_10 = arith.constant 0 : index
    %c0_11 = arith.constant 0 : index
    %c0_12 = arith.constant 0 : index
    %10 = vector.load %arg4[%c0_10, %c0_11, %c0_12] : memref<5x128x128xf32, #tpu.memory_space<vmem>>, vector<1x128x128xf32>
    %11 = vector.shape_cast %10 : vector<1x128x128xf32> to vector<128x128xf32>
    %c0_13 = arith.constant 0 : index
    %c0_14 = arith.constant 0 : index
    %c0_15 = arith.constant 0 : index
    %12 = vector.load %arg1[%c0_13, %c0_14, %c0_15] : memref<5x8x128xf32, #tpu.memory_space<vmem>>, vector<1x8x128xf32>
    %13 = vector.shape_cast %12 : vector<1x8x128xf32> to vector<8x128xf32>
    %c0_i32 = arith.constant 0 : i32
    %14 = arith.index_cast %c0_i32 : i32 to index
    %c0_16 = arith.constant 0 : index
    %c0_17 = arith.constant 0 : index
    %15 = vector.load %arg11[%14, %c0_16, %c0_17] : memref<8x8x128xf32, #tpu.memory_space<vmem>>, vector<1x8x128xf32>
    %16 = vector.shape_cast %15 : vector<1x8x128xf32> to vector<8x128xf32>
    %cst_18 = arith.constant dense<0.000000e+00> : vector<8x128xf32>
    %17 = tpu.matmul %13, %11, %cst_18 {dimension_numbers = #tpu.dot_dimension_numbers<[1], [0], [0], [1], [0, 0, 1, 1], [], []>} : vector<8x128xf32>, vector<128x128xf32>, vector<8x128xf32> -> vector<8x128xf32>
    %18 = arith.addf %16, %17 : vector<8x128xf32>
    %19 = math.tanh %18 : vector<8x128xf32>
    %20 = arith.index_cast %c0_i32 : i32 to index
    %c0_19 = arith.constant 0 : index
    %c0_20 = arith.constant 0 : index
    %21 = vector.load %arg10[%20, %c0_19, %c0_20] : memref<8x8x128xf32, #tpu.memory_space<vmem>>, vector<1x8x128xf32>
    %22 = vector.shape_cast %21 : vector<1x8x128xf32> to vector<8x128xf32>
    %23 = vector.shape_cast %19 : vector<8x128xf32> to vector<1x8x128xf32>
    tpu.vector_store %arg10[%20, %c0_19, %c0_20], %23 {strides = array<i32>} : memref<8x8x128xf32, #tpu.memory_space<vmem>>, vector<1x8x128xf32>,
    %c1_i32 = arith.constant 1 : i32
    %24 = arith.index_cast %c1_i32 : i32 to index
    %c0_21 = arith.constant 0 : index
    %c0_22 = arith.constant 0 : index
    %25 = vector.load %arg11[%24, %c0_21, %c0_22] : memref<8x8x128xf32, #tpu.memory_space<vmem>>, vector<1x8x128xf32>
    %26 = vector.shape_cast %25 : vector<1x8x128xf32> to vector<8x128xf32>
    %cst_23 = arith.constant dense<0.000000e+00> : vector<8x128xf32>
    %27 = tpu.matmul %19, %11, %cst_23 {dimension_numbers = #tpu.dot_dimension_numbers<[1], [0], [0], [1], [0, 0, 1, 1], [], []>} : vector<8x128xf32>, vector<128x128xf32>, vector<8x128xf32> -> vector<8x128xf32>
    %28 = arith.addf %26, %27 : vector<8x128xf32>
    %29 = math.tanh %28 : vector<8x128xf32>
    %30 = arith.index_cast %c1_i32 : i32 to index
    %c0_24 = arith.constant 0 : index
    %c0_25 = arith.constant 0 : index
    %31 = vector.load %arg10[%30, %c0_24, %c0_25] : memref<8x8x128xf32, #tpu.memory_space<vmem>>, vector<1x8x128xf32>
    %32 = vector.shape_cast %31 : vector<1x8x128xf32> to vector<8x128xf32>
    %33 = vector.shape_cast %29 : vector<8x128xf32> to vector<1x8x128xf32>
    tpu.vector_store %arg10[%30, %c0_24, %c0_25], %33 {strides = array<i32>} : memref<8x8x128xf32, #tpu.memory_space<vmem>>, vector<1x8x128xf32>,
    %c2_i32 = arith.constant 2 : i32
    %34 = arith.index_cast %c2_i32 : i32 to index
    %c0_26 = arith.constant 0 : index
    %c0_27 = arith.constant 0 : index
    %35 = vector.load %arg11[%34, %c0_26, %c0_27] : memref<8x8x128xf32, #tpu.memory_space<vmem>>, vector<1x8x128xf32>
    %36 = vector.shape_cast %35 : vector<1x8x128xf32> to vector<8x128xf32>
    %cst_28 = arith.constant dense<0.000000e+00> : vector<8x128xf32>
    %37 = tpu.matmul %29, %11, %cst_28 {dimension_numbers = #tpu.dot_dimension_numbers<[1], [0], [0], [1], [0, 0, 1, 1], [], []>} : vector<8x128xf32>, vector<128x128xf32>, vector<8x128xf32> -> vector<8x128xf32>
    %38 = arith.addf %36, %37 : vector<8x128xf32>
    %39 = math.tanh %38 : vector<8x128xf32>
    %40 = arith.index_cast %c2_i32 : i32 to index
    %c0_29 = arith.constant 0 : index
    %c0_30 = arith.constant 0 : index
    %41 = vector.load %arg10[%40, %c0_29, %c0_30] : memref<8x8x128xf32, #tpu.memory_space<vmem>>, vector<1x8x128xf32>
    %42 = vector.shape_cast %41 : vector<1x8x128xf32> to vector<8x128xf32>
    %43 = vector.shape_cast %39 : vector<8x128xf32> to vector<1x8x128xf32>
    tpu.vector_store %arg10[%40, %c0_29, %c0_30], %43 {strides = array<i32>} : memref<8x8x128xf32, #tpu.memory_space<vmem>>, vector<1x8x128xf32>,
    %c3_i32 = arith.constant 3 : i32
    %44 = arith.index_cast %c3_i32 : i32 to index
    %c0_31 = arith.constant 0 : index
    %c0_32 = arith.constant 0 : index
    %45 = vector.load %arg11[%44, %c0_31, %c0_32] : memref<8x8x128xf32, #tpu.memory_space<vmem>>, vector<1x8x128xf32>
    %46 = vector.shape_cast %45 : vector<1x8x128xf32> to vector<8x128xf32>
    %cst_33 = arith.constant dense<0.000000e+00> : vector<8x128xf32>
    %47 = tpu.matmul %39, %11, %cst_33 {dimension_numbers = #tpu.dot_dimension_numbers<[1], [0], [0], [1], [0, 0, 1, 1], [], []>} : vector<8x128xf32>, vector<128x128xf32>, vector<8x128xf32> -> vector<8x128xf32>
    %48 = arith.addf %46, %47 : vector<8x128xf32>
    %49 = math.tanh %48 : vector<8x128xf32>
    %50 = arith.index_cast %c3_i32 : i32 to index
    %c0_34 = arith.constant 0 : index
    %c0_35 = arith.constant 0 : index
    %51 = vector.load %arg10[%50, %c0_34, %c0_35] : memref<8x8x128xf32, #tpu.memory_space<vmem>>, vector<1x8x128xf32>
    %52 = vector.shape_cast %51 : vector<1x8x128xf32> to vector<8x128xf32>
    %53 = vector.shape_cast %49 : vector<8x128xf32> to vector<1x8x128xf32>
    tpu.vector_store %arg10[%50, %c0_34, %c0_35], %53 {strides = array<i32>} : memref<8x8x128xf32, #tpu.memory_space<vmem>>, vector<1x8x128xf32>,
    %c4_i32 = arith.constant 4 : i32
    %54 = arith.index_cast %c4_i32 : i32 to index
    %c0_36 = arith.constant 0 : index
    %c0_37 = arith.constant 0 : index
    %55 = vector.load %arg11[%54, %c0_36, %c0_37] : memref<8x8x128xf32, #tpu.memory_space<vmem>>, vector<1x8x128xf32>
    %56 = vector.shape_cast %55 : vector<1x8x128xf32> to vector<8x128xf32>
    %cst_38 = arith.constant dense<0.000000e+00> : vector<8x128xf32>
    %57 = tpu.matmul %49, %11, %cst_38 {dimension_numbers = #tpu.dot_dimension_numbers<[1], [0], [0], [1], [0, 0, 1, 1], [], []>} : vector<8x128xf32>, vector<128x128xf32>, vector<8x128xf32> -> vector<8x128xf32>
    %58 = arith.addf %56, %57 : vector<8x128xf32>
    %59 = math.tanh %58 : vector<8x128xf32>
    %60 = arith.index_cast %c4_i32 : i32 to index
    %c0_39 = arith.constant 0 : index
    %c0_40 = arith.constant 0 : index
    %61 = vector.load %arg10[%60, %c0_39, %c0_40] : memref<8x8x128xf32, #tpu.memory_space<vmem>>, vector<1x8x128xf32>
    %62 = vector.shape_cast %61 : vector<1x8x128xf32> to vector<8x128xf32>
    %63 = vector.shape_cast %59 : vector<8x128xf32> to vector<1x8x128xf32>
    tpu.vector_store %arg10[%60, %c0_39, %c0_40], %63 {strides = array<i32>} : memref<8x8x128xf32, #tpu.memory_space<vmem>>, vector<1x8x128xf32>,
    %c5_i32 = arith.constant 5 : i32
    %64 = arith.index_cast %c5_i32 : i32 to index
    %c0_41 = arith.constant 0 : index
    %c0_42 = arith.constant 0 : index
    %65 = vector.load %arg11[%64, %c0_41, %c0_42] : memref<8x8x128xf32, #tpu.memory_space<vmem>>, vector<1x8x128xf32>
    %66 = vector.shape_cast %65 : vector<1x8x128xf32> to vector<8x128xf32>
    %cst_43 = arith.constant dense<0.000000e+00> : vector<8x128xf32>
    %67 = tpu.matmul %59, %11, %cst_43 {dimension_numbers = #tpu.dot_dimension_numbers<[1], [0], [0], [1], [0, 0, 1, 1], [], []>} : vector<8x128xf32>, vector<128x128xf32>, vector<8x128xf32> -> vector<8x128xf32>
    %68 = arith.addf %66, %67 : vector<8x128xf32>
    %69 = math.tanh %68 : vector<8x128xf32>
    %70 = arith.index_cast %c5_i32 : i32 to index
    %c0_44 = arith.constant 0 : index
    %c0_45 = arith.constant 0 : index
    %71 = vector.load %arg10[%70, %c0_44, %c0_45] : memref<8x8x128xf32, #tpu.memory_space<vmem>>, vector<1x8x128xf32>
    %72 = vector.shape_cast %71 : vector<1x8x128xf32> to vector<8x128xf32>
    %73 = vector.shape_cast %69 : vector<8x128xf32> to vector<1x8x128xf32>
    tpu.vector_store %arg10[%70, %c0_44, %c0_45], %73 {strides = array<i32>} : memref<8x8x128xf32, #tpu.memory_space<vmem>>, vector<1x8x128xf32>,
    %c6_i32 = arith.constant 6 : i32
    %74 = arith.index_cast %c6_i32 : i32 to index
    %c0_46 = arith.constant 0 : index
    %c0_47 = arith.constant 0 : index
    %75 = vector.load %arg11[%74, %c0_46, %c0_47] : memref<8x8x128xf32, #tpu.memory_space<vmem>>, vector<1x8x128xf32>
    %76 = vector.shape_cast %75 : vector<1x8x128xf32> to vector<8x128xf32>
    %cst_48 = arith.constant dense<0.000000e+00> : vector<8x128xf32>
    %77 = tpu.matmul %69, %11, %cst_48 {dimension_numbers = #tpu.dot_dimension_numbers<[1], [0], [0], [1], [0, 0, 1, 1], [], []>} : vector<8x128xf32>, vector<128x128xf32>, vector<8x128xf32> -> vector<8x128xf32>
    %78 = arith.addf %76, %77 : vector<8x128xf32>
    %79 = math.tanh %78 : vector<8x128xf32>
    %80 = arith.index_cast %c6_i32 : i32 to index
    %c0_49 = arith.constant 0 : index
    %c0_50 = arith.constant 0 : index
    %81 = vector.load %arg10[%80, %c0_49, %c0_50] : memref<8x8x128xf32, #tpu.memory_space<vmem>>, vector<1x8x128xf32>
    %82 = vector.shape_cast %81 : vector<1x8x128xf32> to vector<8x128xf32>
    %83 = vector.shape_cast %79 : vector<8x128xf32> to vector<1x8x128xf32>
    tpu.vector_store %arg10[%80, %c0_49, %c0_50], %83 {strides = array<i32>} : memref<8x8x128xf32, #tpu.memory_space<vmem>>, vector<1x8x128xf32>,
    %c7_i32 = arith.constant 7 : i32
    %84 = arith.index_cast %c7_i32 : i32 to index
    %c0_51 = arith.constant 0 : index
    %c0_52 = arith.constant 0 : index
    %85 = vector.load %arg11[%84, %c0_51, %c0_52] : memref<8x8x128xf32, #tpu.memory_space<vmem>>, vector<1x8x128xf32>
    %86 = vector.shape_cast %85 : vector<1x8x128xf32> to vector<8x128xf32>
    %cst_53 = arith.constant dense<0.000000e+00> : vector<8x128xf32>
    %87 = tpu.matmul %79, %11, %cst_53 {dimension_numbers = #tpu.dot_dimension_numbers<[1], [0], [0], [1], [0, 0, 1, 1], [], []>} : vector<8x128xf32>, vector<128x128xf32>, vector<8x128xf32> -> vector<8x128xf32>
    %88 = arith.addf %86, %87 : vector<8x128xf32>
    %89 = math.tanh %88 : vector<8x128xf32>
    %90 = arith.index_cast %c7_i32 : i32 to index
    %c0_54 = arith.constant 0 : index
    %c0_55 = arith.constant 0 : index
    %91 = vector.load %arg10[%90, %c0_54, %c0_55] : memref<8x8x128xf32, #tpu.memory_space<vmem>>, vector<1x8x128xf32>
    %92 = vector.shape_cast %91 : vector<1x8x128xf32> to vector<8x128xf32>
    %93 = vector.shape_cast %89 : vector<8x128xf32> to vector<1x8x128xf32>
    tpu.vector_store %arg10[%90, %c0_54, %c0_55], %93 {strides = array<i32>} : memref<8x8x128xf32, #tpu.memory_space<vmem>>, vector<1x8x128xf32>,
    %c8_i32 = arith.constant 8 : i32
    %c0_56 = arith.constant 0 : index
    %c0_57 = arith.constant 0 : index
    %c0_58 = arith.constant 0 : index
    %94 = vector.load %arg9[%c0_56, %c0_57, %c0_58] : memref<5x8x128xf32, #tpu.memory_space<vmem>>, vector<1x8x128xf32>
    %95 = vector.shape_cast %94 : vector<1x8x128xf32> to vector<8x128xf32>
    %96 = vector.shape_cast %89 : vector<8x128xf32> to vector<1x8x128xf32>
    tpu.vector_store %arg9[%c0_56, %c0_57, %c0_58], %96 {strides = array<i32>} : memref<5x8x128xf32, #tpu.memory_space<vmem>>, vector<1x8x128xf32>,
    %c0_59 = arith.constant 0 : index
    %c0_60 = arith.constant 0 : index
    %c0_61 = arith.constant 0 : index
    %97 = vector.load %arg10[%c0_59, %c0_60, %c0_61] : memref<8x8x128xf32, #tpu.memory_space<vmem>>, vector<8x8x128xf32>
    %98 = vector.shape_cast %97 : vector<8x8x128xf32> to vector<64x128xf32>
    %c0_62 = arith.constant 0 : index
    %c0_63 = arith.constant 0 : index
    %c0_64 = arith.constant 0 : index
    %99 = vector.load %arg3[%c0_62, %c0_63, %c0_64] : memref<4x128x128xf32, #tpu.memory_space<vmem>>, vector<1x128x128xf32>
    %100 = vector.shape_cast %99 : vector<1x128x128xf32> to vector<128x128xf32>
    %cst_65 = arith.constant dense<0.000000e+00> : vector<64x128xf32>
    %101 = tpu.matmul %98, %100, %cst_65 {dimension_numbers = #tpu.dot_dimension_numbers<[1], [0], [0], [1], [0, 0, 1, 1], [], []>} : vector<64x128xf32>, vector<128x128xf32>, vector<64x128xf32> -> vector<64x128xf32>
    %c1 = arith.constant 1 : index
    %c0_66 = arith.constant 0 : index
    %c0_67 = arith.constant 0 : index
    %102 = vector.load %arg5[%c1, %c0_66, %c0_67] : memref<5x1x128xf32, #tpu.memory_space<vmem>>, vector<1x1x128xf32>
    %103 = vector.shape_cast %102 : vector<1x1x128xf32> to vector<1x128xf32>
    %104 = vector.broadcast %103 : vector<1x128xf32> to vector<64x128xf32>
    %105 = arith.addf %101, %104 : vector<64x128xf32>
    %106 = vector.shape_cast %105 : vector<64x128xf32> to vector<8x8x128xf32>
    %c0_68 = arith.constant 0 : index
    %c0_69 = arith.constant 0 : index
    %c0_70 = arith.constant 0 : index
    %107 = vector.load %arg11[%c0_68, %c0_69, %c0_70] : memref<8x8x128xf32, #tpu.memory_space<vmem>>, vector<8x8x128xf32>
    tpu.vector_store %arg11[%c0_68, %c0_69, %c0_70], %106 {strides = array<i32>} : memref<8x8x128xf32, #tpu.memory_space<vmem>>, vector<8x8x128xf32>,
    %c1_71 = arith.constant 1 : index
    %c0_72 = arith.constant 0 : index
    %c0_73 = arith.constant 0 : index
    %108 = vector.load %arg4[%c1_71, %c0_72, %c0_73] : memref<5x128x128xf32, #tpu.memory_space<vmem>>, vector<1x128x128xf32>
    %109 = vector.shape_cast %108 : vector<1x128x128xf32> to vector<128x128xf32>
    %c1_74 = arith.constant 1 : index
    %c0_75 = arith.constant 0 : index
    %c0_76 = arith.constant 0 : index
    %110 = vector.load %arg1[%c1_74, %c0_75, %c0_76] : memref<5x8x128xf32, #tpu.memory_space<vmem>>, vector<1x8x128xf32>
    %111 = vector.shape_cast %110 : vector<1x8x128xf32> to vector<8x128xf32>
    %c0_i32_77 = arith.constant 0 : i32
    %112 = arith.index_cast %c0_i32_77 : i32 to index
    %c0_78 = arith.constant 0 : index
    %c0_79 = arith.constant 0 : index
    %113 = vector.load %arg11[%112, %c0_78, %c0_79] : memref<8x8x128xf32, #tpu.memory_space<vmem>>, vector<1x8x128xf32>
    %114 = vector.shape_cast %113 : vector<1x8x128xf32> to vector<8x128xf32>
    %cst_80 = arith.constant dense<0.000000e+00> : vector<8x128xf32>
    %115 = tpu.matmul %111, %109, %cst_80 {dimension_numbers = #tpu.dot_dimension_numbers<[1], [0], [0], [1], [0, 0, 1, 1], [], []>} : vector<8x128xf32>, vector<128x128xf32>, vector<8x128xf32> -> vector<8x128xf32>
    %116 = arith.addf %114, %115 : vector<8x128xf32>
    %117 = math.tanh %116 : vector<8x128xf32>
    %118 = arith.index_cast %c0_i32_77 : i32 to index
    %c0_81 = arith.constant 0 : index
    %c0_82 = arith.constant 0 : index
    %119 = vector.load %arg10[%118, %c0_81, %c0_82] : memref<8x8x128xf32, #tpu.memory_space<vmem>>, vector<1x8x128xf32>
    %120 = vector.shape_cast %119 : vector<1x8x128xf32> to vector<8x128xf32>
    %121 = vector.shape_cast %117 : vector<8x128xf32> to vector<1x8x128xf32>
    tpu.vector_store %arg10[%118, %c0_81, %c0_82], %121 {strides = array<i32>} : memref<8x8x128xf32, #tpu.memory_space<vmem>>, vector<1x8x128xf32>,
    %c1_i32_83 = arith.constant 1 : i32
    %122 = arith.index_cast %c1_i32_83 : i32 to index
    %c0_84 = arith.constant 0 : index
    %c0_85 = arith.constant 0 : index
    %123 = vector.load %arg11[%122, %c0_84, %c0_85] : memref<8x8x128xf32, #tpu.memory_space<vmem>>, vector<1x8x128xf32>
    %124 = vector.shape_cast %123 : vector<1x8x128xf32> to vector<8x128xf32>
    %cst_86 = arith.constant dense<0.000000e+00> : vector<8x128xf32>
    %125 = tpu.matmul %117, %109, %cst_86 {dimension_numbers = #tpu.dot_dimension_numbers<[1], [0], [0], [1], [0, 0, 1, 1], [], []>} : vector<8x128xf32>, vector<128x128xf32>, vector<8x128xf32> -> vector<8x128xf32>
    %126 = arith.addf %124, %125 : vector<8x128xf32>
    %127 = math.tanh %126 : vector<8x128xf32>
    %128 = arith.index_cast %c1_i32_83 : i32 to index
    %c0_87 = arith.constant 0 : index
    %c0_88 = arith.constant 0 : index
    %129 = vector.load %arg10[%128, %c0_87, %c0_88] : memref<8x8x128xf32, #tpu.memory_space<vmem>>, vector<1x8x128xf32>
    %130 = vector.shape_cast %129 : vector<1x8x128xf32> to vector<8x128xf32>
    %131 = vector.shape_cast %127 : vector<8x128xf32> to vector<1x8x128xf32>
    tpu.vector_store %arg10[%128, %c0_87, %c0_88], %131 {strides = array<i32>} : memref<8x8x128xf32, #tpu.memory_space<vmem>>, vector<1x8x128xf32>,
    %c2_i32_89 = arith.constant 2 : i32
    %132 = arith.index_cast %c2_i32_89 : i32 to index
    %c0_90 = arith.constant 0 : index
    %c0_91 = arith.constant 0 : index
    %133 = vector.load %arg11[%132, %c0_90, %c0_91] : memref<8x8x128xf32, #tpu.memory_space<vmem>>, vector<1x8x128xf32>
    %134 = vector.shape_cast %133 : vector<1x8x128xf32> to vector<8x128xf32>
    %cst_92 = arith.constant dense<0.000000e+00> : vector<8x128xf32>
    %135 = tpu.matmul %127, %109, %cst_92 {dimension_numbers = #tpu.dot_dimension_numbers<[1], [0], [0], [1], [0, 0, 1, 1], [], []>} : vector<8x128xf32>, vector<128x128xf32>, vector<8x128xf32> -> vector<8x128xf32>
    %136 = arith.addf %134, %135 : vector<8x128xf32>
    %137 = math.tanh %136 : vector<8x128xf32>
    %138 = arith.index_cast %c2_i32_89 : i32 to index
    %c0_93 = arith.constant 0 : index
    %c0_94 = arith.constant 0 : index
    %139 = vector.load %arg10[%138, %c0_93, %c0_94] : memref<8x8x128xf32, #tpu.memory_space<vmem>>, vector<1x8x128xf32>
    %140 = vector.shape_cast %139 : vector<1x8x128xf32> to vector<8x128xf32>
    %141 = vector.shape_cast %137 : vector<8x128xf32> to vector<1x8x128xf32>
    tpu.vector_store %arg10[%138, %c0_93, %c0_94], %141 {strides = array<i32>} : memref<8x8x128xf32, #tpu.memory_space<vmem>>, vector<1x8x128xf32>,
    %c3_i32_95 = arith.constant 3 : i32
    %142 = arith.index_cast %c3_i32_95 : i32 to index
    %c0_96 = arith.constant 0 : index
    %c0_97 = arith.constant 0 : index
    %143 = vector.load %arg11[%142, %c0_96, %c0_97] : memref<8x8x128xf32, #tpu.memory_space<vmem>>, vector<1x8x128xf32>
    %144 = vector.shape_cast %143 : vector<1x8x128xf32> to vector<8x128xf32>
    %cst_98 = arith.constant dense<0.000000e+00> : vector<8x128xf32>
    %145 = tpu.matmul %137, %109, %cst_98 {dimension_numbers = #tpu.dot_dimension_numbers<[1], [0], [0], [1], [0, 0, 1, 1], [], []>} : vector<8x128xf32>, vector<128x128xf32>, vector<8x128xf32> -> vector<8x128xf32>
    %146 = arith.addf %144, %145 : vector<8x128xf32>
    %147 = math.tanh %146 : vector<8x128xf32>
    %148 = arith.index_cast %c3_i32_95 : i32 to index
    %c0_99 = arith.constant 0 : index
    %c0_100 = arith.constant 0 : index
    %149 = vector.load %arg10[%148, %c0_99, %c0_100] : memref<8x8x128xf32, #tpu.memory_space<vmem>>, vector<1x8x128xf32>
    %150 = vector.shape_cast %149 : vector<1x8x128xf32> to vector<8x128xf32>
    %151 = vector.shape_cast %147 : vector<8x128xf32> to vector<1x8x128xf32>
    tpu.vector_store %arg10[%148, %c0_99, %c0_100], %151 {strides = array<i32>} : memref<8x8x128xf32, #tpu.memory_space<vmem>>, vector<1x8x128xf32>,
    %c4_i32_101 = arith.constant 4 : i32
    %152 = arith.index_cast %c4_i32_101 : i32 to index
    %c0_102 = arith.constant 0 : index
    %c0_103 = arith.constant 0 : index
    %153 = vector.load %arg11[%152, %c0_102, %c0_103] : memref<8x8x128xf32, #tpu.memory_space<vmem>>, vector<1x8x128xf32>
    %154 = vector.shape_cast %153 : vector<1x8x128xf32> to vector<8x128xf32>
    %cst_104 = arith.constant dense<0.000000e+00> : vector<8x128xf32>
    %155 = tpu.matmul %147, %109, %cst_104 {dimension_numbers = #tpu.dot_dimension_numbers<[1], [0], [0], [1], [0, 0, 1, 1], [], []>} : vector<8x128xf32>, vector<128x128xf32>, vector<8x128xf32> -> vector<8x128xf32>
    %156 = arith.addf %154, %155 : vector<8x128xf32>
    %157 = math.tanh %156 : vector<8x128xf32>
    %158 = arith.index_cast %c4_i32_101 : i32 to index
    %c0_105 = arith.constant 0 : index
    %c0_106 = arith.constant 0 : index
    %159 = vector.load %arg10[%158, %c0_105, %c0_106] : memref<8x8x128xf32, #tpu.memory_space<vmem>>, vector<1x8x128xf32>
    %160 = vector.shape_cast %159 : vector<1x8x128xf32> to vector<8x128xf32>
    %161 = vector.shape_cast %157 : vector<8x128xf32> to vector<1x8x128xf32>
    tpu.vector_store %arg10[%158, %c0_105, %c0_106], %161 {strides = array<i32>} : memref<8x8x128xf32, #tpu.memory_space<vmem>>, vector<1x8x128xf32>,
    %c5_i32_107 = arith.constant 5 : i32
    %162 = arith.index_cast %c5_i32_107 : i32 to index
    %c0_108 = arith.constant 0 : index
    %c0_109 = arith.constant 0 : index
    %163 = vector.load %arg11[%162, %c0_108, %c0_109] : memref<8x8x128xf32, #tpu.memory_space<vmem>>, vector<1x8x128xf32>
    %164 = vector.shape_cast %163 : vector<1x8x128xf32> to vector<8x128xf32>
    %cst_110 = arith.constant dense<0.000000e+00> : vector<8x128xf32>
    %165 = tpu.matmul %157, %109, %cst_110 {dimension_numbers = #tpu.dot_dimension_numbers<[1], [0], [0], [1], [0, 0, 1, 1], [], []>} : vector<8x128xf32>, vector<128x128xf32>, vector<8x128xf32> -> vector<8x128xf32>
    %166 = arith.addf %164, %165 : vector<8x128xf32>
    %167 = math.tanh %166 : vector<8x128xf32>
    %168 = arith.index_cast %c5_i32_107 : i32 to index
    %c0_111 = arith.constant 0 : index
    %c0_112 = arith.constant 0 : index
    %169 = vector.load %arg10[%168, %c0_111, %c0_112] : memref<8x8x128xf32, #tpu.memory_space<vmem>>, vector<1x8x128xf32>
    %170 = vector.shape_cast %169 : vector<1x8x128xf32> to vector<8x128xf32>
    %171 = vector.shape_cast %167 : vector<8x128xf32> to vector<1x8x128xf32>
    tpu.vector_store %arg10[%168, %c0_111, %c0_112], %171 {strides = array<i32>} : memref<8x8x128xf32, #tpu.memory_space<vmem>>, vector<1x8x128xf32>,
    %c6_i32_113 = arith.constant 6 : i32
    %172 = arith.index_cast %c6_i32_113 : i32 to index
    %c0_114 = arith.constant 0 : index
    %c0_115 = arith.constant 0 : index
    %173 = vector.load %arg11[%172, %c0_114, %c0_115] : memref<8x8x128xf32, #tpu.memory_space<vmem>>, vector<1x8x128xf32>
    %174 = vector.shape_cast %173 : vector<1x8x128xf32> to vector<8x128xf32>
    %cst_116 = arith.constant dense<0.000000e+00> : vector<8x128xf32>
    %175 = tpu.matmul %167, %109, %cst_116 {dimension_numbers = #tpu.dot_dimension_numbers<[1], [0], [0], [1], [0, 0, 1, 1], [], []>} : vector<8x128xf32>, vector<128x128xf32>, vector<8x128xf32> -> vector<8x128xf32>
    %176 = arith.addf %174, %175 : vector<8x128xf32>
    %177 = math.tanh %176 : vector<8x128xf32>
    %178 = arith.index_cast %c6_i32_113 : i32 to index
    %c0_117 = arith.constant 0 : index
    %c0_118 = arith.constant 0 : index
    %179 = vector.load %arg10[%178, %c0_117, %c0_118] : memref<8x8x128xf32, #tpu.memory_space<vmem>>, vector<1x8x128xf32>
    %180 = vector.shape_cast %179 : vector<1x8x128xf32> to vector<8x128xf32>
    %181 = vector.shape_cast %177 : vector<8x128xf32> to vector<1x8x128xf32>
    tpu.vector_store %arg10[%178, %c0_117, %c0_118], %181 {strides = array<i32>} : memref<8x8x128xf32, #tpu.memory_space<vmem>>, vector<1x8x128xf32>,
    %c7_i32_119 = arith.constant 7 : i32
    %182 = arith.index_cast %c7_i32_119 : i32 to index
    %c0_120 = arith.constant 0 : index
    %c0_121 = arith.constant 0 : index
    %183 = vector.load %arg11[%182, %c0_120, %c0_121] : memref<8x8x128xf32, #tpu.memory_space<vmem>>, vector<1x8x128xf32>
    %184 = vector.shape_cast %183 : vector<1x8x128xf32> to vector<8x128xf32>
    %cst_122 = arith.constant dense<0.000000e+00> : vector<8x128xf32>
    %185 = tpu.matmul %177, %109, %cst_122 {dimension_numbers = #tpu.dot_dimension_numbers<[1], [0], [0], [1], [0, 0, 1, 1], [], []>} : vector<8x128xf32>, vector<128x128xf32>, vector<8x128xf32> -> vector<8x128xf32>
    %186 = arith.addf %184, %185 : vector<8x128xf32>
    %187 = math.tanh %186 : vector<8x128xf32>
    %188 = arith.index_cast %c7_i32_119 : i32 to index
    %c0_123 = arith.constant 0 : index
    %c0_124 = arith.constant 0 : index
    %189 = vector.load %arg10[%188, %c0_123, %c0_124] : memref<8x8x128xf32, #tpu.memory_space<vmem>>, vector<1x8x128xf32>
    %190 = vector.shape_cast %189 : vector<1x8x128xf32> to vector<8x128xf32>
    %191 = vector.shape_cast %187 : vector<8x128xf32> to vector<1x8x128xf32>
    tpu.vector_store %arg10[%188, %c0_123, %c0_124], %191 {strides = array<i32>} : memref<8x8x128xf32, #tpu.memory_space<vmem>>, vector<1x8x128xf32>,
    %c8_i32_125 = arith.constant 8 : i32
    %c1_126 = arith.constant 1 : index
    %c0_127 = arith.constant 0 : index
    %c0_128 = arith.constant 0 : index
    %192 = vector.load %arg9[%c1_126, %c0_127, %c0_128] : memref<5x8x128xf32, #tpu.memory_space<vmem>>, vector<1x8x128xf32>
    %193 = vector.shape_cast %192 : vector<1x8x128xf32> to vector<8x128xf32>
    %194 = vector.shape_cast %187 : vector<8x128xf32> to vector<1x8x128xf32>
    tpu.vector_store %arg9[%c1_126, %c0_127, %c0_128], %194 {strides = array<i32>} : memref<5x8x128xf32, #tpu.memory_space<vmem>>, vector<1x8x128xf32>,
    %c0_129 = arith.constant 0 : index
    %c0_130 = arith.constant 0 : index
    %c0_131 = arith.constant 0 : index
    %195 = vector.load %arg10[%c0_129, %c0_130, %c0_131] : memref<8x8x128xf32, #tpu.memory_space<vmem>>, vector<8x8x128xf32>
    %196 = vector.shape_cast %195 : vector<8x8x128xf32> to vector<64x128xf32>
    %c1_132 = arith.constant 1 : index
    %c0_133 = arith.constant 0 : index
    %c0_134 = arith.constant 0 : index
    %197 = vector.load %arg3[%c1_132, %c0_133, %c0_134] : memref<4x128x128xf32, #tpu.memory_space<vmem>>, vector<1x128x128xf32>
    %198 = vector.shape_cast %197 : vector<1x128x128xf32> to vector<128x128xf32>
    %cst_135 = arith.constant dense<0.000000e+00> : vector<64x128xf32>
    %199 = tpu.matmul %196, %198, %cst_135 {dimension_numbers = #tpu.dot_dimension_numbers<[1], [0], [0], [1], [0, 0, 1, 1], [], []>} : vector<64x128xf32>, vector<128x128xf32>, vector<64x128xf32> -> vector<64x128xf32>
    %c2 = arith.constant 2 : index
    %c0_136 = arith.constant 0 : index
    %c0_137 = arith.constant 0 : index
    %200 = vector.load %arg5[%c2, %c0_136, %c0_137] : memref<5x1x128xf32, #tpu.memory_space<vmem>>, vector<1x1x128xf32>
    %201 = vector.shape_cast %200 : vector<1x1x128xf32> to vector<1x128xf32>
    %202 = vector.broadcast %201 : vector<1x128xf32> to vector<64x128xf32>
    %203 = arith.addf %199, %202 : vector<64x128xf32>
    %204 = vector.shape_cast %203 : vector<64x128xf32> to vector<8x8x128xf32>
    %c0_138 = arith.constant 0 : index
    %c0_139 = arith.constant 0 : index
    %c0_140 = arith.constant 0 : index
    %205 = vector.load %arg11[%c0_138, %c0_139, %c0_140] : memref<8x8x128xf32, #tpu.memory_space<vmem>>, vector<8x8x128xf32>
    tpu.vector_store %arg11[%c0_138, %c0_139, %c0_140], %204 {strides = array<i32>} : memref<8x8x128xf32, #tpu.memory_space<vmem>>, vector<8x8x128xf32>,
    %c2_141 = arith.constant 2 : index
    %c0_142 = arith.constant 0 : index
    %c0_143 = arith.constant 0 : index
    %206 = vector.load %arg4[%c2_141, %c0_142, %c0_143] : memref<5x128x128xf32, #tpu.memory_space<vmem>>, vector<1x128x128xf32>
    %207 = vector.shape_cast %206 : vector<1x128x128xf32> to vector<128x128xf32>
    %c2_144 = arith.constant 2 : index
    %c0_145 = arith.constant 0 : index
    %c0_146 = arith.constant 0 : index
    %208 = vector.load %arg1[%c2_144, %c0_145, %c0_146] : memref<5x8x128xf32, #tpu.memory_space<vmem>>, vector<1x8x128xf32>
    %209 = vector.shape_cast %208 : vector<1x8x128xf32> to vector<8x128xf32>
    %c0_i32_147 = arith.constant 0 : i32
    %210 = arith.index_cast %c0_i32_147 : i32 to index
    %c0_148 = arith.constant 0 : index
    %c0_149 = arith.constant 0 : index
    %211 = vector.load %arg11[%210, %c0_148, %c0_149] : memref<8x8x128xf32, #tpu.memory_space<vmem>>, vector<1x8x128xf32>
    %212 = vector.shape_cast %211 : vector<1x8x128xf32> to vector<8x128xf32>
    %cst_150 = arith.constant dense<0.000000e+00> : vector<8x128xf32>
    %213 = tpu.matmul %209, %207, %cst_150 {dimension_numbers = #tpu.dot_dimension_numbers<[1], [0], [0], [1], [0, 0, 1, 1], [], []>} : vector<8x128xf32>, vector<128x128xf32>, vector<8x128xf32> -> vector<8x128xf32>
    %214 = arith.addf %212, %213 : vector<8x128xf32>
    %215 = math.tanh %214 : vector<8x128xf32>
    %216 = arith.index_cast %c0_i32_147 : i32 to index
    %c0_151 = arith.constant 0 : index
    %c0_152 = arith.constant 0 : index
    %217 = vector.load %arg10[%216, %c0_151, %c0_152] : memref<8x8x128xf32, #tpu.memory_space<vmem>>, vector<1x8x128xf32>
    %218 = vector.shape_cast %217 : vector<1x8x128xf32> to vector<8x128xf32>
    %219 = vector.shape_cast %215 : vector<8x128xf32> to vector<1x8x128xf32>
    tpu.vector_store %arg10[%216, %c0_151, %c0_152], %219 {strides = array<i32>} : memref<8x8x128xf32, #tpu.memory_space<vmem>>, vector<1x8x128xf32>,
    %c1_i32_153 = arith.constant 1 : i32
    %220 = arith.index_cast %c1_i32_153 : i32 to index
    %c0_154 = arith.constant 0 : index
    %c0_155 = arith.constant 0 : index
    %221 = vector.load %arg11[%220, %c0_154, %c0_155] : memref<8x8x128xf32, #tpu.memory_space<vmem>>, vector<1x8x128xf32>
    %222 = vector.shape_cast %221 : vector<1x8x128xf32> to vector<8x128xf32>
    %cst_156 = arith.constant dense<0.000000e+00> : vector<8x128xf32>
    %223 = tpu.matmul %215, %207, %cst_156 {dimension_numbers = #tpu.dot_dimension_numbers<[1], [0], [0], [1], [0, 0, 1, 1], [], []>} : vector<8x128xf32>, vector<128x128xf32>, vector<8x128xf32> -> vector<8x128xf32>
    %224 = arith.addf %222, %223 : vector<8x128xf32>
    %225 = math.tanh %224 : vector<8x128xf32>
    %226 = arith.index_cast %c1_i32_153 : i32 to index
    %c0_157 = arith.constant 0 : index
    %c0_158 = arith.constant 0 : index
    %227 = vector.load %arg10[%226, %c0_157, %c0_158] : memref<8x8x128xf32, #tpu.memory_space<vmem>>, vector<1x8x128xf32>
    %228 = vector.shape_cast %227 : vector<1x8x128xf32> to vector<8x128xf32>
    %229 = vector.shape_cast %225 : vector<8x128xf32> to vector<1x8x128xf32>
    tpu.vector_store %arg10[%226, %c0_157, %c0_158], %229 {strides = array<i32>} : memref<8x8x128xf32, #tpu.memory_space<vmem>>, vector<1x8x128xf32>,
    %c2_i32_159 = arith.constant 2 : i32
    %230 = arith.index_cast %c2_i32_159 : i32 to index
    %c0_160 = arith.constant 0 : index
    %c0_161 = arith.constant 0 : index
    %231 = vector.load %arg11[%230, %c0_160, %c0_161] : memref<8x8x128xf32, #tpu.memory_space<vmem>>, vector<1x8x128xf32>
    %232 = vector.shape_cast %231 : vector<1x8x128xf32> to vector<8x128xf32>
    %cst_162 = arith.constant dense<0.000000e+00> : vector<8x128xf32>
    %233 = tpu.matmul %225, %207, %cst_162 {dimension_numbers = #tpu.dot_dimension_numbers<[1], [0], [0], [1], [0, 0, 1, 1], [], []>} : vector<8x128xf32>, vector<128x128xf32>, vector<8x128xf32> -> vector<8x128xf32>
    %234 = arith.addf %232, %233 : vector<8x128xf32>
    %235 = math.tanh %234 : vector<8x128xf32>
    %236 = arith.index_cast %c2_i32_159 : i32 to index
    %c0_163 = arith.constant 0 : index
    %c0_164 = arith.constant 0 : index
    %237 = vector.load %arg10[%236, %c0_163, %c0_164] : memref<8x8x128xf32, #tpu.memory_space<vmem>>, vector<1x8x128xf32>
    %238 = vector.shape_cast %237 : vector<1x8x128xf32> to vector<8x128xf32>
    %239 = vector.shape_cast %235 : vector<8x128xf32> to vector<1x8x128xf32>
    tpu.vector_store %arg10[%236, %c0_163, %c0_164], %239 {strides = array<i32>} : memref<8x8x128xf32, #tpu.memory_space<vmem>>, vector<1x8x128xf32>,
    %c3_i32_165 = arith.constant 3 : i32
    %240 = arith.index_cast %c3_i32_165 : i32 to index
    %c0_166 = arith.constant 0 : index
    %c0_167 = arith.constant 0 : index
    %241 = vector.load %arg11[%240, %c0_166, %c0_167] : memref<8x8x128xf32, #tpu.memory_space<vmem>>, vector<1x8x128xf32>
    %242 = vector.shape_cast %241 : vector<1x8x128xf32> to vector<8x128xf32>
    %cst_168 = arith.constant dense<0.000000e+00> : vector<8x128xf32>
    %243 = tpu.matmul %235, %207, %cst_168 {dimension_numbers = #tpu.dot_dimension_numbers<[1], [0], [0], [1], [0, 0, 1, 1], [], []>} : vector<8x128xf32>, vector<128x128xf32>, vector<8x128xf32> -> vector<8x128xf32>
    %244 = arith.addf %242, %243 : vector<8x128xf32>
    %245 = math.tanh %244 : vector<8x128xf32>
    %246 = arith.index_cast %c3_i32_165 : i32 to index
    %c0_169 = arith.constant 0 : index
    %c0_170 = arith.constant 0 : index
    %247 = vector.load %arg10[%246, %c0_169, %c0_170] : memref<8x8x128xf32, #tpu.memory_space<vmem>>, vector<1x8x128xf32>
    %248 = vector.shape_cast %247 : vector<1x8x128xf32> to vector<8x128xf32>
    %249 = vector.shape_cast %245 : vector<8x128xf32> to vector<1x8x128xf32>
    tpu.vector_store %arg10[%246, %c0_169, %c0_170], %249 {strides = array<i32>} : memref<8x8x128xf32, #tpu.memory_space<vmem>>, vector<1x8x128xf32>,
    %c4_i32_171 = arith.constant 4 : i32
    %250 = arith.index_cast %c4_i32_171 : i32 to index
    %c0_172 = arith.constant 0 : index
    %c0_173 = arith.constant 0 : index
    %251 = vector.load %arg11[%250, %c0_172, %c0_173] : memref<8x8x128xf32, #tpu.memory_space<vmem>>, vector<1x8x128xf32>
    %252 = vector.shape_cast %251 : vector<1x8x128xf32> to vector<8x128xf32>
    %cst_174 = arith.constant dense<0.000000e+00> : vector<8x128xf32>
    %253 = tpu.matmul %245, %207, %cst_174 {dimension_numbers = #tpu.dot_dimension_numbers<[1], [0], [0], [1], [0, 0, 1, 1], [], []>} : vector<8x128xf32>, vector<128x128xf32>, vector<8x128xf32> -> vector<8x128xf32>
    %254 = arith.addf %252, %253 : vector<8x128xf32>
    %255 = math.tanh %254 : vector<8x128xf32>
    %256 = arith.index_cast %c4_i32_171 : i32 to index
    %c0_175 = arith.constant 0 : index
    %c0_176 = arith.constant 0 : index
    %257 = vector.load %arg10[%256, %c0_175, %c0_176] : memref<8x8x128xf32, #tpu.memory_space<vmem>>, vector<1x8x128xf32>
    %258 = vector.shape_cast %257 : vector<1x8x128xf32> to vector<8x128xf32>
    %259 = vector.shape_cast %255 : vector<8x128xf32> to vector<1x8x128xf32>
    tpu.vector_store %arg10[%256, %c0_175, %c0_176], %259 {strides = array<i32>} : memref<8x8x128xf32, #tpu.memory_space<vmem>>, vector<1x8x128xf32>,
    %c5_i32_177 = arith.constant 5 : i32
    %260 = arith.index_cast %c5_i32_177 : i32 to index
    %c0_178 = arith.constant 0 : index
    %c0_179 = arith.constant 0 : index
    %261 = vector.load %arg11[%260, %c0_178, %c0_179] : memref<8x8x128xf32, #tpu.memory_space<vmem>>, vector<1x8x128xf32>
    %262 = vector.shape_cast %261 : vector<1x8x128xf32> to vector<8x128xf32>
    %cst_180 = arith.constant dense<0.000000e+00> : vector<8x128xf32>
    %263 = tpu.matmul %255, %207, %cst_180 {dimension_numbers = #tpu.dot_dimension_numbers<[1], [0], [0], [1], [0, 0, 1, 1], [], []>} : vector<8x128xf32>, vector<128x128xf32>, vector<8x128xf32> -> vector<8x128xf32>
    %264 = arith.addf %262, %263 : vector<8x128xf32>
    %265 = math.tanh %264 : vector<8x128xf32>
    %266 = arith.index_cast %c5_i32_177 : i32 to index
    %c0_181 = arith.constant 0 : index
    %c0_182 = arith.constant 0 : index
    %267 = vector.load %arg10[%266, %c0_181, %c0_182] : memref<8x8x128xf32, #tpu.memory_space<vmem>>, vector<1x8x128xf32>
    %268 = vector.shape_cast %267 : vector<1x8x128xf32> to vector<8x128xf32>
    %269 = vector.shape_cast %265 : vector<8x128xf32> to vector<1x8x128xf32>
    tpu.vector_store %arg10[%266, %c0_181, %c0_182], %269 {strides = array<i32>} : memref<8x8x128xf32, #tpu.memory_space<vmem>>, vector<1x8x128xf32>,
    %c6_i32_183 = arith.constant 6 : i32
    %270 = arith.index_cast %c6_i32_183 : i32 to index
    %c0_184 = arith.constant 0 : index
    %c0_185 = arith.constant 0 : index
    %271 = vector.load %arg11[%270, %c0_184, %c0_185] : memref<8x8x128xf32, #tpu.memory_space<vmem>>, vector<1x8x128xf32>
    %272 = vector.shape_cast %271 : vector<1x8x128xf32> to vector<8x128xf32>
    %cst_186 = arith.constant dense<0.000000e+00> : vector<8x128xf32>
    %273 = tpu.matmul %265, %207, %cst_186 {dimension_numbers = #tpu.dot_dimension_numbers<[1], [0], [0], [1], [0, 0, 1, 1], [], []>} : vector<8x128xf32>, vector<128x128xf32>, vector<8x128xf32> -> vector<8x128xf32>
    %274 = arith.addf %272, %273 : vector<8x128xf32>
    %275 = math.tanh %274 : vector<8x128xf32>
    %276 = arith.index_cast %c6_i32_183 : i32 to index
    %c0_187 = arith.constant 0 : index
    %c0_188 = arith.constant 0 : index
    %277 = vector.load %arg10[%276, %c0_187, %c0_188] : memref<8x8x128xf32, #tpu.memory_space<vmem>>, vector<1x8x128xf32>
    %278 = vector.shape_cast %277 : vector<1x8x128xf32> to vector<8x128xf32>
    %279 = vector.shape_cast %275 : vector<8x128xf32> to vector<1x8x128xf32>
    tpu.vector_store %arg10[%276, %c0_187, %c0_188], %279 {strides = array<i32>} : memref<8x8x128xf32, #tpu.memory_space<vmem>>, vector<1x8x128xf32>,
    %c7_i32_189 = arith.constant 7 : i32
    %280 = arith.index_cast %c7_i32_189 : i32 to index
    %c0_190 = arith.constant 0 : index
    %c0_191 = arith.constant 0 : index
    %281 = vector.load %arg11[%280, %c0_190, %c0_191] : memref<8x8x128xf32, #tpu.memory_space<vmem>>, vector<1x8x128xf32>
    %282 = vector.shape_cast %281 : vector<1x8x128xf32> to vector<8x128xf32>
    %cst_192 = arith.constant dense<0.000000e+00> : vector<8x128xf32>
    %283 = tpu.matmul %275, %207, %cst_192 {dimension_numbers = #tpu.dot_dimension_numbers<[1], [0], [0], [1], [0, 0, 1, 1], [], []>} : vector<8x128xf32>, vector<128x128xf32>, vector<8x128xf32> -> vector<8x128xf32>
    %284 = arith.addf %282, %283 : vector<8x128xf32>
    %285 = math.tanh %284 : vector<8x128xf32>
    %286 = arith.index_cast %c7_i32_189 : i32 to index
    %c0_193 = arith.constant 0 : index
    %c0_194 = arith.constant 0 : index
    %287 = vector.load %arg10[%286, %c0_193, %c0_194] : memref<8x8x128xf32, #tpu.memory_space<vmem>>, vector<1x8x128xf32>
    %288 = vector.shape_cast %287 : vector<1x8x128xf32> to vector<8x128xf32>
    %289 = vector.shape_cast %285 : vector<8x128xf32> to vector<1x8x128xf32>
    tpu.vector_store %arg10[%286, %c0_193, %c0_194], %289 {strides = array<i32>} : memref<8x8x128xf32, #tpu.memory_space<vmem>>, vector<1x8x128xf32>,
    %c8_i32_195 = arith.constant 8 : i32
    %c2_196 = arith.constant 2 : index
    %c0_197 = arith.constant 0 : index
    %c0_198 = arith.constant 0 : index
    %290 = vector.load %arg9[%c2_196, %c0_197, %c0_198] : memref<5x8x128xf32, #tpu.memory_space<vmem>>, vector<1x8x128xf32>
    %291 = vector.shape_cast %290 : vector<1x8x128xf32> to vector<8x128xf32>
    %292 = vector.shape_cast %285 : vector<8x128xf32> to vector<1x8x128xf32>
    tpu.vector_store %arg9[%c2_196, %c0_197, %c0_198], %292 {strides = array<i32>} : memref<5x8x128xf32, #tpu.memory_space<vmem>>, vector<1x8x128xf32>,
    %c0_199 = arith.constant 0 : index
    %c0_200 = arith.constant 0 : index
    %c0_201 = arith.constant 0 : index
    %293 = vector.load %arg10[%c0_199, %c0_200, %c0_201] : memref<8x8x128xf32, #tpu.memory_space<vmem>>, vector<8x8x128xf32>
    %294 = vector.shape_cast %293 : vector<8x8x128xf32> to vector<64x128xf32>
    %c2_202 = arith.constant 2 : index
    %c0_203 = arith.constant 0 : index
    %c0_204 = arith.constant 0 : index
    %295 = vector.load %arg3[%c2_202, %c0_203, %c0_204] : memref<4x128x128xf32, #tpu.memory_space<vmem>>, vector<1x128x128xf32>
    %296 = vector.shape_cast %295 : vector<1x128x128xf32> to vector<128x128xf32>
    %cst_205 = arith.constant dense<0.000000e+00> : vector<64x128xf32>
    %297 = tpu.matmul %294, %296, %cst_205 {dimension_numbers = #tpu.dot_dimension_numbers<[1], [0], [0], [1], [0, 0, 1, 1], [], []>} : vector<64x128xf32>, vector<128x128xf32>, vector<64x128xf32> -> vector<64x128xf32>
    %c3 = arith.constant 3 : index
    %c0_206 = arith.constant 0 : index
    %c0_207 = arith.constant 0 : index
    %298 = vector.load %arg5[%c3, %c0_206, %c0_207] : memref<5x1x128xf32, #tpu.memory_space<vmem>>, vector<1x1x128xf32>
    %299 = vector.shape_cast %298 : vector<1x1x128xf32> to vector<1x128xf32>
    %300 = vector.broadcast %299 : vector<1x128xf32> to vector<64x128xf32>
    %301 = arith.addf %297, %300 : vector<64x128xf32>
    %302 = vector.shape_cast %301 : vector<64x128xf32> to vector<8x8x128xf32>
    %c0_208 = arith.constant 0 : index
    %c0_209 = arith.constant 0 : index
    %c0_210 = arith.constant 0 : index
    %303 = vector.load %arg11[%c0_208, %c0_209, %c0_210] : memref<8x8x128xf32, #tpu.memory_space<vmem>>, vector<8x8x128xf32>
    tpu.vector_store %arg11[%c0_208, %c0_209, %c0_210], %302 {strides = array<i32>} : memref<8x8x128xf32, #tpu.memory_space<vmem>>, vector<8x8x128xf32>,
    %c3_211 = arith.constant 3 : index
    %c0_212 = arith.constant 0 : index
    %c0_213 = arith.constant 0 : index
    %304 = vector.load %arg4[%c3_211, %c0_212, %c0_213] : memref<5x128x128xf32, #tpu.memory_space<vmem>>, vector<1x128x128xf32>
    %305 = vector.shape_cast %304 : vector<1x128x128xf32> to vector<128x128xf32>
    %c3_214 = arith.constant 3 : index
    %c0_215 = arith.constant 0 : index
    %c0_216 = arith.constant 0 : index
    %306 = vector.load %arg1[%c3_214, %c0_215, %c0_216] : memref<5x8x128xf32, #tpu.memory_space<vmem>>, vector<1x8x128xf32>
    %307 = vector.shape_cast %306 : vector<1x8x128xf32> to vector<8x128xf32>
    %c0_i32_217 = arith.constant 0 : i32
    %308 = arith.index_cast %c0_i32_217 : i32 to index
    %c0_218 = arith.constant 0 : index
    %c0_219 = arith.constant 0 : index
    %309 = vector.load %arg11[%308, %c0_218, %c0_219] : memref<8x8x128xf32, #tpu.memory_space<vmem>>, vector<1x8x128xf32>
    %310 = vector.shape_cast %309 : vector<1x8x128xf32> to vector<8x128xf32>
    %cst_220 = arith.constant dense<0.000000e+00> : vector<8x128xf32>
    %311 = tpu.matmul %307, %305, %cst_220 {dimension_numbers = #tpu.dot_dimension_numbers<[1], [0], [0], [1], [0, 0, 1, 1], [], []>} : vector<8x128xf32>, vector<128x128xf32>, vector<8x128xf32> -> vector<8x128xf32>
    %312 = arith.addf %310, %311 : vector<8x128xf32>
    %313 = math.tanh %312 : vector<8x128xf32>
    %314 = arith.index_cast %c0_i32_217 : i32 to index
    %c0_221 = arith.constant 0 : index
    %c0_222 = arith.constant 0 : index
    %315 = vector.load %arg10[%314, %c0_221, %c0_222] : memref<8x8x128xf32, #tpu.memory_space<vmem>>, vector<1x8x128xf32>
    %316 = vector.shape_cast %315 : vector<1x8x128xf32> to vector<8x128xf32>
    %317 = vector.shape_cast %313 : vector<8x128xf32> to vector<1x8x128xf32>
    tpu.vector_store %arg10[%314, %c0_221, %c0_222], %317 {strides = array<i32>} : memref<8x8x128xf32, #tpu.memory_space<vmem>>, vector<1x8x128xf32>,
    %c1_i32_223 = arith.constant 1 : i32
    %318 = arith.index_cast %c1_i32_223 : i32 to index
    %c0_224 = arith.constant 0 : index
    %c0_225 = arith.constant 0 : index
    %319 = vector.load %arg11[%318, %c0_224, %c0_225] : memref<8x8x128xf32, #tpu.memory_space<vmem>>, vector<1x8x128xf32>
    %320 = vector.shape_cast %319 : vector<1x8x128xf32> to vector<8x128xf32>
    %cst_226 = arith.constant dense<0.000000e+00> : vector<8x128xf32>
    %321 = tpu.matmul %313, %305, %cst_226 {dimension_numbers = #tpu.dot_dimension_numbers<[1], [0], [0], [1], [0, 0, 1, 1], [], []>} : vector<8x128xf32>, vector<128x128xf32>, vector<8x128xf32> -> vector<8x128xf32>
    %322 = arith.addf %320, %321 : vector<8x128xf32>
    %323 = math.tanh %322 : vector<8x128xf32>
    %324 = arith.index_cast %c1_i32_223 : i32 to index
    %c0_227 = arith.constant 0 : index
    %c0_228 = arith.constant 0 : index
    %325 = vector.load %arg10[%324, %c0_227, %c0_228] : memref<8x8x128xf32, #tpu.memory_space<vmem>>, vector<1x8x128xf32>
    %326 = vector.shape_cast %325 : vector<1x8x128xf32> to vector<8x128xf32>
    %327 = vector.shape_cast %323 : vector<8x128xf32> to vector<1x8x128xf32>
    tpu.vector_store %arg10[%324, %c0_227, %c0_228], %327 {strides = array<i32>} : memref<8x8x128xf32, #tpu.memory_space<vmem>>, vector<1x8x128xf32>,
    %c2_i32_229 = arith.constant 2 : i32
    %328 = arith.index_cast %c2_i32_229 : i32 to index
    %c0_230 = arith.constant 0 : index
    %c0_231 = arith.constant 0 : index
    %329 = vector.load %arg11[%328, %c0_230, %c0_231] : memref<8x8x128xf32, #tpu.memory_space<vmem>>, vector<1x8x128xf32>
    %330 = vector.shape_cast %329 : vector<1x8x128xf32> to vector<8x128xf32>
    %cst_232 = arith.constant dense<0.000000e+00> : vector<8x128xf32>
    %331 = tpu.matmul %323, %305, %cst_232 {dimension_numbers = #tpu.dot_dimension_numbers<[1], [0], [0], [1], [0, 0, 1, 1], [], []>} : vector<8x128xf32>, vector<128x128xf32>, vector<8x128xf32> -> vector<8x128xf32>
    %332 = arith.addf %330, %331 : vector<8x128xf32>
    %333 = math.tanh %332 : vector<8x128xf32>
    %334 = arith.index_cast %c2_i32_229 : i32 to index
    %c0_233 = arith.constant 0 : index
    %c0_234 = arith.constant 0 : index
    %335 = vector.load %arg10[%334, %c0_233, %c0_234] : memref<8x8x128xf32, #tpu.memory_space<vmem>>, vector<1x8x128xf32>
    %336 = vector.shape_cast %335 : vector<1x8x128xf32> to vector<8x128xf32>
    %337 = vector.shape_cast %333 : vector<8x128xf32> to vector<1x8x128xf32>
    tpu.vector_store %arg10[%334, %c0_233, %c0_234], %337 {strides = array<i32>} : memref<8x8x128xf32, #tpu.memory_space<vmem>>, vector<1x8x128xf32>,
    %c3_i32_235 = arith.constant 3 : i32
    %338 = arith.index_cast %c3_i32_235 : i32 to index
    %c0_236 = arith.constant 0 : index
    %c0_237 = arith.constant 0 : index
    %339 = vector.load %arg11[%338, %c0_236, %c0_237] : memref<8x8x128xf32, #tpu.memory_space<vmem>>, vector<1x8x128xf32>
    %340 = vector.shape_cast %339 : vector<1x8x128xf32> to vector<8x128xf32>
    %cst_238 = arith.constant dense<0.000000e+00> : vector<8x128xf32>
    %341 = tpu.matmul %333, %305, %cst_238 {dimension_numbers = #tpu.dot_dimension_numbers<[1], [0], [0], [1], [0, 0, 1, 1], [], []>} : vector<8x128xf32>, vector<128x128xf32>, vector<8x128xf32> -> vector<8x128xf32>
    %342 = arith.addf %340, %341 : vector<8x128xf32>
    %343 = math.tanh %342 : vector<8x128xf32>
    %344 = arith.index_cast %c3_i32_235 : i32 to index
    %c0_239 = arith.constant 0 : index
    %c0_240 = arith.constant 0 : index
    %345 = vector.load %arg10[%344, %c0_239, %c0_240] : memref<8x8x128xf32, #tpu.memory_space<vmem>>, vector<1x8x128xf32>
    %346 = vector.shape_cast %345 : vector<1x8x128xf32> to vector<8x128xf32>
    %347 = vector.shape_cast %343 : vector<8x128xf32> to vector<1x8x128xf32>
    tpu.vector_store %arg10[%344, %c0_239, %c0_240], %347 {strides = array<i32>} : memref<8x8x128xf32, #tpu.memory_space<vmem>>, vector<1x8x128xf32>,
    %c4_i32_241 = arith.constant 4 : i32
    %348 = arith.index_cast %c4_i32_241 : i32 to index
    %c0_242 = arith.constant 0 : index
    %c0_243 = arith.constant 0 : index
    %349 = vector.load %arg11[%348, %c0_242, %c0_243] : memref<8x8x128xf32, #tpu.memory_space<vmem>>, vector<1x8x128xf32>
    %350 = vector.shape_cast %349 : vector<1x8x128xf32> to vector<8x128xf32>
    %cst_244 = arith.constant dense<0.000000e+00> : vector<8x128xf32>
    %351 = tpu.matmul %343, %305, %cst_244 {dimension_numbers = #tpu.dot_dimension_numbers<[1], [0], [0], [1], [0, 0, 1, 1], [], []>} : vector<8x128xf32>, vector<128x128xf32>, vector<8x128xf32> -> vector<8x128xf32>
    %352 = arith.addf %350, %351 : vector<8x128xf32>
    %353 = math.tanh %352 : vector<8x128xf32>
    %354 = arith.index_cast %c4_i32_241 : i32 to index
    %c0_245 = arith.constant 0 : index
    %c0_246 = arith.constant 0 : index
    %355 = vector.load %arg10[%354, %c0_245, %c0_246] : memref<8x8x128xf32, #tpu.memory_space<vmem>>, vector<1x8x128xf32>
    %356 = vector.shape_cast %355 : vector<1x8x128xf32> to vector<8x128xf32>
    %357 = vector.shape_cast %353 : vector<8x128xf32> to vector<1x8x128xf32>
    tpu.vector_store %arg10[%354, %c0_245, %c0_246], %357 {strides = array<i32>} : memref<8x8x128xf32, #tpu.memory_space<vmem>>, vector<1x8x128xf32>,
    %c5_i32_247 = arith.constant 5 : i32
    %358 = arith.index_cast %c5_i32_247 : i32 to index
    %c0_248 = arith.constant 0 : index
    %c0_249 = arith.constant 0 : index
    %359 = vector.load %arg11[%358, %c0_248, %c0_249] : memref<8x8x128xf32, #tpu.memory_space<vmem>>, vector<1x8x128xf32>
    %360 = vector.shape_cast %359 : vector<1x8x128xf32> to vector<8x128xf32>
    %cst_250 = arith.constant dense<0.000000e+00> : vector<8x128xf32>
    %361 = tpu.matmul %353, %305, %cst_250 {dimension_numbers = #tpu.dot_dimension_numbers<[1], [0], [0], [1], [0, 0, 1, 1], [], []>} : vector<8x128xf32>, vector<128x128xf32>, vector<8x128xf32> -> vector<8x128xf32>
    %362 = arith.addf %360, %361 : vector<8x128xf32>
    %363 = math.tanh %362 : vector<8x128xf32>
    %364 = arith.index_cast %c5_i32_247 : i32 to index
    %c0_251 = arith.constant 0 : index
    %c0_252 = arith.constant 0 : index
    %365 = vector.load %arg10[%364, %c0_251, %c0_252] : memref<8x8x128xf32, #tpu.memory_space<vmem>>, vector<1x8x128xf32>
    %366 = vector.shape_cast %365 : vector<1x8x128xf32> to vector<8x128xf32>
    %367 = vector.shape_cast %363 : vector<8x128xf32> to vector<1x8x128xf32>
    tpu.vector_store %arg10[%364, %c0_251, %c0_252], %367 {strides = array<i32>} : memref<8x8x128xf32, #tpu.memory_space<vmem>>, vector<1x8x128xf32>,
    %c6_i32_253 = arith.constant 6 : i32
    %368 = arith.index_cast %c6_i32_253 : i32 to index
    %c0_254 = arith.constant 0 : index
    %c0_255 = arith.constant 0 : index
    %369 = vector.load %arg11[%368, %c0_254, %c0_255] : memref<8x8x128xf32, #tpu.memory_space<vmem>>, vector<1x8x128xf32>
    %370 = vector.shape_cast %369 : vector<1x8x128xf32> to vector<8x128xf32>
    %cst_256 = arith.constant dense<0.000000e+00> : vector<8x128xf32>
    %371 = tpu.matmul %363, %305, %cst_256 {dimension_numbers = #tpu.dot_dimension_numbers<[1], [0], [0], [1], [0, 0, 1, 1], [], []>} : vector<8x128xf32>, vector<128x128xf32>, vector<8x128xf32> -> vector<8x128xf32>
    %372 = arith.addf %370, %371 : vector<8x128xf32>
    %373 = math.tanh %372 : vector<8x128xf32>
    %374 = arith.index_cast %c6_i32_253 : i32 to index
    %c0_257 = arith.constant 0 : index
    %c0_258 = arith.constant 0 : index
    %375 = vector.load %arg10[%374, %c0_257, %c0_258] : memref<8x8x128xf32, #tpu.memory_space<vmem>>, vector<1x8x128xf32>
    %376 = vector.shape_cast %375 : vector<1x8x128xf32> to vector<8x128xf32>
    %377 = vector.shape_cast %373 : vector<8x128xf32> to vector<1x8x128xf32>
    tpu.vector_store %arg10[%374, %c0_257, %c0_258], %377 {strides = array<i32>} : memref<8x8x128xf32, #tpu.memory_space<vmem>>, vector<1x8x128xf32>,
    %c7_i32_259 = arith.constant 7 : i32
    %378 = arith.index_cast %c7_i32_259 : i32 to index
    %c0_260 = arith.constant 0 : index
    %c0_261 = arith.constant 0 : index
    %379 = vector.load %arg11[%378, %c0_260, %c0_261] : memref<8x8x128xf32, #tpu.memory_space<vmem>>, vector<1x8x128xf32>
    %380 = vector.shape_cast %379 : vector<1x8x128xf32> to vector<8x128xf32>
    %cst_262 = arith.constant dense<0.000000e+00> : vector<8x128xf32>
    %381 = tpu.matmul %373, %305, %cst_262 {dimension_numbers = #tpu.dot_dimension_numbers<[1], [0], [0], [1], [0, 0, 1, 1], [], []>} : vector<8x128xf32>, vector<128x128xf32>, vector<8x128xf32> -> vector<8x128xf32>
    %382 = arith.addf %380, %381 : vector<8x128xf32>
    %383 = math.tanh %382 : vector<8x128xf32>
    %384 = arith.index_cast %c7_i32_259 : i32 to index
    %c0_263 = arith.constant 0 : index
    %c0_264 = arith.constant 0 : index
    %385 = vector.load %arg10[%384, %c0_263, %c0_264] : memref<8x8x128xf32, #tpu.memory_space<vmem>>, vector<1x8x128xf32>
    %386 = vector.shape_cast %385 : vector<1x8x128xf32> to vector<8x128xf32>
    %387 = vector.shape_cast %383 : vector<8x128xf32> to vector<1x8x128xf32>
    tpu.vector_store %arg10[%384, %c0_263, %c0_264], %387 {strides = array<i32>} : memref<8x8x128xf32, #tpu.memory_space<vmem>>, vector<1x8x128xf32>,
    %c8_i32_265 = arith.constant 8 : i32
    %c3_266 = arith.constant 3 : index
    %c0_267 = arith.constant 0 : index
    %c0_268 = arith.constant 0 : index
    %388 = vector.load %arg9[%c3_266, %c0_267, %c0_268] : memref<5x8x128xf32, #tpu.memory_space<vmem>>, vector<1x8x128xf32>
    %389 = vector.shape_cast %388 : vector<1x8x128xf32> to vector<8x128xf32>
    %390 = vector.shape_cast %383 : vector<8x128xf32> to vector<1x8x128xf32>
    tpu.vector_store %arg9[%c3_266, %c0_267, %c0_268], %390 {strides = array<i32>} : memref<5x8x128xf32, #tpu.memory_space<vmem>>, vector<1x8x128xf32>,
    %c0_269 = arith.constant 0 : index
    %c0_270 = arith.constant 0 : index
    %c0_271 = arith.constant 0 : index
    %391 = vector.load %arg10[%c0_269, %c0_270, %c0_271] : memref<8x8x128xf32, #tpu.memory_space<vmem>>, vector<8x8x128xf32>
    %392 = vector.shape_cast %391 : vector<8x8x128xf32> to vector<64x128xf32>
    %c3_272 = arith.constant 3 : index
    %c0_273 = arith.constant 0 : index
    %c0_274 = arith.constant 0 : index
    %393 = vector.load %arg3[%c3_272, %c0_273, %c0_274] : memref<4x128x128xf32, #tpu.memory_space<vmem>>, vector<1x128x128xf32>
    %394 = vector.shape_cast %393 : vector<1x128x128xf32> to vector<128x128xf32>
    %cst_275 = arith.constant dense<0.000000e+00> : vector<64x128xf32>
    %395 = tpu.matmul %392, %394, %cst_275 {dimension_numbers = #tpu.dot_dimension_numbers<[1], [0], [0], [1], [0, 0, 1, 1], [], []>} : vector<64x128xf32>, vector<128x128xf32>, vector<64x128xf32> -> vector<64x128xf32>
    %c4 = arith.constant 4 : index
    %c0_276 = arith.constant 0 : index
    %c0_277 = arith.constant 0 : index
    %396 = vector.load %arg5[%c4, %c0_276, %c0_277] : memref<5x1x128xf32, #tpu.memory_space<vmem>>, vector<1x1x128xf32>
    %397 = vector.shape_cast %396 : vector<1x1x128xf32> to vector<1x128xf32>
    %398 = vector.broadcast %397 : vector<1x128xf32> to vector<64x128xf32>
    %399 = arith.addf %395, %398 : vector<64x128xf32>
    %400 = vector.shape_cast %399 : vector<64x128xf32> to vector<8x8x128xf32>
    %c0_278 = arith.constant 0 : index
    %c0_279 = arith.constant 0 : index
    %c0_280 = arith.constant 0 : index
    %401 = vector.load %arg11[%c0_278, %c0_279, %c0_280] : memref<8x8x128xf32, #tpu.memory_space<vmem>>, vector<8x8x128xf32>
    tpu.vector_store %arg11[%c0_278, %c0_279, %c0_280], %400 {strides = array<i32>} : memref<8x8x128xf32, #tpu.memory_space<vmem>>, vector<8x8x128xf32>,
    %c4_281 = arith.constant 4 : index
    %c0_282 = arith.constant 0 : index
    %c0_283 = arith.constant 0 : index
    %402 = vector.load %arg4[%c4_281, %c0_282, %c0_283] : memref<5x128x128xf32, #tpu.memory_space<vmem>>, vector<1x128x128xf32>
    %403 = vector.shape_cast %402 : vector<1x128x128xf32> to vector<128x128xf32>
    %c4_284 = arith.constant 4 : index
    %c0_285 = arith.constant 0 : index
    %c0_286 = arith.constant 0 : index
    %404 = vector.load %arg1[%c4_284, %c0_285, %c0_286] : memref<5x8x128xf32, #tpu.memory_space<vmem>>, vector<1x8x128xf32>
    %405 = vector.shape_cast %404 : vector<1x8x128xf32> to vector<8x128xf32>
    %c0_i32_287 = arith.constant 0 : i32
    %406 = arith.index_cast %c0_i32_287 : i32 to index
    %c0_288 = arith.constant 0 : index
    %c0_289 = arith.constant 0 : index
    %407 = vector.load %arg11[%406, %c0_288, %c0_289] : memref<8x8x128xf32, #tpu.memory_space<vmem>>, vector<1x8x128xf32>
    %408 = vector.shape_cast %407 : vector<1x8x128xf32> to vector<8x128xf32>
    %cst_290 = arith.constant dense<0.000000e+00> : vector<8x128xf32>
    %409 = tpu.matmul %405, %403, %cst_290 {dimension_numbers = #tpu.dot_dimension_numbers<[1], [0], [0], [1], [0, 0, 1, 1], [], []>} : vector<8x128xf32>, vector<128x128xf32>, vector<8x128xf32> -> vector<8x128xf32>
    %410 = arith.addf %408, %409 : vector<8x128xf32>
    %411 = math.tanh %410 : vector<8x128xf32>
    %412 = arith.index_cast %c0_i32_287 : i32 to index
    %c0_291 = arith.constant 0 : index
    %c0_292 = arith.constant 0 : index
    %413 = vector.load %arg10[%412, %c0_291, %c0_292] : memref<8x8x128xf32, #tpu.memory_space<vmem>>, vector<1x8x128xf32>
    %414 = vector.shape_cast %413 : vector<1x8x128xf32> to vector<8x128xf32>
    %415 = vector.shape_cast %411 : vector<8x128xf32> to vector<1x8x128xf32>
    tpu.vector_store %arg10[%412, %c0_291, %c0_292], %415 {strides = array<i32>} : memref<8x8x128xf32, #tpu.memory_space<vmem>>, vector<1x8x128xf32>,
    %c1_i32_293 = arith.constant 1 : i32
    %416 = arith.index_cast %c1_i32_293 : i32 to index
    %c0_294 = arith.constant 0 : index
    %c0_295 = arith.constant 0 : index
    %417 = vector.load %arg11[%416, %c0_294, %c0_295] : memref<8x8x128xf32, #tpu.memory_space<vmem>>, vector<1x8x128xf32>
    %418 = vector.shape_cast %417 : vector<1x8x128xf32> to vector<8x128xf32>
    %cst_296 = arith.constant dense<0.000000e+00> : vector<8x128xf32>
    %419 = tpu.matmul %411, %403, %cst_296 {dimension_numbers = #tpu.dot_dimension_numbers<[1], [0], [0], [1], [0, 0, 1, 1], [], []>} : vector<8x128xf32>, vector<128x128xf32>, vector<8x128xf32> -> vector<8x128xf32>
    %420 = arith.addf %418, %419 : vector<8x128xf32>
    %421 = math.tanh %420 : vector<8x128xf32>
    %422 = arith.index_cast %c1_i32_293 : i32 to index
    %c0_297 = arith.constant 0 : index
    %c0_298 = arith.constant 0 : index
    %423 = vector.load %arg10[%422, %c0_297, %c0_298] : memref<8x8x128xf32, #tpu.memory_space<vmem>>, vector<1x8x128xf32>
    %424 = vector.shape_cast %423 : vector<1x8x128xf32> to vector<8x128xf32>
    %425 = vector.shape_cast %421 : vector<8x128xf32> to vector<1x8x128xf32>
    tpu.vector_store %arg10[%422, %c0_297, %c0_298], %425 {strides = array<i32>} : memref<8x8x128xf32, #tpu.memory_space<vmem>>, vector<1x8x128xf32>,
    %c2_i32_299 = arith.constant 2 : i32
    %426 = arith.index_cast %c2_i32_299 : i32 to index
    %c0_300 = arith.constant 0 : index
    %c0_301 = arith.constant 0 : index
    %427 = vector.load %arg11[%426, %c0_300, %c0_301] : memref<8x8x128xf32, #tpu.memory_space<vmem>>, vector<1x8x128xf32>
    %428 = vector.shape_cast %427 : vector<1x8x128xf32> to vector<8x128xf32>
    %cst_302 = arith.constant dense<0.000000e+00> : vector<8x128xf32>
    %429 = tpu.matmul %421, %403, %cst_302 {dimension_numbers = #tpu.dot_dimension_numbers<[1], [0], [0], [1], [0, 0, 1, 1], [], []>} : vector<8x128xf32>, vector<128x128xf32>, vector<8x128xf32> -> vector<8x128xf32>
    %430 = arith.addf %428, %429 : vector<8x128xf32>
    %431 = math.tanh %430 : vector<8x128xf32>
    %432 = arith.index_cast %c2_i32_299 : i32 to index
    %c0_303 = arith.constant 0 : index
    %c0_304 = arith.constant 0 : index
    %433 = vector.load %arg10[%432, %c0_303, %c0_304] : memref<8x8x128xf32, #tpu.memory_space<vmem>>, vector<1x8x128xf32>
    %434 = vector.shape_cast %433 : vector<1x8x128xf32> to vector<8x128xf32>
    %435 = vector.shape_cast %431 : vector<8x128xf32> to vector<1x8x128xf32>
    tpu.vector_store %arg10[%432, %c0_303, %c0_304], %435 {strides = array<i32>} : memref<8x8x128xf32, #tpu.memory_space<vmem>>, vector<1x8x128xf32>,
    %c3_i32_305 = arith.constant 3 : i32
    %436 = arith.index_cast %c3_i32_305 : i32 to index
    %c0_306 = arith.constant 0 : index
    %c0_307 = arith.constant 0 : index
    %437 = vector.load %arg11[%436, %c0_306, %c0_307] : memref<8x8x128xf32, #tpu.memory_space<vmem>>, vector<1x8x128xf32>
    %438 = vector.shape_cast %437 : vector<1x8x128xf32> to vector<8x128xf32>
    %cst_308 = arith.constant dense<0.000000e+00> : vector<8x128xf32>
    %439 = tpu.matmul %431, %403, %cst_308 {dimension_numbers = #tpu.dot_dimension_numbers<[1], [0], [0], [1], [0, 0, 1, 1], [], []>} : vector<8x128xf32>, vector<128x128xf32>, vector<8x128xf32> -> vector<8x128xf32>
    %440 = arith.addf %438, %439 : vector<8x128xf32>
    %441 = math.tanh %440 : vector<8x128xf32>
    %442 = arith.index_cast %c3_i32_305 : i32 to index
    %c0_309 = arith.constant 0 : index
    %c0_310 = arith.constant 0 : index
    %443 = vector.load %arg10[%442, %c0_309, %c0_310] : memref<8x8x128xf32, #tpu.memory_space<vmem>>, vector<1x8x128xf32>
    %444 = vector.shape_cast %443 : vector<1x8x128xf32> to vector<8x128xf32>
    %445 = vector.shape_cast %441 : vector<8x128xf32> to vector<1x8x128xf32>
    tpu.vector_store %arg10[%442, %c0_309, %c0_310], %445 {strides = array<i32>} : memref<8x8x128xf32, #tpu.memory_space<vmem>>, vector<1x8x128xf32>,
    %c4_i32_311 = arith.constant 4 : i32
    %446 = arith.index_cast %c4_i32_311 : i32 to index
    %c0_312 = arith.constant 0 : index
    %c0_313 = arith.constant 0 : index
    %447 = vector.load %arg11[%446, %c0_312, %c0_313] : memref<8x8x128xf32, #tpu.memory_space<vmem>>, vector<1x8x128xf32>
    %448 = vector.shape_cast %447 : vector<1x8x128xf32> to vector<8x128xf32>
    %cst_314 = arith.constant dense<0.000000e+00> : vector<8x128xf32>
    %449 = tpu.matmul %441, %403, %cst_314 {dimension_numbers = #tpu.dot_dimension_numbers<[1], [0], [0], [1], [0, 0, 1, 1], [], []>} : vector<8x128xf32>, vector<128x128xf32>, vector<8x128xf32> -> vector<8x128xf32>
    %450 = arith.addf %448, %449 : vector<8x128xf32>
    %451 = math.tanh %450 : vector<8x128xf32>
    %452 = arith.index_cast %c4_i32_311 : i32 to index
    %c0_315 = arith.constant 0 : index
    %c0_316 = arith.constant 0 : index
    %453 = vector.load %arg10[%452, %c0_315, %c0_316] : memref<8x8x128xf32, #tpu.memory_space<vmem>>, vector<1x8x128xf32>
    %454 = vector.shape_cast %453 : vector<1x8x128xf32> to vector<8x128xf32>
    %455 = vector.shape_cast %451 : vector<8x128xf32> to vector<1x8x128xf32>
    tpu.vector_store %arg10[%452, %c0_315, %c0_316], %455 {strides = array<i32>} : memref<8x8x128xf32, #tpu.memory_space<vmem>>, vector<1x8x128xf32>,
    %c5_i32_317 = arith.constant 5 : i32
    %456 = arith.index_cast %c5_i32_317 : i32 to index
    %c0_318 = arith.constant 0 : index
    %c0_319 = arith.constant 0 : index
    %457 = vector.load %arg11[%456, %c0_318, %c0_319] : memref<8x8x128xf32, #tpu.memory_space<vmem>>, vector<1x8x128xf32>
    %458 = vector.shape_cast %457 : vector<1x8x128xf32> to vector<8x128xf32>
    %cst_320 = arith.constant dense<0.000000e+00> : vector<8x128xf32>
    %459 = tpu.matmul %451, %403, %cst_320 {dimension_numbers = #tpu.dot_dimension_numbers<[1], [0], [0], [1], [0, 0, 1, 1], [], []>} : vector<8x128xf32>, vector<128x128xf32>, vector<8x128xf32> -> vector<8x128xf32>
    %460 = arith.addf %458, %459 : vector<8x128xf32>
    %461 = math.tanh %460 : vector<8x128xf32>
    %462 = arith.index_cast %c5_i32_317 : i32 to index
    %c0_321 = arith.constant 0 : index
    %c0_322 = arith.constant 0 : index
    %463 = vector.load %arg10[%462, %c0_321, %c0_322] : memref<8x8x128xf32, #tpu.memory_space<vmem>>, vector<1x8x128xf32>
    %464 = vector.shape_cast %463 : vector<1x8x128xf32> to vector<8x128xf32>
    %465 = vector.shape_cast %461 : vector<8x128xf32> to vector<1x8x128xf32>
    tpu.vector_store %arg10[%462, %c0_321, %c0_322], %465 {strides = array<i32>} : memref<8x8x128xf32, #tpu.memory_space<vmem>>, vector<1x8x128xf32>,
    %c6_i32_323 = arith.constant 6 : i32
    %466 = arith.index_cast %c6_i32_323 : i32 to index
    %c0_324 = arith.constant 0 : index
    %c0_325 = arith.constant 0 : index
    %467 = vector.load %arg11[%466, %c0_324, %c0_325] : memref<8x8x128xf32, #tpu.memory_space<vmem>>, vector<1x8x128xf32>
    %468 = vector.shape_cast %467 : vector<1x8x128xf32> to vector<8x128xf32>
    %cst_326 = arith.constant dense<0.000000e+00> : vector<8x128xf32>
    %469 = tpu.matmul %461, %403, %cst_326 {dimension_numbers = #tpu.dot_dimension_numbers<[1], [0], [0], [1], [0, 0, 1, 1], [], []>} : vector<8x128xf32>, vector<128x128xf32>, vector<8x128xf32> -> vector<8x128xf32>
    %470 = arith.addf %468, %469 : vector<8x128xf32>
    %471 = math.tanh %470 : vector<8x128xf32>
    %472 = arith.index_cast %c6_i32_323 : i32 to index
    %c0_327 = arith.constant 0 : index
    %c0_328 = arith.constant 0 : index
    %473 = vector.load %arg10[%472, %c0_327, %c0_328] : memref<8x8x128xf32, #tpu.memory_space<vmem>>, vector<1x8x128xf32>
    %474 = vector.shape_cast %473 : vector<1x8x128xf32> to vector<8x128xf32>
    %475 = vector.shape_cast %471 : vector<8x128xf32> to vector<1x8x128xf32>
    tpu.vector_store %arg10[%472, %c0_327, %c0_328], %475 {strides = array<i32>} : memref<8x8x128xf32, #tpu.memory_space<vmem>>, vector<1x8x128xf32>,
    %c7_i32_329 = arith.constant 7 : i32
    %476 = arith.index_cast %c7_i32_329 : i32 to index
    %c0_330 = arith.constant 0 : index
    %c0_331 = arith.constant 0 : index
    %477 = vector.load %arg11[%476, %c0_330, %c0_331] : memref<8x8x128xf32, #tpu.memory_space<vmem>>, vector<1x8x128xf32>
    %478 = vector.shape_cast %477 : vector<1x8x128xf32> to vector<8x128xf32>
    %cst_332 = arith.constant dense<0.000000e+00> : vector<8x128xf32>
    %479 = tpu.matmul %471, %403, %cst_332 {dimension_numbers = #tpu.dot_dimension_numbers<[1], [0], [0], [1], [0, 0, 1, 1], [], []>} : vector<8x128xf32>, vector<128x128xf32>, vector<8x128xf32> -> vector<8x128xf32>
    %480 = arith.addf %478, %479 : vector<8x128xf32>
    %481 = math.tanh %480 : vector<8x128xf32>
    %482 = arith.index_cast %c7_i32_329 : i32 to index
    %c0_333 = arith.constant 0 : index
    %c0_334 = arith.constant 0 : index
    %483 = vector.load %arg10[%482, %c0_333, %c0_334] : memref<8x8x128xf32, #tpu.memory_space<vmem>>, vector<1x8x128xf32>
    %484 = vector.shape_cast %483 : vector<1x8x128xf32> to vector<8x128xf32>
    %485 = vector.shape_cast %481 : vector<8x128xf32> to vector<1x8x128xf32>
    tpu.vector_store %arg10[%482, %c0_333, %c0_334], %485 {strides = array<i32>} : memref<8x8x128xf32, #tpu.memory_space<vmem>>, vector<1x8x128xf32>,
    %c8_i32_335 = arith.constant 8 : i32
    %c4_336 = arith.constant 4 : index
    %c0_337 = arith.constant 0 : index
    %c0_338 = arith.constant 0 : index
    %486 = vector.load %arg9[%c4_336, %c0_337, %c0_338] : memref<5x8x128xf32, #tpu.memory_space<vmem>>, vector<1x8x128xf32>
    %487 = vector.shape_cast %486 : vector<1x8x128xf32> to vector<8x128xf32>
    %488 = vector.shape_cast %481 : vector<8x128xf32> to vector<1x8x128xf32>
    tpu.vector_store %arg9[%c4_336, %c0_337, %c0_338], %488 {strides = array<i32>} : memref<5x8x128xf32, #tpu.memory_space<vmem>>, vector<1x8x128xf32>,
    %c0_339 = arith.constant 0 : index
    %c0_340 = arith.constant 0 : index
    %c0_341 = arith.constant 0 : index
    %489 = vector.load %arg10[%c0_339, %c0_340, %c0_341] : memref<8x8x128xf32, #tpu.memory_space<vmem>>, vector<8x8x128xf32>
    %490 = vector.shape_cast %489 : vector<8x8x128xf32> to vector<64x128xf32>
    %c0_342 = arith.constant 0 : index
    %c0_343 = arith.constant 0 : index
    %491 = vector.load %arg6[%c0_342, %c0_343] : memref<128x128xf32, #tpu.memory_space<vmem>>, vector<128x128xf32>
    %cst_344 = arith.constant dense<0.000000e+00> : vector<64x128xf32>
    %492 = tpu.matmul %490, %491, %cst_344 {dimension_numbers = #tpu.dot_dimension_numbers<[1], [0], [0], [1], [0, 0, 1, 1], [], []>} : vector<64x128xf32>, vector<128x128xf32>, vector<64x128xf32> -> vector<64x128xf32>
    %c0_345 = arith.constant 0 : index
    %c0_346 = arith.constant 0 : index
    %493 = vector.load %arg7[%c0_345, %c0_346] : memref<1x128xf32, #tpu.memory_space<vmem>>, vector<1x128xf32>
    %494 = vector.broadcast %493 : vector<1x128xf32> to vector<64x128xf32>
    %495 = arith.addf %492, %494 : vector<64x128xf32>
    %496 = vector.shape_cast %495 : vector<64x128xf32> to vector<8x8x128xf32>
    %c0_347 = arith.constant 0 : index
    %c0_348 = arith.constant 0 : index
    %c0_349 = arith.constant 0 : index
    %497 = vector.load %arg8[%c0_347, %c0_348, %c0_349] : memref<8x8x128xf32, #tpu.memory_space<vmem>>, vector<8x8x128xf32>
    tpu.vector_store %arg8[%c0_347, %c0_348, %c0_349], %496 {strides = array<i32>} : memref<8x8x128xf32, #tpu.memory_space<vmem>>, vector<8x8x128xf32>,
    return
  }
}

</mosaic_0001>

<llo_original>
// kernel: rnn_forward.1
$region0: #{rnn_forward.1}
  #allocation0 [shape = 'u32[]', space=smem, size = 0x4, offset = 0x4, fixed_abs, tag = 'smem constant byte address 0x4 - core index']
  #allocation1 [shape = 'u32[72,128]{1,0:T(1,128)}', space=vmem, size = 0x9000, scoped, tag = 'internal scratch']
  #allocation2 [shape = 'f32[8,8,128]{2,1,0:T(8,128)}', space=vmem, size = 0x8000, scoped, tag = 'scratch operand']
  #allocation3 [shape = 'f32[8,8,128]{2,1,0:T(8,128)}', space=vmem, size = 0x8000, scoped, tag = 'scratch operand']
  %s0 = inlined_call_operand.vmem [shape: f32[8,8,1024], index: 0, kind: input, shape index: {}]
  %s1 = inlined_call_operand.vmem [shape: f32[5,8,128], index: 1, kind: input, shape index: {}]
  %s2 = inlined_call_operand.vmem [shape: f32[1024,128], index: 2, kind: input, shape index: {}]
  %s3 = inlined_call_operand.vmem [shape: f32[4,128,128], index: 3, kind: input, shape index: {}]
  %s4 = inlined_call_operand.vmem [shape: f32[5,128,128], index: 4, kind: input, shape index: {}]
  %s5 = inlined_call_operand.vmem [shape: f32[5,1,128], index: 5, kind: input, shape index: {}]
  %s6 = inlined_call_operand.vmem [shape: f32[128,128], index: 6, kind: input, shape index: {}]
  %s7 = inlined_call_operand.vmem [shape: f32[1,128], index: 7, kind: input, shape index: {}]
  %s8 = inlined_call_operand.vmem [shape: f32[8,8,128], index: 8, kind: output, shape index: {0}]
  %s9 = inlined_call_operand.vmem [shape: f32[5,8,128], index: 9, kind: output, shape index: {1}]
  %10 = xla_tuple %s8, %s9
  %s11 = sld [smem:[#allocation0]]
  $region50: #{rnn_forward.1} parent=0
    _
  %s13 = ssub.s32 1, %s11
  %s14 = scalar_select 0, %s13, %s11
  // Predicated region
  $region2: #{rnn_forward.1} parent=0 // pred_check
    _
  $region3: #{rnn_forward.1} parent=0 // pred_check_branch
    %16 = sbr.rel (0) target = $region5
  $region4: #{rnn_forward.1} parent=0 // pred_region
    _
  $region5: #{rnn_forward.1} parent=0 // pred_fallthru
    _
  // Predicated region
  $region6: #{rnn_forward.1} parent=0 // pred_check
    _
  $region7: #{rnn_forward.1} parent=0 // pred_check_branch
    %18 = sbr.rel (0) target = $region9
  $region8: #{rnn_forward.1} parent=0 // pred_region
    _
  $region9: #{rnn_forward.1} parent=0 // pred_fallthru
    _
  // Predicated region
  $region10: #{rnn_forward.1} parent=0 // pred_check
    _
  $region11: #{rnn_forward.1} parent=0 // pred_check_branch
    %20 = sbr.rel (0) target = $region13
  $region12: #{rnn_forward.1} parent=0 // pred_region
    _
  $region13: #{rnn_forward.1} parent=0 // pred_fallthru
    _
  // Predicated region
  $region14: #{rnn_forward.1} parent=0 // pred_check
    _
  $region15: #{rnn_forward.1} parent=0 // pred_check_branch
    %22 = sbr.rel (0) target = $region17
  $region16: #{rnn_forward.1} parent=0 // pred_region
    _
  $region17: #{rnn_forward.1} parent=0 // pred_fallthru
    _
  // Predicated region
  $region18: #{rnn_forward.1} parent=0 // pred_check
    _
  $region19: #{rnn_forward.1} parent=0 // pred_check_branch
    %24 = sbr.rel (0) target = $region21
  $region20: #{rnn_forward.1} parent=0 // pred_region
    _
  $region21: #{rnn_forward.1} parent=0 // pred_fallthru
    _
  // Predicated region
  $region22: #{rnn_forward.1} parent=0 // pred_check
    _
  $region23: #{rnn_forward.1} parent=0 // pred_check_branch
    %26 = sbr.rel (0) target = $region25
  $region24: #{rnn_forward.1} parent=0 // pred_region
    _
  $region25: #{rnn_forward.1} parent=0 // pred_fallthru
    _
  // Predicated region
  $region26: #{rnn_forward.1} parent=0 // pred_check
    _
  $region27: #{rnn_forward.1} parent=0 // pred_check_branch
    %28 = sbr.rel (0) target = $region29
  $region28: #{rnn_forward.1} parent=0 // pred_region
    _
  $region29: #{rnn_forward.1} parent=0 // pred_fallthru
    _
  // Predicated region
  $region30: #{rnn_forward.1} parent=0 // pred_check
    _
  $region31: #{rnn_forward.1} parent=0 // pred_check_branch
    %30 = sbr.rel (0) target = $region33
  $region32: #{rnn_forward.1} parent=0 // pred_region
    _
  $region33: #{rnn_forward.1} parent=0 // pred_fallthru
    _
  %v31 = vld [vmem:[%s0] sm:$0xff]
  %v32 = vld [vmem:[%s0 + $0x8] sm:$0xff]
  %v33 = vld [vmem:[%s0 + $0x10] sm:$0xff]
  %v34 = vld [vmem:[%s0 + $0x18] sm:$0xff]
  %v35 = vld [vmem:[%s0 + $0x20] sm:$0xff]
  %v36 = vld [vmem:[%s0 + $0x28] sm:$0xff]
  %v37 = vld [vmem:[%s0 + $0x30] sm:$0xff]
  %v38 = vld [vmem:[%s0 + $0x38] sm:$0xff]
  %v39 = vld [vmem:[%s0 + $0x40] sm:$0xff]
  %v40 = vld [vmem:[%s0 + $0x48] sm:$0xff]
  %v41 = vld [vmem:[%s0 + $0x50] sm:$0xff]
  %v42 = vld [vmem:[%s0 + $0x58] sm:$0xff]
  %v43 = vld [vmem:[%s0 + $0x60] sm:$0xff]
  %v44 = vld [vmem:[%s0 + $0x68] sm:$0xff]
  %v45 = vld [vmem:[%s0 + $0x70] sm:$0xff]
  %v46 = vld [vmem:[%s0 + $0x78] sm:$0xff]
  %v47 = vld [vmem:[%s0 + $0x80] sm:$0xff]
  %v48 = vld [vmem:[%s0 + $0x88] sm:$0xff]
  %v49 = vld [vmem:[%s0 + $0x90] sm:$0xff]
  %v50 = vld [vmem:[%s0 + $0x98] sm:$0xff]
  %v51 = vld [vmem:[%s0 + $0xa0] sm:$0xff]
  %v52 = vld [vmem:[%s0 + $0xa8] sm:$0xff]
  %v53 = vld [vmem:[%s0 + $0xb0] sm:$0xff]
  %v54 = vld [vmem:[%s0 + $0xb8] sm:$0xff]
  %v55 = vld [vmem:[%s0 + $0xc0] sm:$0xff]
  %v56 = vld [vmem:[%s0 + $0xc8] sm:$0xff]
  %v57 = vld [vmem:[%s0 + $0xd0] sm:$0xff]
  %v58 = vld [vmem:[%s0 + $0xd8] sm:$0xff]
  %v59 = vld [vmem:[%s0 + $0xe0] sm:$0xff]
  %v60 = vld [vmem:[%s0 + $0xe8] sm:$0xff]
  %v61 = vld [vmem:[%s0 + $0xf0] sm:$0xff]
  %v62 = vld [vmem:[%s0 + $0xf8] sm:$0xff]
  %v63 = vld [vmem:[%s0 + $0x100] sm:$0xff]
  %v64 = vld [vmem:[%s0 + $0x108] sm:$0xff]
  %v65 = vld [vmem:[%s0 + $0x110] sm:$0xff]
  %v66 = vld [vmem:[%s0 + $0x118] sm:$0xff]
  %v67 = vld [vmem:[%s0 + $0x120] sm:$0xff]
  %v68 = vld [vmem:[%s0 + $0x128] sm:$0xff]
  %v69 = vld [vmem:[%s0 + $0x130] sm:$0xff]
  %v70 = vld [vmem:[%s0 + $0x138] sm:$0xff]
  %v71 = vld [vmem:[%s0 + $0x140] sm:$0xff]
  %v72 = vld [vmem:[%s0 + $0x148] sm:$0xff]
  %v73 = vld [vmem:[%s0 + $0x150] sm:$0xff]
  %v74 = vld [vmem:[%s0 + $0x158] sm:$0xff]
  %v75 = vld [vmem:[%s0 + $0x160] sm:$0xff]
  %v76 = vld [vmem:[%s0 + $0x168] sm:$0xff]
  %v77 = vld [vmem:[%s0 + $0x170] sm:$0xff]
  %v78 = vld [vmem:[%s0 + $0x178] sm:$0xff]
  %v79 = vld [vmem:[%s0 + $0x180] sm:$0xff]
  %v80 = vld [vmem:[%s0 + $0x188] sm:$0xff]
  %v81 = vld [vmem:[%s0 + $0x190] sm:$0xff]
  %v82 = vld [vmem:[%s0 + $0x198] sm:$0xff]
  %v83 = vld [vmem:[%s0 + $0x1a0] sm:$0xff]
  %v84 = vld [vmem:[%s0 + $0x1a8] sm:$0xff]
  %v85 = vld [vmem:[%s0 + $0x1b0] sm:$0xff]
  %v86 = vld [vmem:[%s0 + $0x1b8] sm:$0xff]
  %v87 = vld [vmem:[%s0 + $0x1c0] sm:$0xff]
  %v88 = vld [vmem:[%s0 + $0x1c8] sm:$0xff]
  %v89 = vld [vmem:[%s0 + $0x1d0] sm:$0xff]
  %v90 = vld [vmem:[%s0 + $0x1d8] sm:$0xff]
  %v91 = vld [vmem:[%s0 + $0x1e0] sm:$0xff]
  %v92 = vld [vmem:[%s0 + $0x1e8] sm:$0xff]
  %v93 = vld [vmem:[%s0 + $0x1f0] sm:$0xff]
  %v94 = vld [vmem:[%s0 + $0x1f8] sm:$0xff]
  %v95 = vld [vmem:[%s2] sm:$0xff]
  %v96 = vld [vmem:[%s2 + $0x8] sm:$0xff]
  %v97 = vld [vmem:[%s2 + $0x10] sm:$0xff]
  %v98 = vld [vmem:[%s2 + $0x18] sm:$0xff]
  %v99 = vld [vmem:[%s2 + $0x20] sm:$0xff]
  %v100 = vld [vmem:[%s2 + $0x28] sm:$0xff]
  %v101 = vld [vmem:[%s2 + $0x30] sm:$0xff]
  %v102 = vld [vmem:[%s2 + $0x38] sm:$0xff]
  %v103 = vld [vmem:[%s2 + $0x40] sm:$0xff]
  %v104 = vld [vmem:[%s2 + $0x48] sm:$0xff]
  %v105 = vld [vmem:[%s2 + $0x50] sm:$0xff]
  %v106 = vld [vmem:[%s2 + $0x58] sm:$0xff]
  %v107 = vld [vmem:[%s2 + $0x60] sm:$0xff]
  %v108 = vld [vmem:[%s2 + $0x68] sm:$0xff]
  %v109 = vld [vmem:[%s2 + $0x70] sm:$0xff]
  %v110 = vld [vmem:[%s2 + $0x78] sm:$0xff]
  %v111 = vld [vmem:[%s2 + $0x80] sm:$0xff]
  %v112 = vld [vmem:[%s2 + $0x88] sm:$0xff]
  %v113 = vld [vmem:[%s2 + $0x90] sm:$0xff]
  %v114 = vld [vmem:[%s2 + $0x98] sm:$0xff]
  %v115 = vld [vmem:[%s2 + $0xa0] sm:$0xff]
  %v116 = vld [vmem:[%s2 + $0xa8] sm:$0xff]
  %v117 = vld [vmem:[%s2 + $0xb0] sm:$0xff]
  %v118 = vld [vmem:[%s2 + $0xb8] sm:$0xff]
  %v119 = vld [vmem:[%s2 + $0xc0] sm:$0xff]
  %v120 = vld [vmem:[%s2 + $0xc8] sm:$0xff]
  %v121 = vld [vmem:[%s2 + $0xd0] sm:$0xff]
  %v122 = vld [vmem:[%s2 + $0xd8] sm:$0xff]
  %v123 = vld [vmem:[%s2 + $0xe0] sm:$0xff]
  %v124 = vld [vmem:[%s2 + $0xe8] sm:$0xff]
  %v125 = vld [vmem:[%s2 + $0xf0] sm:$0xff]
  %v126 = vld [vmem:[%s2 + $0xf8] sm:$0xff]
  %v127 = vld [vmem:[%s2 + $0x100] sm:$0xff]
  %v128 = vld [vmem:[%s2 + $0x108] sm:$0xff]
  %v129 = vld [vmem:[%s2 + $0x110] sm:$0xff]
  %v130 = vld [vmem:[%s2 + $0x118] sm:$0xff]
  %v131 = vld [vmem:[%s2 + $0x120] sm:$0xff]
  %v132 = vld [vmem:[%s2 + $0x128] sm:$0xff]
  %v133 = vld [vmem:[%s2 + $0x130] sm:$0xff]
  %v134 = vld [vmem:[%s2 + $0x138] sm:$0xff]
  %v135 = vld [vmem:[%s2 + $0x140] sm:$0xff]
  %v136 = vld [vmem:[%s2 + $0x148] sm:$0xff]
  %v137 = vld [vmem:[%s2 + $0x150] sm:$0xff]
  %v138 = vld [vmem:[%s2 + $0x158] sm:$0xff]
  %v139 = vld [vmem:[%s2 + $0x160] sm:$0xff]
  %v140 = vld [vmem:[%s2 + $0x168] sm:$0xff]
  %v141 = vld [vmem:[%s2 + $0x170] sm:$0xff]
  %v142 = vld [vmem:[%s2 + $0x178] sm:$0xff]
  %v143 = vld [vmem:[%s2 + $0x180] sm:$0xff]
  %v144 = vld [vmem:[%s2 + $0x188] sm:$0xff]
  %v145 = vld [vmem:[%s2 + $0x190] sm:$0xff]
  %v146 = vld [vmem:[%s2 + $0x198] sm:$0xff]
  %v147 = vld [vmem:[%s2 + $0x1a0] sm:$0xff]
  %v148 = vld [vmem:[%s2 + $0x1a8] sm:$0xff]
  %v149 = vld [vmem:[%s2 + $0x1b0] sm:$0xff]
  %v150 = vld [vmem:[%s2 + $0x1b8] sm:$0xff]
  %v151 = vld [vmem:[%s2 + $0x1c0] sm:$0xff]
  %v152 = vld [vmem:[%s2 + $0x1c8] sm:$0xff]
  %v153 = vld [vmem:[%s2 + $0x1d0] sm:$0xff]
  %v154 = vld [vmem:[%s2 + $0x1d8] sm:$0xff]
  %v155 = vld [vmem:[%s2 + $0x1e0] sm:$0xff]
  %v156 = vld [vmem:[%s2 + $0x1e8] sm:$0xff]
  %v157 = vld [vmem:[%s2 + $0x1f0] sm:$0xff]
  %v158 = vld [vmem:[%s2 + $0x1f8] sm:$0xff]
  %v159 = vld [vmem:[%s2 + $0x200] sm:$0xff]
  %v160 = vld [vmem:[%s2 + $0x208] sm:$0xff]
  %v161 = vld [vmem:[%s2 + $0x210] sm:$0xff]
  %v162 = vld [vmem:[%s2 + $0x218] sm:$0xff]
  %v163 = vld [vmem:[%s2 + $0x220] sm:$0xff]
  %v164 = vld [vmem:[%s2 + $0x228] sm:$0xff]
  %v165 = vld [vmem:[%s2 + $0x230] sm:$0xff]
  %v166 = vld [vmem:[%s2 + $0x238] sm:$0xff]
  %v167 = vld [vmem:[%s2 + $0x240] sm:$0xff]
  %v168 = vld [vmem:[%s2 + $0x248] sm:$0xff]
  %v169 = vld [vmem:[%s2 + $0x250] sm:$0xff]
  %v170 = vld [vmem:[%s2 + $0x258] sm:$0xff]
  %v171 = vld [vmem:[%s2 + $0x260] sm:$0xff]
  %v172 = vld [vmem:[%s2 + $0x268] sm:$0xff]
  %v173 = vld [vmem:[%s2 + $0x270] sm:$0xff]
  %v174 = vld [vmem:[%s2 + $0x278] sm:$0xff]
  %v175 = vld [vmem:[%s2 + $0x280] sm:$0xff]
  %v176 = vld [vmem:[%s2 + $0x288] sm:$0xff]
  %v177 = vld [vmem:[%s2 + $0x290] sm:$0xff]
  %v178 = vld [vmem:[%s2 + $0x298] sm:$0xff]
  %v179 = vld [vmem:[%s2 + $0x2a0] sm:$0xff]
  %v180 = vld [vmem:[%s2 + $0x2a8] sm:$0xff]
  %v181 = vld [vmem:[%s2 + $0x2b0] sm:$0xff]
  %v182 = vld [vmem:[%s2 + $0x2b8] sm:$0xff]
  %v183 = vld [vmem:[%s2 + $0x2c0] sm:$0xff]
  %v184 = vld [vmem:[%s2 + $0x2c8] sm:$0xff]
  %v185 = vld [vmem:[%s2 + $0x2d0] sm:$0xff]
  %v186 = vld [vmem:[%s2 + $0x2d8] sm:$0xff]
  %v187 = vld [vmem:[%s2 + $0x2e0] sm:$0xff]
  %v188 = vld [vmem:[%s2 + $0x2e8] sm:$0xff]
  %v189 = vld [vmem:[%s2 + $0x2f0] sm:$0xff]
  %v190 = vld [vmem:[%s2 + $0x2f8] sm:$0xff]
  %v191 = vld [vmem:[%s2 + $0x300] sm:$0xff]
  %v192 = vld [vmem:[%s2 + $0x308] sm:$0xff]
  %v193 = vld [vmem:[%s2 + $0x310] sm:$0xff]
  %v194 = vld [vmem:[%s2 + $0x318] sm:$0xff]
  %v195 = vld [vmem:[%s2 + $0x320] sm:$0xff]
  %v196 = vld [vmem:[%s2 + $0x328] sm:$0xff]
  %v197 = vld [vmem:[%s2 + $0x330] sm:$0xff]
  %v198 = vld [vmem:[%s2 + $0x338] sm:$0xff]
  %v199 = vld [vmem:[%s2 + $0x340] sm:$0xff]
  %v200 = vld [vmem:[%s2 + $0x348] sm:$0xff]
  %v201 = vld [vmem:[%s2 + $0x350] sm:$0xff]
  %v202 = vld [vmem:[%s2 + $0x358] sm:$0xff]
  %v203 = vld [vmem:[%s2 + $0x360] sm:$0xff]
  %v204 = vld [vmem:[%s2 + $0x368] sm:$0xff]
  %v205 = vld [vmem:[%s2 + $0x370] sm:$0xff]
  %v206 = vld [vmem:[%s2 + $0x378] sm:$0xff]
  %v207 = vld [vmem:[%s2 + $0x380] sm:$0xff]
  %v208 = vld [vmem:[%s2 + $0x388] sm:$0xff]
  %v209 = vld [vmem:[%s2 + $0x390] sm:$0xff]
  %v210 = vld [vmem:[%s2 + $0x398] sm:$0xff]
  %v211 = vld [vmem:[%s2 + $0x3a0] sm:$0xff]
  %v212 = vld [vmem:[%s2 + $0x3a8] sm:$0xff]
  %v213 = vld [vmem:[%s2 + $0x3b0] sm:$0xff]
  %v214 = vld [vmem:[%s2 + $0x3b8] sm:$0xff]
  %v215 = vld [vmem:[%s2 + $0x3c0] sm:$0xff]
  %v216 = vld [vmem:[%s2 + $0x3c8] sm:$0xff]
  %v217 = vld [vmem:[%s2 + $0x3d0] sm:$0xff]
  %v218 = vld [vmem:[%s2 + $0x3d8] sm:$0xff]
  %v219 = vld [vmem:[%s2 + $0x3e0] sm:$0xff]
  %v220 = vld [vmem:[%s2 + $0x3e8] sm:$0xff]
  %v221 = vld [vmem:[%s2 + $0x3f0] sm:$0xff]
  %v222 = vld [vmem:[%s2 + $0x3f8] sm:$0xff]
  %v223 = vld [vmem:[%s5] sm:$0x1]
  %v225 = vperm.slane %v223, 0
  %227 = vmatpush.msra.mxu0 %v110
  %228 = vmatpush.msra.mxu0 %v109
  %229 = vmatpush.msra.mxu0 %v108
  %230 = vmatpush.msra.mxu0 %v107
  %231 = vmatpush.msra.mxu0 %v106
  %232 = vmatpush.msra.mxu0 %v105
  %233 = vmatpush.msra.mxu0 %v104
  %234 = vmatpush.msra.mxu0 %v103
  %235 = vmatpush.msra.mxu0 %v102
  %236 = vmatpush.msra.mxu0 %v101
  %237 = vmatpush.msra.mxu0 %v100
  %238 = vmatpush.msra.mxu0 %v99
  %239 = vmatpush.msra.mxu0 %v98
  %240 = vmatpush.msra.mxu0 %v97
  %241 = vmatpush.msra.mxu0 %v96
  %242 = vmatpush.msra.mxu0 %v95
  %243 = vmatmul.f32.gmra.mxu0 %v31
  %v244 = vpop.f32.mrf.mxu0
  %v245 = vadd.f32 %v225, %v244
  %246 = vmatmul.f32.gmra.mxu0 %v39
  %v247 = vpop.f32.mrf.mxu0
  %v248 = vadd.f32 %v225, %v247
  %249 = vmatmul.f32.gmra.mxu0 %v47
  %v250 = vpop.f32.mrf.mxu0
  %v251 = vadd.f32 %v225, %v250
  %252 = vmatmul.f32.gmra.mxu0 %v55
  %v253 = vpop.f32.mrf.mxu0
  %v254 = vadd.f32 %v225, %v253
  %255 = vmatmul.f32.gmra.mxu0 %v63
  %v256 = vpop.f32.mrf.mxu0
  %v257 = vadd.f32 %v225, %v256
  %258 = vmatmul.f32.gmra.mxu0 %v71
  %v259 = vpop.f32.mrf.mxu0
  %v260 = vadd.f32 %v225, %v259
  %261 = vmatmul.f32.gmra.mxu0 %v79
  %v262 = vpop.f32.mrf.mxu0
  %v263 = vadd.f32 %v225, %v262
  %264 = vmatmul.f32.gmra.mxu0 %v87
  %v265 = vpop.f32.mrf.mxu0
  %v266 = vadd.f32 %v225, %v265
  %267 = vdwg.mxu0
  %268 = vmatpush.msra.mxu0 %v126
  %269 = vmatpush.msra.mxu0 %v125
  %270 = vmatpush.msra.mxu0 %v124
  %271 = vmatpush.msra.mxu0 %v123
  %272 = vmatpush.msra.mxu0 %v122
  %273 = vmatpush.msra.mxu0 %v121
  %274 = vmatpush.msra.mxu0 %v120
  %275 = vmatpush.msra.mxu0 %v119
  %276 = vmatpush.msra.mxu0 %v118
  %277 = vmatpush.msra.mxu0 %v117
  %278 = vmatpush.msra.mxu0 %v116
  %279 = vmatpush.msra.mxu0 %v115
  %280 = vmatpush.msra.mxu0 %v114
  %281 = vmatpush.msra.mxu0 %v113
  %282 = vmatpush.msra.mxu0 %v112
  %283 = vmatpush.msra.mxu0 %v111
  %284 = vmatmul.f32.gmra.mxu0 %v32
  %v285 = vpop.f32.mrf.mxu0
  %v286 = vadd.f32 %v245, %v285
  %287 = vmatmul.f32.gmra.mxu0 %v40
  %v288 = vpop.f32.mrf.mxu0
  %v289 = vadd.f32 %v248, %v288
  %290 = vmatmul.f32.gmra.mxu0 %v48
  %v291 = vpop.f32.mrf.mxu0
  %v292 = vadd.f32 %v251, %v291
  %293 = vmatmul.f32.gmra.mxu0 %v56
  %v294 = vpop.f32.mrf.mxu0
  %v295 = vadd.f32 %v254, %v294
  %296 = vmatmul.f32.gmra.mxu0 %v64
  %v297 = vpop.f32.mrf.mxu0
  %v298 = vadd.f32 %v257, %v297
  %299 = vmatmul.f32.gmra.mxu0 %v72
  %v300 = vpop.f32.mrf.mxu0
  %v301 = vadd.f32 %v260, %v300
  %302 = vmatmul.f32.gmra.mxu0 %v80
  %v303 = vpop.f32.mrf.mxu0
  %v304 = vadd.f32 %v263, %v303
  %305 = vmatmul.f32.gmra.mxu0 %v88
  %v306 = vpop.f32.mrf.mxu0
  %v307 = vadd.f32 %v266, %v306
  %308 = vdwg.mxu0
  %309 = vmatpush.msra.mxu0 %v142
  %310 = vmatpush.msra.mxu0 %v141
  %311 = vmatpush.msra.mxu0 %v140
  %312 = vmatpush.msra.mxu0 %v139
  %313 = vmatpush.msra.mxu0 %v138
  %314 = vmatpush.msra.mxu0 %v137
  %315 = vmatpush.msra.mxu0 %v136
  %316 = vmatpush.msra.mxu0 %v135
  %317 = vmatpush.msra.mxu0 %v134
  %318 = vmatpush.msra.mxu0 %v133
  %319 = vmatpush.msra.mxu0 %v132
  %320 = vmatpush.msra.mxu0 %v131
  %321 = vmatpush.msra.mxu0 %v130
  %322 = vmatpush.msra.mxu0 %v129
  %323 = vmatpush.msra.mxu0 %v128
  %324 = vmatpush.msra.mxu0 %v127
  %325 = vmatmul.f32.gmra.mxu0 %v33
  %v326 = vpop.f32.mrf.mxu0
  %v327 = vadd.f32 %v286, %v326
  %328 = vmatmul.f32.gmra.mxu0 %v41
  %v329 = vpop.f32.mrf.mxu0
  %v330 = vadd.f32 %v289, %v329
  %331 = vmatmul.f32.gmra.mxu0 %v49
  %v332 = vpop.f32.mrf.mxu0
  %v333 = vadd.f32 %v292, %v332
  %334 = vmatmul.f32.gmra.mxu0 %v57
  %v335 = vpop.f32.mrf.mxu0
  %v336 = vadd.f32 %v295, %v335
  %337 = vmatmul.f32.gmra.mxu0 %v65
  %v338 = vpop.f32.mrf.mxu0
  %v339 = vadd.f32 %v298, %v338
  %340 = vmatmul.f32.gmra.mxu0 %v73
  %v341 = vpop.f32.mrf.mxu0
  %v342 = vadd.f32 %v301, %v341
  %343 = vmatmul.f32.gmra.mxu0 %v81
  %v344 = vpop.f32.mrf.mxu0
  %v345 = vadd.f32 %v304, %v344
  %346 = vmatmul.f32.gmra.mxu0 %v89
  %v347 = vpop.f32.mrf.mxu0
  %v348 = vadd.f32 %v307, %v347
  %349 = vdwg.mxu0
  %350 = vmatpush.msra.mxu0 %v158
  %351 = vmatpush.msra.mxu0 %v157
  %352 = vmatpush.msra.mxu0 %v156
  %353 = vmatpush.msra.mxu0 %v155
  %354 = vmatpush.msra.mxu0 %v154
  %355 = vmatpush.msra.mxu0 %v153
  %356 = vmatpush.msra.mxu0 %v152
  %357 = vmatpush.msra.mxu0 %v151
  %358 = vmatpush.msra.mxu0 %v150
  %359 = vmatpush.msra.mxu0 %v149
  %360 = vmatpush.msra.mxu0 %v148
  %361 = vmatpush.msra.mxu0 %v147
  %362 = vmatpush.msra.mxu0 %v146
  %363 = vmatpush.msra.mxu0 %v145
  %364 = vmatpush.msra.mxu0 %v144
  %365 = vmatpush.msra.mxu0 %v143
  %366 = vmatmul.f32.gmra.mxu0 %v34
  %v367 = vpop.f32.mrf.mxu0
  %v368 = vadd.f32 %v327, %v367
  %369 = vmatmul.f32.gmra.mxu0 %v42
  %v370 = vpop.f32.mrf.mxu0
  %v371 = vadd.f32 %v330, %v370
  %372 = vmatmul.f32.gmra.mxu0 %v50
  %v373 = vpop.f32.mrf.mxu0
  %v374 = vadd.f32 %v333, %v373
  %375 = vmatmul.f32.gmra.mxu0 %v58
  %v376 = vpop.f32.mrf.mxu0
  %v377 = vadd.f32 %v336, %v376
  %378 = vmatmul.f32.gmra.mxu0 %v66
  %v379 = vpop.f32.mrf.mxu0
  %v380 = vadd.f32 %v339, %v379
  %381 = vmatmul.f32.gmra.mxu0 %v74
  %v382 = vpop.f32.mrf.mxu0
  %v383 = vadd.f32 %v342, %v382
  %384 = vmatmul.f32.gmra.mxu0 %v82
  %v385 = vpop.f32.mrf.mxu0
  %v386 = vadd.f32 %v345, %v385
  %387 = vmatmul.f32.gmra.mxu0 %v90
  %v388 = vpop.f32.mrf.mxu0
  %v389 = vadd.f32 %v348, %v388
  %390 = vdwg.mxu0
  %391 = vmatpush.msra.mxu0 %v174
  %392 = vmatpush.msra.mxu0 %v173
  %393 = vmatpush.msra.mxu0 %v172
  %394 = vmatpush.msra.mxu0 %v171
  %395 = vmatpush.msra.mxu0 %v170
  %396 = vmatpush.msra.mxu0 %v169
  %397 = vmatpush.msra.mxu0 %v168
  %398 = vmatpush.msra.mxu0 %v167
  %399 = vmatpush.msra.mxu0 %v166
  %400 = vmatpush.msra.mxu0 %v165
  %401 = vmatpush.msra.mxu0 %v164
  %402 = vmatpush.msra.mxu0 %v163
  %403 = vmatpush.msra.mxu0 %v162
  %404 = vmatpush.msra.mxu0 %v161
  %405 = vmatpush.msra.mxu0 %v160
  %406 = vmatpush.msra.mxu0 %v159
  %407 = vmatmul.f32.gmra.mxu0 %v35
  %v408 = vpop.f32.mrf.mxu0
  %v409 = vadd.f32 %v368, %v408
  %410 = vmatmul.f32.gmra.mxu0 %v43
  %v411 = vpop.f32.mrf.mxu0
  %v412 = vadd.f32 %v371, %v411
  %413 = vmatmul.f32.gmra.mxu0 %v51
  %v414 = vpop.f32.mrf.mxu0
  %v415 = vadd.f32 %v374, %v414
  %416 = vmatmul.f32.gmra.mxu0 %v59
  %v417 = vpop.f32.mrf.mxu0
  %v418 = vadd.f32 %v377, %v417
  %419 = vmatmul.f32.gmra.mxu0 %v67
  %v420 = vpop.f32.mrf.mxu0
  %v421 = vadd.f32 %v380, %v420
  %422 = vmatmul.f32.gmra.mxu0 %v75
  %v423 = vpop.f32.mrf.mxu0
  %v424 = vadd.f32 %v383, %v423
  %425 = vmatmul.f32.gmra.mxu0 %v83
  %v426 = vpop.f32.mrf.mxu0
  %v427 = vadd.f32 %v386, %v426
  %428 = vmatmul.f32.gmra.mxu0 %v91
  %v429 = vpop.f32.mrf.mxu0
  %v430 = vadd.f32 %v389, %v429
  %431 = vdwg.mxu0
  %432 = vmatpush.msra.mxu0 %v190
  %433 = vmatpush.msra.mxu0 %v189
  %434 = vmatpush.msra.mxu0 %v188
  %435 = vmatpush.msra.mxu0 %v187
  %436 = vmatpush.msra.mxu0 %v186
  %437 = vmatpush.msra.mxu0 %v185
  %438 = vmatpush.msra.mxu0 %v184
  %439 = vmatpush.msra.mxu0 %v183
  %440 = vmatpush.msra.mxu0 %v182
  %441 = vmatpush.msra.mxu0 %v181
  %442 = vmatpush.msra.mxu0 %v180
  %443 = vmatpush.msra.mxu0 %v179
  %444 = vmatpush.msra.mxu0 %v178
  %445 = vmatpush.msra.mxu0 %v177
  %446 = vmatpush.msra.mxu0 %v176
  %447 = vmatpush.msra.mxu0 %v175
  %448 = vmatmul.f32.gmra.mxu0 %v36
  %v449 = vpop.f32.mrf.mxu0
  %v450 = vadd.f32 %v409, %v449
  %451 = vmatmul.f32.gmra.mxu0 %v44
  %v452 = vpop.f32.mrf.mxu0
  %v453 = vadd.f32 %v412, %v452
  %454 = vmatmul.f32.gmra.mxu0 %v52
  %v455 = vpop.f32.mrf.mxu0
  %v456 = vadd.f32 %v415, %v455
  %457 = vmatmul.f32.gmra.mxu0 %v60
  %v458 = vpop.f32.mrf.mxu0
  %v459 = vadd.f32 %v418, %v458
  %460 = vmatmul.f32.gmra.mxu0 %v68
  %v461 = vpop.f32.mrf.mxu0
  %v462 = vadd.f32 %v421, %v461
  %463 = vmatmul.f32.gmra.mxu0 %v76
  %v464 = vpop.f32.mrf.mxu0
  %v465 = vadd.f32 %v424, %v464
  %466 = vmatmul.f32.gmra.mxu0 %v84
  %v467 = vpop.f32.mrf.mxu0
  %v468 = vadd.f32 %v427, %v467
  %469 = vmatmul.f32.gmra.mxu0 %v92
  %v470 = vpop.f32.mrf.mxu0
  %v471 = vadd.f32 %v430, %v470
  %472 = vdwg.mxu0
  %473 = vmatpush.msra.mxu0 %v206
  %474 = vmatpush.msra.mxu0 %v205
  %475 = vmatpush.msra.mxu0 %v204
  %476 = vmatpush.msra.mxu0 %v203
  %477 = vmatpush.msra.mxu0 %v202
  %478 = vmatpush.msra.mxu0 %v201
  %479 = vmatpush.msra.mxu0 %v200
  %480 = vmatpush.msra.mxu0 %v199
  %481 = vmatpush.msra.mxu0 %v198
  %482 = vmatpush.msra.mxu0 %v197
  %483 = vmatpush.msra.mxu0 %v196
  %484 = vmatpush.msra.mxu0 %v195
  %485 = vmatpush.msra.mxu0 %v194
  %486 = vmatpush.msra.mxu0 %v193
  %487 = vmatpush.msra.mxu0 %v192
  %488 = vmatpush.msra.mxu0 %v191
  %489 = vmatmul.f32.gmra.mxu0 %v37
  %v490 = vpop.f32.mrf.mxu0
  %v491 = vadd.f32 %v450, %v490
  %492 = vmatmul.f32.gmra.mxu0 %v45
  %v493 = vpop.f32.mrf.mxu0
  %v494 = vadd.f32 %v453, %v493
  %495 = vmatmul.f32.gmra.mxu0 %v53
  %v496 = vpop.f32.mrf.mxu0
  %v497 = vadd.f32 %v456, %v496
  %498 = vmatmul.f32.gmra.mxu0 %v61
  %v499 = vpop.f32.mrf.mxu0
  %v500 = vadd.f32 %v459, %v499
  %501 = vmatmul.f32.gmra.mxu0 %v69
  %v502 = vpop.f32.mrf.mxu0
  %v503 = vadd.f32 %v462, %v502
  %504 = vmatmul.f32.gmra.mxu0 %v77
  %v505 = vpop.f32.mrf.mxu0
  %v506 = vadd.f32 %v465, %v505
  %507 = vmatmul.f32.gmra.mxu0 %v85
  %v508 = vpop.f32.mrf.mxu0
  %v509 = vadd.f32 %v468, %v508
  %510 = vmatmul.f32.gmra.mxu0 %v93
  %v511 = vpop.f32.mrf.mxu0
  %v512 = vadd.f32 %v471, %v511
  %513 = vdwg.mxu0
  %514 = vmatpush.msra.mxu0 %v222
  %515 = vmatpush.msra.mxu0 %v221
  %516 = vmatpush.msra.mxu0 %v220
  %517 = vmatpush.msra.mxu0 %v219
  %518 = vmatpush.msra.mxu0 %v218
  %519 = vmatpush.msra.mxu0 %v217
  %520 = vmatpush.msra.mxu0 %v216
  %521 = vmatpush.msra.mxu0 %v215
  %522 = vmatpush.msra.mxu0 %v214
  %523 = vmatpush.msra.mxu0 %v213
  %524 = vmatpush.msra.mxu0 %v212
  %525 = vmatpush.msra.mxu0 %v211
  %526 = vmatpush.msra.mxu0 %v210
  %527 = vmatpush.msra.mxu0 %v209
  %528 = vmatpush.msra.mxu0 %v208
  %529 = vmatpush.msra.mxu0 %v207
  %530 = vmatmul.f32.gmra.mxu0 %v38
  %v531 = vpop.f32.mrf.mxu0
  %v532 = vadd.f32 %v491, %v531
  %533 = vmatmul.f32.gmra.mxu0 %v46
  %v534 = vpop.f32.mrf.mxu0
  %v535 = vadd.f32 %v494, %v534
  %536 = vmatmul.f32.gmra.mxu0 %v54
  %v537 = vpop.f32.mrf.mxu0
  %v538 = vadd.f32 %v497, %v537
  %539 = vmatmul.f32.gmra.mxu0 %v62
  %v540 = vpop.f32.mrf.mxu0
  %v541 = vadd.f32 %v500, %v540
  %542 = vmatmul.f32.gmra.mxu0 %v70
  %v543 = vpop.f32.mrf.mxu0
  %v544 = vadd.f32 %v503, %v543
  %545 = vmatmul.f32.gmra.mxu0 %v78
  %v546 = vpop.f32.mrf.mxu0
  %v547 = vadd.f32 %v506, %v546
  %548 = vmatmul.f32.gmra.mxu0 %v86
  %v549 = vpop.f32.mrf.mxu0
  %v550 = vadd.f32 %v509, %v549
  %551 = vmatmul.f32.gmra.mxu0 %v94
  %v552 = vpop.f32.mrf.mxu0
  %v553 = vadd.f32 %v512, %v552
  %554 = vdwg.mxu0
  %555 = vst [vmem:[#allocation3] sm:$0xff] %v532
  %556 = vst [vmem:[#allocation3 + $0x8] sm:$0xff] %v535
  %557 = vst [vmem:[#allocation3 + $0x10] sm:$0xff] %v538
  %558 = vst [vmem:[#allocation3 + $0x18] sm:$0xff] %v541
  %559 = vst [vmem:[#allocation3 + $0x20] sm:$0xff] %v544
  %560 = vst [vmem:[#allocation3 + $0x28] sm:$0xff] %v547
  %561 = vst [vmem:[#allocation3 + $0x30] sm:$0xff] %v550
  %562 = vst [vmem:[#allocation3 + $0x38] sm:$0xff] %v553
  %v563 = vld [vmem:[%s4] sm:$0xff]
  %v564 = vld [vmem:[%s4 + $0x8] sm:$0xff]
  %v565 = vld [vmem:[%s4 + $0x10] sm:$0xff]
  %v566 = vld [vmem:[%s4 + $0x18] sm:$0xff]
  %v567 = vld [vmem:[%s4 + $0x20] sm:$0xff]
  %v568 = vld [vmem:[%s4 + $0x28] sm:$0xff]
  %v569 = vld [vmem:[%s4 + $0x30] sm:$0xff]
  %v570 = vld [vmem:[%s4 + $0x38] sm:$0xff]
  %v571 = vld [vmem:[%s4 + $0x40] sm:$0xff]
  %v572 = vld [vmem:[%s4 + $0x48] sm:$0xff]
  %v573 = vld [vmem:[%s4 + $0x50] sm:$0xff]
  %v574 = vld [vmem:[%s4 + $0x58] sm:$0xff]
  %v575 = vld [vmem:[%s4 + $0x60] sm:$0xff]
  %v576 = vld [vmem:[%s4 + $0x68] sm:$0xff]
  %v577 = vld [vmem:[%s4 + $0x70] sm:$0xff]
  %v578 = vld [vmem:[%s4 + $0x78] sm:$0xff]
  %v579 = vld [vmem:[%s1] sm:$0xff]
  %v580 = vld [vmem:[#allocation3] sm:$0xff]
  %581 = vmatpush.msra.mxu0 %v578
  %582 = vmatpush.msra.mxu0 %v577
  %583 = vmatpush.msra.mxu0 %v576
  %584 = vmatpush.msra.mxu0 %v575
  %585 = vmatpush.msra.mxu0 %v574
  %586 = vmatpush.msra.mxu0 %v573
  %587 = vmatpush.msra.mxu0 %v572
  %588 = vmatpush.msra.mxu0 %v571
  %589 = vmatpush.msra.mxu0 %v570
  %590 = vmatpush.msra.mxu0 %v569
  %591 = vmatpush.msra.mxu0 %v568
  %592 = vmatpush.msra.mxu0 %v567
  %593 = vmatpush.msra.mxu0 %v566
  %594 = vmatpush.msra.mxu0 %v565
  %595 = vmatpush.msra.mxu0 %v564
  %596 = vmatpush.msra.mxu0 %v563
  %597 = vmatmul.f32.gmra.mxu0 %v579
  %v598 = vpop.f32.mrf.mxu0
  %v599 = vadd.f32 0.0, %v598
  %600 = vdwg.mxu0
  %v601 = vadd.f32 %v580, %v599
  %v602 = vtanh.pop %v601
  %603 = vst [vmem:[#allocation2] sm:$0xff] %v602
  %s604 = scalar_lea.vmem [#allocation3], 8
  %v605 = vld [vmem:[%s604] sm:$0xff]
  %606 = vmatpush.msra.mxu0 %v578
  %607 = vmatpush.msra.mxu0 %v577
  %608 = vmatpush.msra.mxu0 %v576
  %609 = vmatpush.msra.mxu0 %v575
  %610 = vmatpush.msra.mxu0 %v574
  %611 = vmatpush.msra.mxu0 %v573
  %612 = vmatpush.msra.mxu0 %v572
  %613 = vmatpush.msra.mxu0 %v571
  %614 = vmatpush.msra.mxu0 %v570
  %615 = vmatpush.msra.mxu0 %v569
  %616 = vmatpush.msra.mxu0 %v568
  %617 = vmatpush.msra.mxu0 %v567
  %618 = vmatpush.msra.mxu0 %v566
  %619 = vmatpush.msra.mxu0 %v565
  %620 = vmatpush.msra.mxu0 %v564
  %621 = vmatpush.msra.mxu0 %v563
  %622 = vmatmul.f32.gmra.mxu0 %v602
  %v623 = vpop.f32.mrf.mxu0
  %v624 = vadd.f32 0.0, %v623
  %625 = vdwg.mxu0
  %v626 = vadd.f32 %v605, %v624
  %v627 = vtanh.pop %v626
  %s628 = scalar_lea.vmem [#allocation2], 8
  %629 = vst [vmem:[%s628] sm:$0xff] %v627
  %s630 = scalar_lea.vmem [#allocation3], 16
  %v631 = vld [vmem:[%s630] sm:$0xff]
  %632 = vmatpush.msra.mxu0 %v578
  %633 = vmatpush.msra.mxu0 %v577
  %634 = vmatpush.msra.mxu0 %v576
  %635 = vmatpush.msra.mxu0 %v575
  %636 = vmatpush.msra.mxu0 %v574
  %637 = vmatpush.msra.mxu0 %v573
  %638 = vmatpush.msra.mxu0 %v572
  %639 = vmatpush.msra.mxu0 %v571
  %640 = vmatpush.msra.mxu0 %v570
  %641 = vmatpush.msra.mxu0 %v569
  %642 = vmatpush.msra.mxu0 %v568
  %643 = vmatpush.msra.mxu0 %v567
  %644 = vmatpush.msra.mxu0 %v566
  %645 = vmatpush.msra.mxu0 %v565
  %646 = vmatpush.msra.mxu0 %v564
  %647 = vmatpush.msra.mxu0 %v563
  %648 = vmatmul.f32.gmra.mxu0 %v627
  %v649 = vpop.f32.mrf.mxu0
  %v650 = vadd.f32 0.0, %v649
  %651 = vdwg.mxu0
  %v652 = vadd.f32 %v631, %v650
  %v653 = vtanh.pop %v652
  %s654 = scalar_lea.vmem [#allocation2], 16
  %655 = vst [vmem:[%s654] sm:$0xff] %v653
  %s656 = scalar_lea.vmem [#allocation3], 24
  %v657 = vld [vmem:[%s656] sm:$0xff]
  %658 = vmatpush.msra.mxu0 %v578
  %659 = vmatpush.msra.mxu0 %v577
  %660 = vmatpush.msra.mxu0 %v576
  %661 = vmatpush.msra.mxu0 %v575
  %662 = vmatpush.msra.mxu0 %v574
  %663 = vmatpush.msra.mxu0 %v573
  %664 = vmatpush.msra.mxu0 %v572
  %665 = vmatpush.msra.mxu0 %v571
  %666 = vmatpush.msra.mxu0 %v570
  %667 = vmatpush.msra.mxu0 %v569
  %668 = vmatpush.msra.mxu0 %v568
  %669 = vmatpush.msra.mxu0 %v567
  %670 = vmatpush.msra.mxu0 %v566
  %671 = vmatpush.msra.mxu0 %v565
  %672 = vmatpush.msra.mxu0 %v564
  %673 = vmatpush.msra.mxu0 %v563
  %674 = vmatmul.f32.gmra.mxu0 %v653
  %v675 = vpop.f32.mrf.mxu0
  %v676 = vadd.f32 0.0, %v675
  %677 = vdwg.mxu0
  %v678 = vadd.f32 %v657, %v676
  %v679 = vtanh.pop %v678
  %s680 = scalar_lea.vmem [#allocation2], 24
  %681 = vst [vmem:[%s680] sm:$0xff] %v679
  %s682 = scalar_lea.vmem [#allocation3], 32
  %v683 = vld [vmem:[%s682] sm:$0xff]
  %684 = vmatpush.msra.mxu0 %v578
  %685 = vmatpush.msra.mxu0 %v577
  %686 = vmatpush.msra.mxu0 %v576
  %687 = vmatpush.msra.mxu0 %v575
  %688 = vmatpush.msra.mxu0 %v574
  %689 = vmatpush.msra.mxu0 %v573
  %690 = vmatpush.msra.mxu0 %v572
  %691 = vmatpush.msra.mxu0 %v571
  %692 = vmatpush.msra.mxu0 %v570
  %693 = vmatpush.msra.mxu0 %v569
  %694 = vmatpush.msra.mxu0 %v568
  %695 = vmatpush.msra.mxu0 %v567
  %696 = vmatpush.msra.mxu0 %v566
  %697 = vmatpush.msra.mxu0 %v565
  %698 = vmatpush.msra.mxu0 %v564
  %699 = vmatpush.msra.mxu0 %v563
  %700 = vmatmul.f32.gmra.mxu0 %v679
  %v701 = vpop.f32.mrf.mxu0
  %v702 = vadd.f32 0.0, %v701
  %703 = vdwg.mxu0
  %v704 = vadd.f32 %v683, %v702
  %v705 = vtanh.pop %v704
  %s706 = scalar_lea.vmem [#allocation2], 32
  %707 = vst [vmem:[%s706] sm:$0xff] %v705
  %s708 = scalar_lea.vmem [#allocation3], 40
  %v709 = vld [vmem:[%s708] sm:$0xff]
  %710 = vmatpush.msra.mxu0 %v578
  %711 = vmatpush.msra.mxu0 %v577
  %712 = vmatpush.msra.mxu0 %v576
  %713 = vmatpush.msra.mxu0 %v575
  %714 = vmatpush.msra.mxu0 %v574
  %715 = vmatpush.msra.mxu0 %v573
  %716 = vmatpush.msra.mxu0 %v572
  %717 = vmatpush.msra.mxu0 %v571
  %718 = vmatpush.msra.mxu0 %v570
  %719 = vmatpush.msra.mxu0 %v569
  %720 = vmatpush.msra.mxu0 %v568
  %721 = vmatpush.msra.mxu0 %v567
  %722 = vmatpush.msra.mxu0 %v566
  %723 = vmatpush.msra.mxu0 %v565
  %724 = vmatpush.msra.mxu0 %v564
  %725 = vmatpush.msra.mxu0 %v563
  %726 = vmatmul.f32.gmra.mxu0 %v705
  %v727 = vpop.f32.mrf.mxu0
  %v728 = vadd.f32 0.0, %v727
  %729 = vdwg.mxu0
  %v730 = vadd.f32 %v709, %v728
  %v731 = vtanh.pop %v730
  %s732 = scalar_lea.vmem [#allocation2], 40
  %733 = vst [vmem:[%s732] sm:$0xff] %v731
  %s734 = scalar_lea.vmem [#allocation3], 48
  %v735 = vld [vmem:[%s734] sm:$0xff]
  %736 = vmatpush.msra.mxu0 %v578
  %737 = vmatpush.msra.mxu0 %v577
  %738 = vmatpush.msra.mxu0 %v576
  %739 = vmatpush.msra.mxu0 %v575
  %740 = vmatpush.msra.mxu0 %v574
  %741 = vmatpush.msra.mxu0 %v573
  %742 = vmatpush.msra.mxu0 %v572
  %743 = vmatpush.msra.mxu0 %v571
  %744 = vmatpush.msra.mxu0 %v570
  %745 = vmatpush.msra.mxu0 %v569
  %746 = vmatpush.msra.mxu0 %v568
  %747 = vmatpush.msra.mxu0 %v567
  %748 = vmatpush.msra.mxu0 %v566
  %749 = vmatpush.msra.mxu0 %v565
  %750 = vmatpush.msra.mxu0 %v564
  %751 = vmatpush.msra.mxu0 %v563
  %752 = vmatmul.f32.gmra.mxu0 %v731
  %v753 = vpop.f32.mrf.mxu0
  %v754 = vadd.f32 0.0, %v753
  %755 = vdwg.mxu0
  %v756 = vadd.f32 %v735, %v754
  %v757 = vtanh.pop %v756
  %s758 = scalar_lea.vmem [#allocation2], 48
  %759 = vst [vmem:[%s758] sm:$0xff] %v757
  %s760 = scalar_lea.vmem [#allocation3], 56
  %v761 = vld [vmem:[%s760] sm:$0xff]
  %762 = vmatpush.msra.mxu0 %v578
  %763 = vmatpush.msra.mxu0 %v577
  %764 = vmatpush.msra.mxu0 %v576
  %765 = vmatpush.msra.mxu0 %v575
  %766 = vmatpush.msra.mxu0 %v574
  %767 = vmatpush.msra.mxu0 %v573
  %768 = vmatpush.msra.mxu0 %v572
  %769 = vmatpush.msra.mxu0 %v571
  %770 = vmatpush.msra.mxu0 %v570
  %771 = vmatpush.msra.mxu0 %v569
  %772 = vmatpush.msra.mxu0 %v568
  %773 = vmatpush.msra.mxu0 %v567
  %774 = vmatpush.msra.mxu0 %v566
  %775 = vmatpush.msra.mxu0 %v565
  %776 = vmatpush.msra.mxu0 %v564
  %777 = vmatpush.msra.mxu0 %v563
  %778 = vmatmul.f32.gmra.mxu0 %v757
  %v779 = vpop.f32.mrf.mxu0
  %v780 = vadd.f32 0.0, %v779
  %781 = vdwg.mxu0
  %v782 = vadd.f32 %v761, %v780
  %v783 = vtanh.pop %v782
  %s784 = scalar_lea.vmem [#allocation2], 56
  %785 = vst [vmem:[%s784] sm:$0xff] %v783
  %786 = vst [vmem:[%s9] sm:$0xff] %v783
  %v787 = vld [vmem:[#allocation2] sm:$0xff]
  %v788 = vld [vmem:[#allocation2 + $0x8] sm:$0xff]
  %v789 = vld [vmem:[#allocation2 + $0x10] sm:$0xff]
  %v790 = vld [vmem:[#allocation2 + $0x18] sm:$0xff]
  %v791 = vld [vmem:[#allocation2 + $0x20] sm:$0xff]
  %v792 = vld [vmem:[#allocation2 + $0x28] sm:$0xff]
  %v793 = vld [vmem:[#allocation2 + $0x30] sm:$0xff]
  %v794 = vld [vmem:[#allocation2 + $0x38] sm:$0xff]
  %v795 = vld [vmem:[%s3] sm:$0xff]
  %v796 = vld [vmem:[%s3 + $0x8] sm:$0xff]
  %v797 = vld [vmem:[%s3 + $0x10] sm:$0xff]
  %v798 = vld [vmem:[%s3 + $0x18] sm:$0xff]
  %v799 = vld [vmem:[%s3 + $0x20] sm:$0xff]
  %v800 = vld [vmem:[%s3 + $0x28] sm:$0xff]
  %v801 = vld [vmem:[%s3 + $0x30] sm:$0xff]
  %v802 = vld [vmem:[%s3 + $0x38] sm:$0xff]
  %v803 = vld [vmem:[%s3 + $0x40] sm:$0xff]
  %v804 = vld [vmem:[%s3 + $0x48] sm:$0xff]
  %v805 = vld [vmem:[%s3 + $0x50] sm:$0xff]
  %v806 = vld [vmem:[%s3 + $0x58] sm:$0xff]
  %v807 = vld [vmem:[%s3 + $0x60] sm:$0xff]
  %v808 = vld [vmem:[%s3 + $0x68] sm:$0xff]
  %v809 = vld [vmem:[%s3 + $0x70] sm:$0xff]
  %v810 = vld [vmem:[%s3 + $0x78] sm:$0xff]
  %s811 = scalar_lea.vmem %s5, 1
  %v812 = vld [vmem:[%s811] sm:$0x1]
  %v814 = vperm.slane %v812, 0
  %816 = vmatpush.msra.mxu0 %v810
  %817 = vmatpush.msra.mxu0 %v809
  %818 = vmatpush.msra.mxu0 %v808
  %819 = vmatpush.msra.mxu0 %v807
  %820 = vmatpush.msra.mxu0 %v806
  %821 = vmatpush.msra.mxu0 %v805
  %822 = vmatpush.msra.mxu0 %v804
  %823 = vmatpush.msra.mxu0 %v803
  %824 = vmatpush.msra.mxu0 %v802
  %825 = vmatpush.msra.mxu0 %v801
  %826 = vmatpush.msra.mxu0 %v800
  %827 = vmatpush.msra.mxu0 %v799
  %828 = vmatpush.msra.mxu0 %v798
  %829 = vmatpush.msra.mxu0 %v797
  %830 = vmatpush.msra.mxu0 %v796
  %831 = vmatpush.msra.mxu0 %v795
  %832 = vmatmul.f32.gmra.mxu0 %v787
  %v833 = vpop.f32.mrf.mxu0
  %v834 = vadd.f32 %v814, %v833
  %835 = vmatmul.f32.gmra.mxu0 %v788
  %v836 = vpop.f32.mrf.mxu0
  %v837 = vadd.f32 %v814, %v836
  %838 = vmatmul.f32.gmra.mxu0 %v789
  %v839 = vpop.f32.mrf.mxu0
  %v840 = vadd.f32 %v814, %v839
  %841 = vmatmul.f32.gmra.mxu0 %v790
  %v842 = vpop.f32.mrf.mxu0
  %v843 = vadd.f32 %v814, %v842
  %844 = vmatmul.f32.gmra.mxu0 %v791
  %v845 = vpop.f32.mrf.mxu0
  %v846 = vadd.f32 %v814, %v845
  %847 = vmatmul.f32.gmra.mxu0 %v792
  %v848 = vpop.f32.mrf.mxu0
  %v849 = vadd.f32 %v814, %v848
  %850 = vmatmul.f32.gmra.mxu0 %v793
  %v851 = vpop.f32.mrf.mxu0
  %v852 = vadd.f32 %v814, %v851
  %853 = vmatmul.f32.gmra.mxu0 %v794
  %v854 = vpop.f32.mrf.mxu0
  %v855 = vadd.f32 %v814, %v854
  %856 = vdwg.mxu0
  %857 = vst [vmem:[#allocation3] sm:$0xff] %v834
  %858 = vst [vmem:[#allocation3 + $0x8] sm:$0xff] %v837
  %859 = vst [vmem:[#allocation3 + $0x10] sm:$0xff] %v840
  %860 = vst [vmem:[#allocation3 + $0x18] sm:$0xff] %v843
  %861 = vst [vmem:[#allocation3 + $0x20] sm:$0xff] %v846
  %862 = vst [vmem:[#allocation3 + $0x28] sm:$0xff] %v849
  %863 = vst [vmem:[#allocation3 + $0x30] sm:$0xff] %v852
  %864 = vst [vmem:[#allocation3 + $0x38] sm:$0xff] %v855
  %s865 = scalar_lea.vmem %s4, 128
  %v866 = vld [vmem:[%s865] sm:$0xff]
  %v867 = vld [vmem:[%s865 + $0x8] sm:$0xff]
  %v868 = vld [vmem:[%s865 + $0x10] sm:$0xff]
  %v869 = vld [vmem:[%s865 + $0x18] sm:$0xff]
  %v870 = vld [vmem:[%s865 + $0x20] sm:$0xff]
  %v871 = vld [vmem:[%s865 + $0x28] sm:$0xff]
  %v872 = vld [vmem:[%s865 + $0x30] sm:$0xff]
  %v873 = vld [vmem:[%s865 + $0x38] sm:$0xff]
  %v874 = vld [vmem:[%s865 + $0x40] sm:$0xff]
  %v875 = vld [vmem:[%s865 + $0x48] sm:$0xff]
  %v876 = vld [vmem:[%s865 + $0x50] sm:$0xff]
  %v877 = vld [vmem:[%s865 + $0x58] sm:$0xff]
  %v878 = vld [vmem:[%s865 + $0x60] sm:$0xff]
  %v879 = vld [vmem:[%s865 + $0x68] sm:$0xff]
  %v880 = vld [vmem:[%s865 + $0x70] sm:$0xff]
  %v881 = vld [vmem:[%s865 + $0x78] sm:$0xff]
  %s882 = scalar_lea.vmem %s1, 8
  %v883 = vld [vmem:[%s882] sm:$0xff]
  %v884 = vld [vmem:[#allocation3] sm:$0xff]
  %885 = vmatpush.msra.mxu0 %v881
  %886 = vmatpush.msra.mxu0 %v880
  %887 = vmatpush.msra.mxu0 %v879
  %888 = vmatpush.msra.mxu0 %v878
  %889 = vmatpush.msra.mxu0 %v877
  %890 = vmatpush.msra.mxu0 %v876
  %891 = vmatpush.msra.mxu0 %v875
  %892 = vmatpush.msra.mxu0 %v874
  %893 = vmatpush.msra.mxu0 %v873
  %894 = vmatpush.msra.mxu0 %v872
  %895 = vmatpush.msra.mxu0 %v871
  %896 = vmatpush.msra.mxu0 %v870
  %897 = vmatpush.msra.mxu0 %v869
  %898 = vmatpush.msra.mxu0 %v868
  %899 = vmatpush.msra.mxu0 %v867
  %900 = vmatpush.msra.mxu0 %v866
  %901 = vmatmul.f32.gmra.mxu0 %v883
  %v902 = vpop.f32.mrf.mxu0
  %v903 = vadd.f32 0.0, %v902
  %904 = vdwg.mxu0
  %v905 = vadd.f32 %v884, %v903
  %v906 = vtanh.pop %v905
  %907 = vst [vmem:[#allocation2] sm:$0xff] %v906
  %v908 = vld [vmem:[%s604] sm:$0xff]
  %909 = vmatpush.msra.mxu0 %v881
  %910 = vmatpush.msra.mxu0 %v880
  %911 = vmatpush.msra.mxu0 %v879
  %912 = vmatpush.msra.mxu0 %v878
  %913 = vmatpush.msra.mxu0 %v877
  %914 = vmatpush.msra.mxu0 %v876
  %915 = vmatpush.msra.mxu0 %v875
  %916 = vmatpush.msra.mxu0 %v874
  %917 = vmatpush.msra.mxu0 %v873
  %918 = vmatpush.msra.mxu0 %v872
  %919 = vmatpush.msra.mxu0 %v871
  %920 = vmatpush.msra.mxu0 %v870
  %921 = vmatpush.msra.mxu0 %v869
  %922 = vmatpush.msra.mxu0 %v868
  %923 = vmatpush.msra.mxu0 %v867
  %924 = vmatpush.msra.mxu0 %v866
  %925 = vmatmul.f32.gmra.mxu0 %v906
  %v926 = vpop.f32.mrf.mxu0
  %v927 = vadd.f32 0.0, %v926
  %928 = vdwg.mxu0
  %v929 = vadd.f32 %v908, %v927
  %v930 = vtanh.pop %v929
  %931 = vst [vmem:[%s628] sm:$0xff] %v930
  %v932 = vld [vmem:[%s630] sm:$0xff]
  %933 = vmatpush.msra.mxu0 %v881
  %934 = vmatpush.msra.mxu0 %v880
  %935 = vmatpush.msra.mxu0 %v879
  %936 = vmatpush.msra.mxu0 %v878
  %937 = vmatpush.msra.mxu0 %v877
  %938 = vmatpush.msra.mxu0 %v876
  %939 = vmatpush.msra.mxu0 %v875
  %940 = vmatpush.msra.mxu0 %v874
  %941 = vmatpush.msra.mxu0 %v873
  %942 = vmatpush.msra.mxu0 %v872
  %943 = vmatpush.msra.mxu0 %v871
  %944 = vmatpush.msra.mxu0 %v870
  %945 = vmatpush.msra.mxu0 %v869
  %946 = vmatpush.msra.mxu0 %v868
  %947 = vmatpush.msra.mxu0 %v867
  %948 = vmatpush.msra.mxu0 %v866
  %949 = vmatmul.f32.gmra.mxu0 %v930
  %v950 = vpop.f32.mrf.mxu0
  %v951 = vadd.f32 0.0, %v950
  %952 = vdwg.mxu0
  %v953 = vadd.f32 %v932, %v951
  %v954 = vtanh.pop %v953
  %955 = vst [vmem:[%s654] sm:$0xff] %v954
  %v956 = vld [vmem:[%s656] sm:$0xff]
  %957 = vmatpush.msra.mxu0 %v881
  %958 = vmatpush.msra.mxu0 %v880
  %959 = vmatpush.msra.mxu0 %v879
  %960 = vmatpush.msra.mxu0 %v878
  %961 = vmatpush.msra.mxu0 %v877
  %962 = vmatpush.msra.mxu0 %v876
  %963 = vmatpush.msra.mxu0 %v875
  %964 = vmatpush.msra.mxu0 %v874
  %965 = vmatpush.msra.mxu0 %v873
  %966 = vmatpush.msra.mxu0 %v872
  %967 = vmatpush.msra.mxu0 %v871
  %968 = vmatpush.msra.mxu0 %v870
  %969 = vmatpush.msra.mxu0 %v869
  %970 = vmatpush.msra.mxu0 %v868
  %971 = vmatpush.msra.mxu0 %v867
  %972 = vmatpush.msra.mxu0 %v866
  %973 = vmatmul.f32.gmra.mxu0 %v954
  %v974 = vpop.f32.mrf.mxu0
  %v975 = vadd.f32 0.0, %v974
  %976 = vdwg.mxu0
  %v977 = vadd.f32 %v956, %v975
  %v978 = vtanh.pop %v977
  %979 = vst [vmem:[%s680] sm:$0xff] %v978
  %v980 = vld [vmem:[%s682] sm:$0xff]
  %981 = vmatpush.msra.mxu0 %v881
  %982 = vmatpush.msra.mxu0 %v880
  %983 = vmatpush.msra.mxu0 %v879
  %984 = vmatpush.msra.mxu0 %v878
  %985 = vmatpush.msra.mxu0 %v877
  %986 = vmatpush.msra.mxu0 %v876
  %987 = vmatpush.msra.mxu0 %v875
  %988 = vmatpush.msra.mxu0 %v874
  %989 = vmatpush.msra.mxu0 %v873
  %990 = vmatpush.msra.mxu0 %v872
  %991 = vmatpush.msra.mxu0 %v871
  %992 = vmatpush.msra.mxu0 %v870
  %993 = vmatpush.msra.mxu0 %v869
  %994 = vmatpush.msra.mxu0 %v868
  %995 = vmatpush.msra.mxu0 %v867
  %996 = vmatpush.msra.mxu0 %v866
  %997 = vmatmul.f32.gmra.mxu0 %v978
  %v998 = vpop.f32.mrf.mxu0
  %v999 = vadd.f32 0.0, %v998
  %1000 = vdwg.mxu0
  %v1001 = vadd.f32 %v980, %v999
  %v1002 = vtanh.pop %v1001
  %1003 = vst [vmem:[%s706] sm:$0xff] %v1002
  %v1004 = vld [vmem:[%s708] sm:$0xff]
  %1005 = vmatpush.msra.mxu0 %v881
  %1006 = vmatpush.msra.mxu0 %v880
  %1007 = vmatpush.msra.mxu0 %v879
  %1008 = vmatpush.msra.mxu0 %v878
  %1009 = vmatpush.msra.mxu0 %v877
  %1010 = vmatpush.msra.mxu0 %v876
  %1011 = vmatpush.msra.mxu0 %v875
  %1012 = vmatpush.msra.mxu0 %v874
  %1013 = vmatpush.msra.mxu0 %v873
  %1014 = vmatpush.msra.mxu0 %v872
  %1015 = vmatpush.msra.mxu0 %v871
  %1016 = vmatpush.msra.mxu0 %v870
  %1017 = vmatpush.msra.mxu0 %v869
  %1018 = vmatpush.msra.mxu0 %v868
  %1019 = vmatpush.msra.mxu0 %v867
  %1020 = vmatpush.msra.mxu0 %v866
  %1021 = vmatmul.f32.gmra.mxu0 %v1002
  %v1022 = vpop.f32.mrf.mxu0
  %v1023 = vadd.f32 0.0, %v1022
  %1024 = vdwg.mxu0
  %v1025 = vadd.f32 %v1004, %v1023
  %v1026 = vtanh.pop %v1025
  %1027 = vst [vmem:[%s732] sm:$0xff] %v1026
  %v1028 = vld [vmem:[%s734] sm:$0xff]
  %1029 = vmatpush.msra.mxu0 %v881
  %1030 = vmatpush.msra.mxu0 %v880
  %1031 = vmatpush.msra.mxu0 %v879
  %1032 = vmatpush.msra.mxu0 %v878
  %1033 = vmatpush.msra.mxu0 %v877
  %1034 = vmatpush.msra.mxu0 %v876
  %1035 = vmatpush.msra.mxu0 %v875
  %1036 = vmatpush.msra.mxu0 %v874
  %1037 = vmatpush.msra.mxu0 %v873
  %1038 = vmatpush.msra.mxu0 %v872
  %1039 = vmatpush.msra.mxu0 %v871
  %1040 = vmatpush.msra.mxu0 %v870
  %1041 = vmatpush.msra.mxu0 %v869
  %1042 = vmatpush.msra.mxu0 %v868
  %1043 = vmatpush.msra.mxu0 %v867
  %1044 = vmatpush.msra.mxu0 %v866
  %1045 = vmatmul.f32.gmra.mxu0 %v1026
  %v1046 = vpop.f32.mrf.mxu0
  %v1047 = vadd.f32 0.0, %v1046
  %1048 = vdwg.mxu0
  %v1049 = vadd.f32 %v1028, %v1047
  %v1050 = vtanh.pop %v1049
  %1051 = vst [vmem:[%s758] sm:$0xff] %v1050
  %v1052 = vld [vmem:[%s760] sm:$0xff]
  %1053 = vmatpush.msra.mxu0 %v881
  %1054 = vmatpush.msra.mxu0 %v880
  %1055 = vmatpush.msra.mxu0 %v879
  %1056 = vmatpush.msra.mxu0 %v878
  %1057 = vmatpush.msra.mxu0 %v877
  %1058 = vmatpush.msra.mxu0 %v876
  %1059 = vmatpush.msra.mxu0 %v875
  %1060 = vmatpush.msra.mxu0 %v874
  %1061 = vmatpush.msra.mxu0 %v873
  %1062 = vmatpush.msra.mxu0 %v872
  %1063 = vmatpush.msra.mxu0 %v871
  %1064 = vmatpush.msra.mxu0 %v870
  %1065 = vmatpush.msra.mxu0 %v869
  %1066 = vmatpush.msra.mxu0 %v868
  %1067 = vmatpush.msra.mxu0 %v867
  %1068 = vmatpush.msra.mxu0 %v866
  %1069 = vmatmul.f32.gmra.mxu0 %v1050
  %v1070 = vpop.f32.mrf.mxu0
  %v1071 = vadd.f32 0.0, %v1070
  %1072 = vdwg.mxu0
  %v1073 = vadd.f32 %v1052, %v1071
  %v1074 = vtanh.pop %v1073
  %1075 = vst [vmem:[%s784] sm:$0xff] %v1074
  %s1076 = scalar_lea.vmem %s9, 8
  %1077 = vst [vmem:[%s1076] sm:$0xff] %v1074
  %v1078 = vld [vmem:[#allocation2] sm:$0xff]
  %v1079 = vld [vmem:[#allocation2 + $0x8] sm:$0xff]
  %v1080 = vld [vmem:[#allocation2 + $0x10] sm:$0xff]
  %v1081 = vld [vmem:[#allocation2 + $0x18] sm:$0xff]
  %v1082 = vld [vmem:[#allocation2 + $0x20] sm:$0xff]
  %v1083 = vld [vmem:[#allocation2 + $0x28] sm:$0xff]
  %v1084 = vld [vmem:[#allocation2 + $0x30] sm:$0xff]
  %v1085 = vld [vmem:[#allocation2 + $0x38] sm:$0xff]
  %s1086 = scalar_lea.vmem %s3, 128
  %v1087 = vld [vmem:[%s1086] sm:$0xff]
  %v1088 = vld [vmem:[%s1086 + $0x8] sm:$0xff]
  %v1089 = vld [vmem:[%s1086 + $0x10] sm:$0xff]
  %v1090 = vld [vmem:[%s1086 + $0x18] sm:$0xff]
  %v1091 = vld [vmem:[%s1086 + $0x20] sm:$0xff]
  %v1092 = vld [vmem:[%s1086 + $0x28] sm:$0xff]
  %v1093 = vld [vmem:[%s1086 + $0x30] sm:$0xff]
  %v1094 = vld [vmem:[%s1086 + $0x38] sm:$0xff]
  %v1095 = vld [vmem:[%s1086 + $0x40] sm:$0xff]
  %v1096 = vld [vmem:[%s1086 + $0x48] sm:$0xff]
  %v1097 = vld [vmem:[%s1086 + $0x50] sm:$0xff]
  %v1098 = vld [vmem:[%s1086 + $0x58] sm:$0xff]
  %v1099 = vld [vmem:[%s1086 + $0x60] sm:$0xff]
  %v1100 = vld [vmem:[%s1086 + $0x68] sm:$0xff]
  %v1101 = vld [vmem:[%s1086 + $0x70] sm:$0xff]
  %v1102 = vld [vmem:[%s1086 + $0x78] sm:$0xff]
  %s1103 = scalar_lea.vmem %s5, 2
  %v1104 = vld [vmem:[%s1103] sm:$0x1]
  %v1106 = vperm.slane %v1104, 0
  %1108 = vmatpush.msra.mxu0 %v1102
  %1109 = vmatpush.msra.mxu0 %v1101
  %1110 = vmatpush.msra.mxu0 %v1100
  %1111 = vmatpush.msra.mxu0 %v1099
  %1112 = vmatpush.msra.mxu0 %v1098
  %1113 = vmatpush.msra.mxu0 %v1097
  %1114 = vmatpush.msra.mxu0 %v1096
  %1115 = vmatpush.msra.mxu0 %v1095
  %1116 = vmatpush.msra.mxu0 %v1094
  %1117 = vmatpush.msra.mxu0 %v1093
  %1118 = vmatpush.msra.mxu0 %v1092
  %1119 = vmatpush.msra.mxu0 %v1091
  %1120 = vmatpush.msra.mxu0 %v1090
  %1121 = vmatpush.msra.mxu0 %v1089
  %1122 = vmatpush.msra.mxu0 %v1088
  %1123 = vmatpush.msra.mxu0 %v1087
  %1124 = vmatmul.f32.gmra.mxu0 %v1078
  %v1125 = vpop.f32.mrf.mxu0
  %v1126 = vadd.f32 %v1106, %v1125
  %1127 = vmatmul.f32.gmra.mxu0 %v1079
  %v1128 = vpop.f32.mrf.mxu0
  %v1129 = vadd.f32 %v1106, %v1128
  %1130 = vmatmul.f32.gmra.mxu0 %v1080
  %v1131 = vpop.f32.mrf.mxu0
  %v1132 = vadd.f32 %v1106, %v1131
  %1133 = vmatmul.f32.gmra.mxu0 %v1081
  %v1134 = vpop.f32.mrf.mxu0
  %v1135 = vadd.f32 %v1106, %v1134
  %1136 = vmatmul.f32.gmra.mxu0 %v1082
  %v1137 = vpop.f32.mrf.mxu0
  %v1138 = vadd.f32 %v1106, %v1137
  %1139 = vmatmul.f32.gmra.mxu0 %v1083
  %v1140 = vpop.f32.mrf.mxu0
  %v1141 = vadd.f32 %v1106, %v1140
  %1142 = vmatmul.f32.gmra.mxu0 %v1084
  %v1143 = vpop.f32.mrf.mxu0
  %v1144 = vadd.f32 %v1106, %v1143
  %1145 = vmatmul.f32.gmra.mxu0 %v1085
  %v1146 = vpop.f32.mrf.mxu0
  %v1147 = vadd.f32 %v1106, %v1146
  %1148 = vdwg.mxu0
  %1149 = vst [vmem:[#allocation3] sm:$0xff] %v1126
  %1150 = vst [vmem:[#allocation3 + $0x8] sm:$0xff] %v1129
  %1151 = vst [vmem:[#allocation3 + $0x10] sm:$0xff] %v1132
  %1152 = vst [vmem:[#allocation3 + $0x18] sm:$0xff] %v1135
  %1153 = vst [vmem:[#allocation3 + $0x20] sm:$0xff] %v1138
  %1154 = vst [vmem:[#allocation3 + $0x28] sm:$0xff] %v1141
  %1155 = vst [vmem:[#allocation3 + $0x30] sm:$0xff] %v1144
  %1156 = vst [vmem:[#allocation3 + $0x38] sm:$0xff] %v1147
  %s1157 = scalar_lea.vmem %s4, 256
  %v1158 = vld [vmem:[%s1157] sm:$0xff]
  %v1159 = vld [vmem:[%s1157 + $0x8] sm:$0xff]
  %v1160 = vld [vmem:[%s1157 + $0x10] sm:$0xff]
  %v1161 = vld [vmem:[%s1157 + $0x18] sm:$0xff]
  %v1162 = vld [vmem:[%s1157 + $0x20] sm:$0xff]
  %v1163 = vld [vmem:[%s1157 + $0x28] sm:$0xff]
  %v1164 = vld [vmem:[%s1157 + $0x30] sm:$0xff]
  %v1165 = vld [vmem:[%s1157 + $0x38] sm:$0xff]
  %v1166 = vld [vmem:[%s1157 + $0x40] sm:$0xff]
  %v1167 = vld [vmem:[%s1157 + $0x48] sm:$0xff]
  %v1168 = vld [vmem:[%s1157 + $0x50] sm:$0xff]
  %v1169 = vld [vmem:[%s1157 + $0x58] sm:$0xff]
  %v1170 = vld [vmem:[%s1157 + $0x60] sm:$0xff]
  %v1171 = vld [vmem:[%s1157 + $0x68] sm:$0xff]
  %v1172 = vld [vmem:[%s1157 + $0x70] sm:$0xff]
  %v1173 = vld [vmem:[%s1157 + $0x78] sm:$0xff]
  %s1174 = scalar_lea.vmem %s1, 16
  %v1175 = vld [vmem:[%s1174] sm:$0xff]
  %v1176 = vld [vmem:[#allocation3] sm:$0xff]
  %1177 = vmatpush.msra.mxu0 %v1173
  %1178 = vmatpush.msra.mxu0 %v1172
  %1179 = vmatpush.msra.mxu0 %v1171
  %1180 = vmatpush.msra.mxu0 %v1170
  %1181 = vmatpush.msra.mxu0 %v1169
  %1182 = vmatpush.msra.mxu0 %v1168
  %1183 = vmatpush.msra.mxu0 %v1167
  %1184 = vmatpush.msra.mxu0 %v1166
  %1185 = vmatpush.msra.mxu0 %v1165
  %1186 = vmatpush.msra.mxu0 %v1164
  %1187 = vmatpush.msra.mxu0 %v1163
  %1188 = vmatpush.msra.mxu0 %v1162
  %1189 = vmatpush.msra.mxu0 %v1161
  %1190 = vmatpush.msra.mxu0 %v1160
  %1191 = vmatpush.msra.mxu0 %v1159
  %1192 = vmatpush.msra.mxu0 %v1158
  %1193 = vmatmul.f32.gmra.mxu0 %v1175
  %v1194 = vpop.f32.mrf.mxu0
  %v1195 = vadd.f32 0.0, %v1194
  %1196 = vdwg.mxu0
  %v1197 = vadd.f32 %v1176, %v1195
  %v1198 = vtanh.pop %v1197
  %1199 = vst [vmem:[#allocation2] sm:$0xff] %v1198
  %v1200 = vld [vmem:[%s604] sm:$0xff]
  %1201 = vmatpush.msra.mxu0 %v1173
  %1202 = vmatpush.msra.mxu0 %v1172
  %1203 = vmatpush.msra.mxu0 %v1171
  %1204 = vmatpush.msra.mxu0 %v1170
  %1205 = vmatpush.msra.mxu0 %v1169
  %1206 = vmatpush.msra.mxu0 %v1168
  %1207 = vmatpush.msra.mxu0 %v1167
  %1208 = vmatpush.msra.mxu0 %v1166
  %1209 = vmatpush.msra.mxu0 %v1165
  %1210 = vmatpush.msra.mxu0 %v1164
  %1211 = vmatpush.msra.mxu0 %v1163
  %1212 = vmatpush.msra.mxu0 %v1162
  %1213 = vmatpush.msra.mxu0 %v1161
  %1214 = vmatpush.msra.mxu0 %v1160
  %1215 = vmatpush.msra.mxu0 %v1159
  %1216 = vmatpush.msra.mxu0 %v1158
  %1217 = vmatmul.f32.gmra.mxu0 %v1198
  %v1218 = vpop.f32.mrf.mxu0
  %v1219 = vadd.f32 0.0, %v1218
  %1220 = vdwg.mxu0
  %v1221 = vadd.f32 %v1200, %v1219
  %v1222 = vtanh.pop %v1221
  %1223 = vst [vmem:[%s628] sm:$0xff] %v1222
  %v1224 = vld [vmem:[%s630] sm:$0xff]
  %1225 = vmatpush.msra.mxu0 %v1173
  %1226 = vmatpush.msra.mxu0 %v1172
  %1227 = vmatpush.msra.mxu0 %v1171
  %1228 = vmatpush.msra.mxu0 %v1170
  %1229 = vmatpush.msra.mxu0 %v1169
  %1230 = vmatpush.msra.mxu0 %v1168
  %1231 = vmatpush.msra.mxu0 %v1167
  %1232 = vmatpush.msra.mxu0 %v1166
  %1233 = vmatpush.msra.mxu0 %v1165
  %1234 = vmatpush.msra.mxu0 %v1164
  %1235 = vmatpush.msra.mxu0 %v1163
  %1236 = vmatpush.msra.mxu0 %v1162
  %1237 = vmatpush.msra.mxu0 %v1161
  %1238 = vmatpush.msra.mxu0 %v1160
  %1239 = vmatpush.msra.mxu0 %v1159
  %1240 = vmatpush.msra.mxu0 %v1158
  %1241 = vmatmul.f32.gmra.mxu0 %v1222
  %v1242 = vpop.f32.mrf.mxu0
  %v1243 = vadd.f32 0.0, %v1242
  %1244 = vdwg.mxu0
  %v1245 = vadd.f32 %v1224, %v1243
  %v1246 = vtanh.pop %v1245
  %1247 = vst [vmem:[%s654] sm:$0xff] %v1246
  %v1248 = vld [vmem:[%s656] sm:$0xff]
  %1249 = vmatpush.msra.mxu0 %v1173
  %1250 = vmatpush.msra.mxu0 %v1172
  %1251 = vmatpush.msra.mxu0 %v1171
  %1252 = vmatpush.msra.mxu0 %v1170
  %1253 = vmatpush.msra.mxu0 %v1169
  %1254 = vmatpush.msra.mxu0 %v1168
  %1255 = vmatpush.msra.mxu0 %v1167
  %1256 = vmatpush.msra.mxu0 %v1166
  %1257 = vmatpush.msra.mxu0 %v1165
  %1258 = vmatpush.msra.mxu0 %v1164
  %1259 = vmatpush.msra.mxu0 %v1163
  %1260 = vmatpush.msra.mxu0 %v1162
  %1261 = vmatpush.msra.mxu0 %v1161
  %1262 = vmatpush.msra.mxu0 %v1160
  %1263 = vmatpush.msra.mxu0 %v1159
  %1264 = vmatpush.msra.mxu0 %v1158
  %1265 = vmatmul.f32.gmra.mxu0 %v1246
  %v1266 = vpop.f32.mrf.mxu0
  %v1267 = vadd.f32 0.0, %v1266
  %1268 = vdwg.mxu0
  %v1269 = vadd.f32 %v1248, %v1267
  %v1270 = vtanh.pop %v1269
  %1271 = vst [vmem:[%s680] sm:$0xff] %v1270
  %v1272 = vld [vmem:[%s682] sm:$0xff]
  %1273 = vmatpush.msra.mxu0 %v1173
  %1274 = vmatpush.msra.mxu0 %v1172
  %1275 = vmatpush.msra.mxu0 %v1171
  %1276 = vmatpush.msra.mxu0 %v1170
  %1277 = vmatpush.msra.mxu0 %v1169
  %1278 = vmatpush.msra.mxu0 %v1168
  %1279 = vmatpush.msra.mxu0 %v1167
  %1280 = vmatpush.msra.mxu0 %v1166
  %1281 = vmatpush.msra.mxu0 %v1165
  %1282 = vmatpush.msra.mxu0 %v1164
  %1283 = vmatpush.msra.mxu0 %v1163
  %1284 = vmatpush.msra.mxu0 %v1162
  %1285 = vmatpush.msra.mxu0 %v1161
  %1286 = vmatpush.msra.mxu0 %v1160
  %1287 = vmatpush.msra.mxu0 %v1159
  %1288 = vmatpush.msra.mxu0 %v1158
  %1289 = vmatmul.f32.gmra.mxu0 %v1270
  %v1290 = vpop.f32.mrf.mxu0
  %v1291 = vadd.f32 0.0, %v1290
  %1292 = vdwg.mxu0
  %v1293 = vadd.f32 %v1272, %v1291
  %v1294 = vtanh.pop %v1293
  %1295 = vst [vmem:[%s706] sm:$0xff] %v1294
  %v1296 = vld [vmem:[%s708] sm:$0xff]
  %1297 = vmatpush.msra.mxu0 %v1173
  %1298 = vmatpush.msra.mxu0 %v1172
  %1299 = vmatpush.msra.mxu0 %v1171
  %1300 = vmatpush.msra.mxu0 %v1170
  %1301 = vmatpush.msra.mxu0 %v1169
  %1302 = vmatpush.msra.mxu0 %v1168
  %1303 = vmatpush.msra.mxu0 %v1167
  %1304 = vmatpush.msra.mxu0 %v1166
  %1305 = vmatpush.msra.mxu0 %v1165
  %1306 = vmatpush.msra.mxu0 %v1164
  %1307 = vmatpush.msra.mxu0 %v1163
  %1308 = vmatpush.msra.mxu0 %v1162
  %1309 = vmatpush.msra.mxu0 %v1161
  %1310 = vmatpush.msra.mxu0 %v1160
  %1311 = vmatpush.msra.mxu0 %v1159
  %1312 = vmatpush.msra.mxu0 %v1158
  %1313 = vmatmul.f32.gmra.mxu0 %v1294
  %v1314 = vpop.f32.mrf.mxu0
  %v1315 = vadd.f32 0.0, %v1314
  %1316 = vdwg.mxu0
  %v1317 = vadd.f32 %v1296, %v1315
  %v1318 = vtanh.pop %v1317
  %1319 = vst [vmem:[%s732] sm:$0xff] %v1318
  %v1320 = vld [vmem:[%s734] sm:$0xff]
  %1321 = vmatpush.msra.mxu0 %v1173
  %1322 = vmatpush.msra.mxu0 %v1172
  %1323 = vmatpush.msra.mxu0 %v1171
  %1324 = vmatpush.msra.mxu0 %v1170
  %1325 = vmatpush.msra.mxu0 %v1169
  %1326 = vmatpush.msra.mxu0 %v1168
  %1327 = vmatpush.msra.mxu0 %v1167
  %1328 = vmatpush.msra.mxu0 %v1166
  %1329 = vmatpush.msra.mxu0 %v1165
  %1330 = vmatpush.msra.mxu0 %v1164
  %1331 = vmatpush.msra.mxu0 %v1163
  %1332 = vmatpush.msra.mxu0 %v1162
  %1333 = vmatpush.msra.mxu0 %v1161
  %1334 = vmatpush.msra.mxu0 %v1160
  %1335 = vmatpush.msra.mxu0 %v1159
  %1336 = vmatpush.msra.mxu0 %v1158
  %1337 = vmatmul.f32.gmra.mxu0 %v1318
  %v1338 = vpop.f32.mrf.mxu0
  %v1339 = vadd.f32 0.0, %v1338
  %1340 = vdwg.mxu0
  %v1341 = vadd.f32 %v1320, %v1339
  %v1342 = vtanh.pop %v1341
  %1343 = vst [vmem:[%s758] sm:$0xff] %v1342
  %v1344 = vld [vmem:[%s760] sm:$0xff]
  %1345 = vmatpush.msra.mxu0 %v1173
  %1346 = vmatpush.msra.mxu0 %v1172
  %1347 = vmatpush.msra.mxu0 %v1171
  %1348 = vmatpush.msra.mxu0 %v1170
  %1349 = vmatpush.msra.mxu0 %v1169
  %1350 = vmatpush.msra.mxu0 %v1168
  %1351 = vmatpush.msra.mxu0 %v1167
  %1352 = vmatpush.msra.mxu0 %v1166
  %1353 = vmatpush.msra.mxu0 %v1165
  %1354 = vmatpush.msra.mxu0 %v1164
  %1355 = vmatpush.msra.mxu0 %v1163
  %1356 = vmatpush.msra.mxu0 %v1162
  %1357 = vmatpush.msra.mxu0 %v1161
  %1358 = vmatpush.msra.mxu0 %v1160
  %1359 = vmatpush.msra.mxu0 %v1159
  %1360 = vmatpush.msra.mxu0 %v1158
  %1361 = vmatmul.f32.gmra.mxu0 %v1342
  %v1362 = vpop.f32.mrf.mxu0
  %v1363 = vadd.f32 0.0, %v1362
  %1364 = vdwg.mxu0
  %v1365 = vadd.f32 %v1344, %v1363
  %v1366 = vtanh.pop %v1365
  %1367 = vst [vmem:[%s784] sm:$0xff] %v1366
  %s1368 = scalar_lea.vmem %s9, 16
  %1369 = vst [vmem:[%s1368] sm:$0xff] %v1366
  %v1370 = vld [vmem:[#allocation2] sm:$0xff]
  %v1371 = vld [vmem:[#allocation2 + $0x8] sm:$0xff]
  %v1372 = vld [vmem:[#allocation2 + $0x10] sm:$0xff]
  %v1373 = vld [vmem:[#allocation2 + $0x18] sm:$0xff]
  %v1374 = vld [vmem:[#allocation2 + $0x20] sm:$0xff]
  %v1375 = vld [vmem:[#allocation2 + $0x28] sm:$0xff]
  %v1376 = vld [vmem:[#allocation2 + $0x30] sm:$0xff]
  %v1377 = vld [vmem:[#allocation2 + $0x38] sm:$0xff]
  %s1378 = scalar_lea.vmem %s3, 256
  %v1379 = vld [vmem:[%s1378] sm:$0xff]
  %v1380 = vld [vmem:[%s1378 + $0x8] sm:$0xff]
  %v1381 = vld [vmem:[%s1378 + $0x10] sm:$0xff]
  %v1382 = vld [vmem:[%s1378 + $0x18] sm:$0xff]
  %v1383 = vld [vmem:[%s1378 + $0x20] sm:$0xff]
  %v1384 = vld [vmem:[%s1378 + $0x28] sm:$0xff]
  %v1385 = vld [vmem:[%s1378 + $0x30] sm:$0xff]
  %v1386 = vld [vmem:[%s1378 + $0x38] sm:$0xff]
  %v1387 = vld [vmem:[%s1378 + $0x40] sm:$0xff]
  %v1388 = vld [vmem:[%s1378 + $0x48] sm:$0xff]
  %v1389 = vld [vmem:[%s1378 + $0x50] sm:$0xff]
  %v1390 = vld [vmem:[%s1378 + $0x58] sm:$0xff]
  %v1391 = vld [vmem:[%s1378 + $0x60] sm:$0xff]
  %v1392 = vld [vmem:[%s1378 + $0x68] sm:$0xff]
  %v1393 = vld [vmem:[%s1378 + $0x70] sm:$0xff]
  %v1394 = vld [vmem:[%s1378 + $0x78] sm:$0xff]
  %s1395 = scalar_lea.vmem %s5, 3
  %v1396 = vld [vmem:[%s1395] sm:$0x1]
  %v1398 = vperm.slane %v1396, 0
  %1400 = vmatpush.msra.mxu0 %v1394
  %1401 = vmatpush.msra.mxu0 %v1393
  %1402 = vmatpush.msra.mxu0 %v1392
  %1403 = vmatpush.msra.mxu0 %v1391
  %1404 = vmatpush.msra.mxu0 %v1390
  %1405 = vmatpush.msra.mxu0 %v1389
  %1406 = vmatpush.msra.mxu0 %v1388
  %1407 = vmatpush.msra.mxu0 %v1387
  %1408 = vmatpush.msra.mxu0 %v1386
  %1409 = vmatpush.msra.mxu0 %v1385
  %1410 = vmatpush.msra.mxu0 %v1384
  %1411 = vmatpush.msra.mxu0 %v1383
  %1412 = vmatpush.msra.mxu0 %v1382
  %1413 = vmatpush.msra.mxu0 %v1381
  %1414 = vmatpush.msra.mxu0 %v1380
  %1415 = vmatpush.msra.mxu0 %v1379
  %1416 = vmatmul.f32.gmra.mxu0 %v1370
  %v1417 = vpop.f32.mrf.mxu0
  %v1418 = vadd.f32 %v1398, %v1417
  %1419 = vmatmul.f32.gmra.mxu0 %v1371
  %v1420 = vpop.f32.mrf.mxu0
  %v1421 = vadd.f32 %v1398, %v1420
  %1422 = vmatmul.f32.gmra.mxu0 %v1372
  %v1423 = vpop.f32.mrf.mxu0
  %v1424 = vadd.f32 %v1398, %v1423
  %1425 = vmatmul.f32.gmra.mxu0 %v1373
  %v1426 = vpop.f32.mrf.mxu0
  %v1427 = vadd.f32 %v1398, %v1426
  %1428 = vmatmul.f32.gmra.mxu0 %v1374
  %v1429 = vpop.f32.mrf.mxu0
  %v1430 = vadd.f32 %v1398, %v1429
  %1431 = vmatmul.f32.gmra.mxu0 %v1375
  %v1432 = vpop.f32.mrf.mxu0
  %v1433 = vadd.f32 %v1398, %v1432
  %1434 = vmatmul.f32.gmra.mxu0 %v1376
  %v1435 = vpop.f32.mrf.mxu0
  %v1436 = vadd.f32 %v1398, %v1435
  %1437 = vmatmul.f32.gmra.mxu0 %v1377
  %v1438 = vpop.f32.mrf.mxu0
  %v1439 = vadd.f32 %v1398, %v1438
  %1440 = vdwg.mxu0
  %1441 = vst [vmem:[#allocation3] sm:$0xff] %v1418
  %1442 = vst [vmem:[#allocation3 + $0x8] sm:$0xff] %v1421
  %1443 = vst [vmem:[#allocation3 + $0x10] sm:$0xff] %v1424
  %1444 = vst [vmem:[#allocation3 + $0x18] sm:$0xff] %v1427
  %1445 = vst [vmem:[#allocation3 + $0x20] sm:$0xff] %v1430
  %1446 = vst [vmem:[#allocation3 + $0x28] sm:$0xff] %v1433
  %1447 = vst [vmem:[#allocation3 + $0x30] sm:$0xff] %v1436
  %1448 = vst [vmem:[#allocation3 + $0x38] sm:$0xff] %v1439
  %s1449 = scalar_lea.vmem %s4, 384
  %v1450 = vld [vmem:[%s1449] sm:$0xff]
  %v1451 = vld [vmem:[%s1449 + $0x8] sm:$0xff]
  %v1452 = vld [vmem:[%s1449 + $0x10] sm:$0xff]
  %v1453 = vld [vmem:[%s1449 + $0x18] sm:$0xff]
  %v1454 = vld [vmem:[%s1449 + $0x20] sm:$0xff]
  %v1455 = vld [vmem:[%s1449 + $0x28] sm:$0xff]
  %v1456 = vld [vmem:[%s1449 + $0x30] sm:$0xff]
  %v1457 = vld [vmem:[%s1449 + $0x38] sm:$0xff]
  %v1458 = vld [vmem:[%s1449 + $0x40] sm:$0xff]
  %v1459 = vld [vmem:[%s1449 + $0x48] sm:$0xff]
  %v1460 = vld [vmem:[%s1449 + $0x50] sm:$0xff]
  %v1461 = vld [vmem:[%s1449 + $0x58] sm:$0xff]
  %v1462 = vld [vmem:[%s1449 + $0x60] sm:$0xff]
  %v1463 = vld [vmem:[%s1449 + $0x68] sm:$0xff]
  %v1464 = vld [vmem:[%s1449 + $0x70] sm:$0xff]
  %v1465 = vld [vmem:[%s1449 + $0x78] sm:$0xff]
  %s1466 = scalar_lea.vmem %s1, 24
  %v1467 = vld [vmem:[%s1466] sm:$0xff]
  %v1468 = vld [vmem:[#allocation3] sm:$0xff]
  %1469 = vmatpush.msra.mxu0 %v1465
  %1470 = vmatpush.msra.mxu0 %v1464
  %1471 = vmatpush.msra.mxu0 %v1463
  %1472 = vmatpush.msra.mxu0 %v1462
  %1473 = vmatpush.msra.mxu0 %v1461
  %1474 = vmatpush.msra.mxu0 %v1460
  %1475 = vmatpush.msra.mxu0 %v1459
  %1476 = vmatpush.msra.mxu0 %v1458
  %1477 = vmatpush.msra.mxu0 %v1457
  %1478 = vmatpush.msra.mxu0 %v1456
  %1479 = vmatpush.msra.mxu0 %v1455
  %1480 = vmatpush.msra.mxu0 %v1454
  %1481 = vmatpush.msra.mxu0 %v1453
  %1482 = vmatpush.msra.mxu0 %v1452
  %1483 = vmatpush.msra.mxu0 %v1451
  %1484 = vmatpush.msra.mxu0 %v1450
  %1485 = vmatmul.f32.gmra.mxu0 %v1467
  %v1486 = vpop.f32.mrf.mxu0
  %v1487 = vadd.f32 0.0, %v1486
  %1488 = vdwg.mxu0
  %v1489 = vadd.f32 %v1468, %v1487
  %v1490 = vtanh.pop %v1489
  %1491 = vst [vmem:[#allocation2] sm:$0xff] %v1490
  %v1492 = vld [vmem:[%s604] sm:$0xff]
  %1493 = vmatpush.msra.mxu0 %v1465
  %1494 = vmatpush.msra.mxu0 %v1464
  %1495 = vmatpush.msra.mxu0 %v1463
  %1496 = vmatpush.msra.mxu0 %v1462
  %1497 = vmatpush.msra.mxu0 %v1461
  %1498 = vmatpush.msra.mxu0 %v1460
  %1499 = vmatpush.msra.mxu0 %v1459
  %1500 = vmatpush.msra.mxu0 %v1458
  %1501 = vmatpush.msra.mxu0 %v1457
  %1502 = vmatpush.msra.mxu0 %v1456
  %1503 = vmatpush.msra.mxu0 %v1455
  %1504 = vmatpush.msra.mxu0 %v1454
  %1505 = vmatpush.msra.mxu0 %v1453
  %1506 = vmatpush.msra.mxu0 %v1452
  %1507 = vmatpush.msra.mxu0 %v1451
  %1508 = vmatpush.msra.mxu0 %v1450
  %1509 = vmatmul.f32.gmra.mxu0 %v1490
  %v1510 = vpop.f32.mrf.mxu0
  %v1511 = vadd.f32 0.0, %v1510
  %1512 = vdwg.mxu0
  %v1513 = vadd.f32 %v1492, %v1511
  %v1514 = vtanh.pop %v1513
  %1515 = vst [vmem:[%s628] sm:$0xff] %v1514
  %v1516 = vld [vmem:[%s630] sm:$0xff]
  %1517 = vmatpush.msra.mxu0 %v1465
  %1518 = vmatpush.msra.mxu0 %v1464
  %1519 = vmatpush.msra.mxu0 %v1463
  %1520 = vmatpush.msra.mxu0 %v1462
  %1521 = vmatpush.msra.mxu0 %v1461
  %1522 = vmatpush.msra.mxu0 %v1460
  %1523 = vmatpush.msra.mxu0 %v1459
  %1524 = vmatpush.msra.mxu0 %v1458
  %1525 = vmatpush.msra.mxu0 %v1457
  %1526 = vmatpush.msra.mxu0 %v1456
  %1527 = vmatpush.msra.mxu0 %v1455
  %1528 = vmatpush.msra.mxu0 %v1454
  %1529 = vmatpush.msra.mxu0 %v1453
  %1530 = vmatpush.msra.mxu0 %v1452
  %1531 = vmatpush.msra.mxu0 %v1451
  %1532 = vmatpush.msra.mxu0 %v1450
  %1533 = vmatmul.f32.gmra.mxu0 %v1514
  %v1534 = vpop.f32.mrf.mxu0
  %v1535 = vadd.f32 0.0, %v1534
  %1536 = vdwg.mxu0
  %v1537 = vadd.f32 %v1516, %v1535
  %v1538 = vtanh.pop %v1537
  %1539 = vst [vmem:[%s654] sm:$0xff] %v1538
  %v1540 = vld [vmem:[%s656] sm:$0xff]
  %1541 = vmatpush.msra.mxu0 %v1465
  %1542 = vmatpush.msra.mxu0 %v1464
  %1543 = vmatpush.msra.mxu0 %v1463
  %1544 = vmatpush.msra.mxu0 %v1462
  %1545 = vmatpush.msra.mxu0 %v1461
  %1546 = vmatpush.msra.mxu0 %v1460
  %1547 = vmatpush.msra.mxu0 %v1459
  %1548 = vmatpush.msra.mxu0 %v1458
  %1549 = vmatpush.msra.mxu0 %v1457
  %1550 = vmatpush.msra.mxu0 %v1456
  %1551 = vmatpush.msra.mxu0 %v1455
  %1552 = vmatpush.msra.mxu0 %v1454
  %1553 = vmatpush.msra.mxu0 %v1453
  %1554 = vmatpush.msra.mxu0 %v1452
  %1555 = vmatpush.msra.mxu0 %v1451
  %1556 = vmatpush.msra.mxu0 %v1450
  %1557 = vmatmul.f32.gmra.mxu0 %v1538
  %v1558 = vpop.f32.mrf.mxu0
  %v1559 = vadd.f32 0.0, %v1558
  %1560 = vdwg.mxu0
  %v1561 = vadd.f32 %v1540, %v1559
  %v1562 = vtanh.pop %v1561
  %1563 = vst [vmem:[%s680] sm:$0xff] %v1562
  %v1564 = vld [vmem:[%s682] sm:$0xff]
  %1565 = vmatpush.msra.mxu0 %v1465
  %1566 = vmatpush.msra.mxu0 %v1464
  %1567 = vmatpush.msra.mxu0 %v1463
  %1568 = vmatpush.msra.mxu0 %v1462
  %1569 = vmatpush.msra.mxu0 %v1461
  %1570 = vmatpush.msra.mxu0 %v1460
  %1571 = vmatpush.msra.mxu0 %v1459
  %1572 = vmatpush.msra.mxu0 %v1458
  %1573 = vmatpush.msra.mxu0 %v1457
  %1574 = vmatpush.msra.mxu0 %v1456
  %1575 = vmatpush.msra.mxu0 %v1455
  %1576 = vmatpush.msra.mxu0 %v1454
  %1577 = vmatpush.msra.mxu0 %v1453
  %1578 = vmatpush.msra.mxu0 %v1452
  %1579 = vmatpush.msra.mxu0 %v1451
  %1580 = vmatpush.msra.mxu0 %v1450
  %1581 = vmatmul.f32.gmra.mxu0 %v1562
  %v1582 = vpop.f32.mrf.mxu0
  %v1583 = vadd.f32 0.0, %v1582
  %1584 = vdwg.mxu0
  %v1585 = vadd.f32 %v1564, %v1583
  %v1586 = vtanh.pop %v1585
  %1587 = vst [vmem:[%s706] sm:$0xff] %v1586
  %v1588 = vld [vmem:[%s708] sm:$0xff]
  %1589 = vmatpush.msra.mxu0 %v1465
  %1590 = vmatpush.msra.mxu0 %v1464
  %1591 = vmatpush.msra.mxu0 %v1463
  %1592 = vmatpush.msra.mxu0 %v1462
  %1593 = vmatpush.msra.mxu0 %v1461
  %1594 = vmatpush.msra.mxu0 %v1460
  %1595 = vmatpush.msra.mxu0 %v1459
  %1596 = vmatpush.msra.mxu0 %v1458
  %1597 = vmatpush.msra.mxu0 %v1457
  %1598 = vmatpush.msra.mxu0 %v1456
  %1599 = vmatpush.msra.mxu0 %v1455
  %1600 = vmatpush.msra.mxu0 %v1454
  %1601 = vmatpush.msra.mxu0 %v1453
  %1602 = vmatpush.msra.mxu0 %v1452
  %1603 = vmatpush.msra.mxu0 %v1451
  %1604 = vmatpush.msra.mxu0 %v1450
  %1605 = vmatmul.f32.gmra.mxu0 %v1586
  %v1606 = vpop.f32.mrf.mxu0
  %v1607 = vadd.f32 0.0, %v1606
  %1608 = vdwg.mxu0
  %v1609 = vadd.f32 %v1588, %v1607
  %v1610 = vtanh.pop %v1609
  %1611 = vst [vmem:[%s732] sm:$0xff] %v1610
  %v1612 = vld [vmem:[%s734] sm:$0xff]
  %1613 = vmatpush.msra.mxu0 %v1465
  %1614 = vmatpush.msra.mxu0 %v1464
  %1615 = vmatpush.msra.mxu0 %v1463
  %1616 = vmatpush.msra.mxu0 %v1462
  %1617 = vmatpush.msra.mxu0 %v1461
  %1618 = vmatpush.msra.mxu0 %v1460
  %1619 = vmatpush.msra.mxu0 %v1459
  %1620 = vmatpush.msra.mxu0 %v1458
  %1621 = vmatpush.msra.mxu0 %v1457
  %1622 = vmatpush.msra.mxu0 %v1456
  %1623 = vmatpush.msra.mxu0 %v1455
  %1624 = vmatpush.msra.mxu0 %v1454
  %1625 = vmatpush.msra.mxu0 %v1453
  %1626 = vmatpush.msra.mxu0 %v1452
  %1627 = vmatpush.msra.mxu0 %v1451
  %1628 = vmatpush.msra.mxu0 %v1450
  %1629 = vmatmul.f32.gmra.mxu0 %v1610
  %v1630 = vpop.f32.mrf.mxu0
  %v1631 = vadd.f32 0.0, %v1630
  %1632 = vdwg.mxu0
  %v1633 = vadd.f32 %v1612, %v1631
  %v1634 = vtanh.pop %v1633
  %1635 = vst [vmem:[%s758] sm:$0xff] %v1634
  %v1636 = vld [vmem:[%s760] sm:$0xff]
  %1637 = vmatpush.msra.mxu0 %v1465
  %1638 = vmatpush.msra.mxu0 %v1464
  %1639 = vmatpush.msra.mxu0 %v1463
  %1640 = vmatpush.msra.mxu0 %v1462
  %1641 = vmatpush.msra.mxu0 %v1461
  %1642 = vmatpush.msra.mxu0 %v1460
  %1643 = vmatpush.msra.mxu0 %v1459
  %1644 = vmatpush.msra.mxu0 %v1458
  %1645 = vmatpush.msra.mxu0 %v1457
  %1646 = vmatpush.msra.mxu0 %v1456
  %1647 = vmatpush.msra.mxu0 %v1455
  %1648 = vmatpush.msra.mxu0 %v1454
  %1649 = vmatpush.msra.mxu0 %v1453
  %1650 = vmatpush.msra.mxu0 %v1452
  %1651 = vmatpush.msra.mxu0 %v1451
  %1652 = vmatpush.msra.mxu0 %v1450
  %1653 = vmatmul.f32.gmra.mxu0 %v1634
  %v1654 = vpop.f32.mrf.mxu0
  %v1655 = vadd.f32 0.0, %v1654
  %1656 = vdwg.mxu0
  %v1657 = vadd.f32 %v1636, %v1655
  %v1658 = vtanh.pop %v1657
  %1659 = vst [vmem:[%s784] sm:$0xff] %v1658
  %s1660 = scalar_lea.vmem %s9, 24
  %1661 = vst [vmem:[%s1660] sm:$0xff] %v1658
  %v1662 = vld [vmem:[#allocation2] sm:$0xff]
  %v1663 = vld [vmem:[#allocation2 + $0x8] sm:$0xff]
  %v1664 = vld [vmem:[#allocation2 + $0x10] sm:$0xff]
  %v1665 = vld [vmem:[#allocation2 + $0x18] sm:$0xff]
  %v1666 = vld [vmem:[#allocation2 + $0x20] sm:$0xff]
  %v1667 = vld [vmem:[#allocation2 + $0x28] sm:$0xff]
  %v1668 = vld [vmem:[#allocation2 + $0x30] sm:$0xff]
  %v1669 = vld [vmem:[#allocation2 + $0x38] sm:$0xff]
  %s1670 = scalar_lea.vmem %s3, 384
  %v1671 = vld [vmem:[%s1670] sm:$0xff]
  %v1672 = vld [vmem:[%s1670 + $0x8] sm:$0xff]
  %v1673 = vld [vmem:[%s1670 + $0x10] sm:$0xff]
  %v1674 = vld [vmem:[%s1670 + $0x18] sm:$0xff]
  %v1675 = vld [vmem:[%s1670 + $0x20] sm:$0xff]
  %v1676 = vld [vmem:[%s1670 + $0x28] sm:$0xff]
  %v1677 = vld [vmem:[%s1670 + $0x30] sm:$0xff]
  %v1678 = vld [vmem:[%s1670 + $0x38] sm:$0xff]
  %v1679 = vld [vmem:[%s1670 + $0x40] sm:$0xff]
  %v1680 = vld [vmem:[%s1670 + $0x48] sm:$0xff]
  %v1681 = vld [vmem:[%s1670 + $0x50] sm:$0xff]
  %v1682 = vld [vmem:[%s1670 + $0x58] sm:$0xff]
  %v1683 = vld [vmem:[%s1670 + $0x60] sm:$0xff]
  %v1684 = vld [vmem:[%s1670 + $0x68] sm:$0xff]
  %v1685 = vld [vmem:[%s1670 + $0x70] sm:$0xff]
  %v1686 = vld [vmem:[%s1670 + $0x78] sm:$0xff]
  %s1687 = scalar_lea.vmem %s5, 4
  %v1688 = vld [vmem:[%s1687] sm:$0x1]
  %v1690 = vperm.slane %v1688, 0
  %1692 = vmatpush.msra.mxu0 %v1686
  %1693 = vmatpush.msra.mxu0 %v1685
  %1694 = vmatpush.msra.mxu0 %v1684
  %1695 = vmatpush.msra.mxu0 %v1683
  %1696 = vmatpush.msra.mxu0 %v1682
  %1697 = vmatpush.msra.mxu0 %v1681
  %1698 = vmatpush.msra.mxu0 %v1680
  %1699 = vmatpush.msra.mxu0 %v1679
  %1700 = vmatpush.msra.mxu0 %v1678
  %1701 = vmatpush.msra.mxu0 %v1677
  %1702 = vmatpush.msra.mxu0 %v1676
  %1703 = vmatpush.msra.mxu0 %v1675
  %1704 = vmatpush.msra.mxu0 %v1674
  %1705 = vmatpush.msra.mxu0 %v1673
  %1706 = vmatpush.msra.mxu0 %v1672
  %1707 = vmatpush.msra.mxu0 %v1671
  %1708 = vmatmul.f32.gmra.mxu0 %v1662
  %v1709 = vpop.f32.mrf.mxu0
  %v1710 = vadd.f32 %v1690, %v1709
  %1711 = vmatmul.f32.gmra.mxu0 %v1663
  %v1712 = vpop.f32.mrf.mxu0
  %v1713 = vadd.f32 %v1690, %v1712
  %1714 = vmatmul.f32.gmra.mxu0 %v1664
  %v1715 = vpop.f32.mrf.mxu0
  %v1716 = vadd.f32 %v1690, %v1715
  %1717 = vmatmul.f32.gmra.mxu0 %v1665
  %v1718 = vpop.f32.mrf.mxu0
  %v1719 = vadd.f32 %v1690, %v1718
  %1720 = vmatmul.f32.gmra.mxu0 %v1666
  %v1721 = vpop.f32.mrf.mxu0
  %v1722 = vadd.f32 %v1690, %v1721
  %1723 = vmatmul.f32.gmra.mxu0 %v1667
  %v1724 = vpop.f32.mrf.mxu0
  %v1725 = vadd.f32 %v1690, %v1724
  %1726 = vmatmul.f32.gmra.mxu0 %v1668
  %v1727 = vpop.f32.mrf.mxu0
  %v1728 = vadd.f32 %v1690, %v1727
  %1729 = vmatmul.f32.gmra.mxu0 %v1669
  %v1730 = vpop.f32.mrf.mxu0
  %v1731 = vadd.f32 %v1690, %v1730
  %1732 = vdwg.mxu0
  %1733 = vst [vmem:[#allocation3] sm:$0xff] %v1710
  %1734 = vst [vmem:[#allocation3 + $0x8] sm:$0xff] %v1713
  %1735 = vst [vmem:[#allocation3 + $0x10] sm:$0xff] %v1716
  %1736 = vst [vmem:[#allocation3 + $0x18] sm:$0xff] %v1719
  %1737 = vst [vmem:[#allocation3 + $0x20] sm:$0xff] %v1722
  %1738 = vst [vmem:[#allocation3 + $0x28] sm:$0xff] %v1725
  %1739 = vst [vmem:[#allocation3 + $0x30] sm:$0xff] %v1728
  %1740 = vst [vmem:[#allocation3 + $0x38] sm:$0xff] %v1731
  %s1741 = scalar_lea.vmem %s4, 512
  %v1742 = vld [vmem:[%s1741] sm:$0xff]
  %v1743 = vld [vmem:[%s1741 + $0x8] sm:$0xff]
  %v1744 = vld [vmem:[%s1741 + $0x10] sm:$0xff]
  %v1745 = vld [vmem:[%s1741 + $0x18] sm:$0xff]
  %v1746 = vld [vmem:[%s1741 + $0x20] sm:$0xff]
  %v1747 = vld [vmem:[%s1741 + $0x28] sm:$0xff]
  %v1748 = vld [vmem:[%s1741 + $0x30] sm:$0xff]
  %v1749 = vld [vmem:[%s1741 + $0x38] sm:$0xff]
  %v1750 = vld [vmem:[%s1741 + $0x40] sm:$0xff]
  %v1751 = vld [vmem:[%s1741 + $0x48] sm:$0xff]
  %v1752 = vld [vmem:[%s1741 + $0x50] sm:$0xff]
  %v1753 = vld [vmem:[%s1741 + $0x58] sm:$0xff]
  %v1754 = vld [vmem:[%s1741 + $0x60] sm:$0xff]
  %v1755 = vld [vmem:[%s1741 + $0x68] sm:$0xff]
  %v1756 = vld [vmem:[%s1741 + $0x70] sm:$0xff]
  %v1757 = vld [vmem:[%s1741 + $0x78] sm:$0xff]
  %s1758 = scalar_lea.vmem %s1, 32
  %v1759 = vld [vmem:[%s1758] sm:$0xff]
  %v1760 = vld [vmem:[#allocation3] sm:$0xff]
  %1761 = vmatpush.msra.mxu0 %v1757
  %1762 = vmatpush.msra.mxu0 %v1756
  %1763 = vmatpush.msra.mxu0 %v1755
  %1764 = vmatpush.msra.mxu0 %v1754
  %1765 = vmatpush.msra.mxu0 %v1753
  %1766 = vmatpush.msra.mxu0 %v1752
  %1767 = vmatpush.msra.mxu0 %v1751
  %1768 = vmatpush.msra.mxu0 %v1750
  %1769 = vmatpush.msra.mxu0 %v1749
  %1770 = vmatpush.msra.mxu0 %v1748
  %1771 = vmatpush.msra.mxu0 %v1747
  %1772 = vmatpush.msra.mxu0 %v1746
  %1773 = vmatpush.msra.mxu0 %v1745
  %1774 = vmatpush.msra.mxu0 %v1744
  %1775 = vmatpush.msra.mxu0 %v1743
  %1776 = vmatpush.msra.mxu0 %v1742
  %1777 = vmatmul.f32.gmra.mxu0 %v1759
  %v1778 = vpop.f32.mrf.mxu0
  %v1779 = vadd.f32 0.0, %v1778
  %1780 = vdwg.mxu0
  %v1781 = vadd.f32 %v1760, %v1779
  %v1782 = vtanh.pop %v1781
  %1783 = vst [vmem:[#allocation2] sm:$0xff] %v1782
  %v1784 = vld [vmem:[%s604] sm:$0xff]
  %1785 = vmatpush.msra.mxu0 %v1757
  %1786 = vmatpush.msra.mxu0 %v1756
  %1787 = vmatpush.msra.mxu0 %v1755
  %1788 = vmatpush.msra.mxu0 %v1754
  %1789 = vmatpush.msra.mxu0 %v1753
  %1790 = vmatpush.msra.mxu0 %v1752
  %1791 = vmatpush.msra.mxu0 %v1751
  %1792 = vmatpush.msra.mxu0 %v1750
  %1793 = vmatpush.msra.mxu0 %v1749
  %1794 = vmatpush.msra.mxu0 %v1748
  %1795 = vmatpush.msra.mxu0 %v1747
  %1796 = vmatpush.msra.mxu0 %v1746
  %1797 = vmatpush.msra.mxu0 %v1745
  %1798 = vmatpush.msra.mxu0 %v1744
  %1799 = vmatpush.msra.mxu0 %v1743
  %1800 = vmatpush.msra.mxu0 %v1742
  %1801 = vmatmul.f32.gmra.mxu0 %v1782
  %v1802 = vpop.f32.mrf.mxu0
  %v1803 = vadd.f32 0.0, %v1802
  %1804 = vdwg.mxu0
  %v1805 = vadd.f32 %v1784, %v1803
  %v1806 = vtanh.pop %v1805
  %1807 = vst [vmem:[%s628] sm:$0xff] %v1806
  %v1808 = vld [vmem:[%s630] sm:$0xff]
  %1809 = vmatpush.msra.mxu0 %v1757
  %1810 = vmatpush.msra.mxu0 %v1756
  %1811 = vmatpush.msra.mxu0 %v1755
  %1812 = vmatpush.msra.mxu0 %v1754
  %1813 = vmatpush.msra.mxu0 %v1753
  %1814 = vmatpush.msra.mxu0 %v1752
  %1815 = vmatpush.msra.mxu0 %v1751
  %1816 = vmatpush.msra.mxu0 %v1750
  %1817 = vmatpush.msra.mxu0 %v1749
  %1818 = vmatpush.msra.mxu0 %v1748
  %1819 = vmatpush.msra.mxu0 %v1747
  %1820 = vmatpush.msra.mxu0 %v1746
  %1821 = vmatpush.msra.mxu0 %v1745
  %1822 = vmatpush.msra.mxu0 %v1744
  %1823 = vmatpush.msra.mxu0 %v1743
  %1824 = vmatpush.msra.mxu0 %v1742
  %1825 = vmatmul.f32.gmra.mxu0 %v1806
  %v1826 = vpop.f32.mrf.mxu0
  %v1827 = vadd.f32 0.0, %v1826
  %1828 = vdwg.mxu0
  %v1829 = vadd.f32 %v1808, %v1827
  %v1830 = vtanh.pop %v1829
  %1831 = vst [vmem:[%s654] sm:$0xff] %v1830
  %v1832 = vld [vmem:[%s656] sm:$0xff]
  %1833 = vmatpush.msra.mxu0 %v1757
  %1834 = vmatpush.msra.mxu0 %v1756
  %1835 = vmatpush.msra.mxu0 %v1755
  %1836 = vmatpush.msra.mxu0 %v1754
  %1837 = vmatpush.msra.mxu0 %v1753
  %1838 = vmatpush.msra.mxu0 %v1752
  %1839 = vmatpush.msra.mxu0 %v1751
  %1840 = vmatpush.msra.mxu0 %v1750
  %1841 = vmatpush.msra.mxu0 %v1749
  %1842 = vmatpush.msra.mxu0 %v1748
  %1843 = vmatpush.msra.mxu0 %v1747
  %1844 = vmatpush.msra.mxu0 %v1746
  %1845 = vmatpush.msra.mxu0 %v1745
  %1846 = vmatpush.msra.mxu0 %v1744
  %1847 = vmatpush.msra.mxu0 %v1743
  %1848 = vmatpush.msra.mxu0 %v1742
  %1849 = vmatmul.f32.gmra.mxu0 %v1830
  %v1850 = vpop.f32.mrf.mxu0
  %v1851 = vadd.f32 0.0, %v1850
  %1852 = vdwg.mxu0
  %v1853 = vadd.f32 %v1832, %v1851
  %v1854 = vtanh.pop %v1853
  %1855 = vst [vmem:[%s680] sm:$0xff] %v1854
  %v1856 = vld [vmem:[%s682] sm:$0xff]
  %1857 = vmatpush.msra.mxu0 %v1757
  %1858 = vmatpush.msra.mxu0 %v1756
  %1859 = vmatpush.msra.mxu0 %v1755
  %1860 = vmatpush.msra.mxu0 %v1754
  %1861 = vmatpush.msra.mxu0 %v1753
  %1862 = vmatpush.msra.mxu0 %v1752
  %1863 = vmatpush.msra.mxu0 %v1751
  %1864 = vmatpush.msra.mxu0 %v1750
  %1865 = vmatpush.msra.mxu0 %v1749
  %1866 = vmatpush.msra.mxu0 %v1748
  %1867 = vmatpush.msra.mxu0 %v1747
  %1868 = vmatpush.msra.mxu0 %v1746
  %1869 = vmatpush.msra.mxu0 %v1745
  %1870 = vmatpush.msra.mxu0 %v1744
  %1871 = vmatpush.msra.mxu0 %v1743
  %1872 = vmatpush.msra.mxu0 %v1742
  %1873 = vmatmul.f32.gmra.mxu0 %v1854
  %v1874 = vpop.f32.mrf.mxu0
  %v1875 = vadd.f32 0.0, %v1874
  %1876 = vdwg.mxu0
  %v1877 = vadd.f32 %v1856, %v1875
  %v1878 = vtanh.pop %v1877
  %1879 = vst [vmem:[%s706] sm:$0xff] %v1878
  %v1880 = vld [vmem:[%s708] sm:$0xff]
  %1881 = vmatpush.msra.mxu0 %v1757
  %1882 = vmatpush.msra.mxu0 %v1756
  %1883 = vmatpush.msra.mxu0 %v1755
  %1884 = vmatpush.msra.mxu0 %v1754
  %1885 = vmatpush.msra.mxu0 %v1753
  %1886 = vmatpush.msra.mxu0 %v1752
  %1887 = vmatpush.msra.mxu0 %v1751
  %1888 = vmatpush.msra.mxu0 %v1750
  %1889 = vmatpush.msra.mxu0 %v1749
  %1890 = vmatpush.msra.mxu0 %v1748
  %1891 = vmatpush.msra.mxu0 %v1747
  %1892 = vmatpush.msra.mxu0 %v1746
  %1893 = vmatpush.msra.mxu0 %v1745
  %1894 = vmatpush.msra.mxu0 %v1744
  %1895 = vmatpush.msra.mxu0 %v1743
  %1896 = vmatpush.msra.mxu0 %v1742
  %1897 = vmatmul.f32.gmra.mxu0 %v1878
  %v1898 = vpop.f32.mrf.mxu0
  %v1899 = vadd.f32 0.0, %v1898
  %1900 = vdwg.mxu0
  %v1901 = vadd.f32 %v1880, %v1899
  %v1902 = vtanh.pop %v1901
  %1903 = vst [vmem:[%s732] sm:$0xff] %v1902
  %v1904 = vld [vmem:[%s734] sm:$0xff]
  %1905 = vmatpush.msra.mxu0 %v1757
  %1906 = vmatpush.msra.mxu0 %v1756
  %1907 = vmatpush.msra.mxu0 %v1755
  %1908 = vmatpush.msra.mxu0 %v1754
  %1909 = vmatpush.msra.mxu0 %v1753
  %1910 = vmatpush.msra.mxu0 %v1752
  %1911 = vmatpush.msra.mxu0 %v1751
  %1912 = vmatpush.msra.mxu0 %v1750
  %1913 = vmatpush.msra.mxu0 %v1749
  %1914 = vmatpush.msra.mxu0 %v1748
  %1915 = vmatpush.msra.mxu0 %v1747
  %1916 = vmatpush.msra.mxu0 %v1746
  %1917 = vmatpush.msra.mxu0 %v1745
  %1918 = vmatpush.msra.mxu0 %v1744
  %1919 = vmatpush.msra.mxu0 %v1743
  %1920 = vmatpush.msra.mxu0 %v1742
  %1921 = vmatmul.f32.gmra.mxu0 %v1902
  %v1922 = vpop.f32.mrf.mxu0
  %v1923 = vadd.f32 0.0, %v1922
  %1924 = vdwg.mxu0
  %v1925 = vadd.f32 %v1904, %v1923
  %v1926 = vtanh.pop %v1925
  %1927 = vst [vmem:[%s758] sm:$0xff] %v1926
  %v1928 = vld [vmem:[%s760] sm:$0xff]
  %1929 = vmatpush.msra.mxu0 %v1757
  %1930 = vmatpush.msra.mxu0 %v1756
  %1931 = vmatpush.msra.mxu0 %v1755
  %1932 = vmatpush.msra.mxu0 %v1754
  %1933 = vmatpush.msra.mxu0 %v1753
  %1934 = vmatpush.msra.mxu0 %v1752
  %1935 = vmatpush.msra.mxu0 %v1751
  %1936 = vmatpush.msra.mxu0 %v1750
  %1937 = vmatpush.msra.mxu0 %v1749
  %1938 = vmatpush.msra.mxu0 %v1748
  %1939 = vmatpush.msra.mxu0 %v1747
  %1940 = vmatpush.msra.mxu0 %v1746
  %1941 = vmatpush.msra.mxu0 %v1745
  %1942 = vmatpush.msra.mxu0 %v1744
  %1943 = vmatpush.msra.mxu0 %v1743
  %1944 = vmatpush.msra.mxu0 %v1742
  %1945 = vmatmul.f32.gmra.mxu0 %v1926
  %v1946 = vpop.f32.mrf.mxu0
  %v1947 = vadd.f32 0.0, %v1946
  %1948 = vdwg.mxu0
  %v1949 = vadd.f32 %v1928, %v1947
  %v1950 = vtanh.pop %v1949
  %1951 = vst [vmem:[%s784] sm:$0xff] %v1950
  %s1952 = scalar_lea.vmem %s9, 32
  %1953 = vst [vmem:[%s1952] sm:$0xff] %v1950
  %v1954 = vld [vmem:[#allocation2] sm:$0xff]
  %v1955 = vld [vmem:[#allocation2 + $0x8] sm:$0xff]
  %v1956 = vld [vmem:[#allocation2 + $0x10] sm:$0xff]
  %v1957 = vld [vmem:[#allocation2 + $0x18] sm:$0xff]
  %v1958 = vld [vmem:[#allocation2 + $0x20] sm:$0xff]
  %v1959 = vld [vmem:[#allocation2 + $0x28] sm:$0xff]
  %v1960 = vld [vmem:[#allocation2 + $0x30] sm:$0xff]
  %v1961 = vld [vmem:[#allocation2 + $0x38] sm:$0xff]
  %v1962 = vld [vmem:[%s6] sm:$0xff]
  %v1963 = vld [vmem:[%s6 + $0x8] sm:$0xff]
  %v1964 = vld [vmem:[%s6 + $0x10] sm:$0xff]
  %v1965 = vld [vmem:[%s6 + $0x18] sm:$0xff]
  %v1966 = vld [vmem:[%s6 + $0x20] sm:$0xff]
  %v1967 = vld [vmem:[%s6 + $0x28] sm:$0xff]
  %v1968 = vld [vmem:[%s6 + $0x30] sm:$0xff]
  %v1969 = vld [vmem:[%s6 + $0x38] sm:$0xff]
  %v1970 = vld [vmem:[%s6 + $0x40] sm:$0xff]
  %v1971 = vld [vmem:[%s6 + $0x48] sm:$0xff]
  %v1972 = vld [vmem:[%s6 + $0x50] sm:$0xff]
  %v1973 = vld [vmem:[%s6 + $0x58] sm:$0xff]
  %v1974 = vld [vmem:[%s6 + $0x60] sm:$0xff]
  %v1975 = vld [vmem:[%s6 + $0x68] sm:$0xff]
  %v1976 = vld [vmem:[%s6 + $0x70] sm:$0xff]
  %v1977 = vld [vmem:[%s6 + $0x78] sm:$0xff]
  %v1978 = vld [vmem:[%s7] sm:$0x1]
  %v1980 = vperm.slane %v1978, 0
  %1982 = vmatpush.msra.mxu0 %v1977
  %1983 = vmatpush.msra.mxu0 %v1976
  %1984 = vmatpush.msra.mxu0 %v1975
  %1985 = vmatpush.msra.mxu0 %v1974
  %1986 = vmatpush.msra.mxu0 %v1973
  %1987 = vmatpush.msra.mxu0 %v1972
  %1988 = vmatpush.msra.mxu0 %v1971
  %1989 = vmatpush.msra.mxu0 %v1970
  %1990 = vmatpush.msra.mxu0 %v1969
  %1991 = vmatpush.msra.mxu0 %v1968
  %1992 = vmatpush.msra.mxu0 %v1967
  %1993 = vmatpush.msra.mxu0 %v1966
  %1994 = vmatpush.msra.mxu0 %v1965
  %1995 = vmatpush.msra.mxu0 %v1964
  %1996 = vmatpush.msra.mxu0 %v1963
  %1997 = vmatpush.msra.mxu0 %v1962
  %1998 = vmatmul.f32.gmra.mxu0 %v1954
  %v1999 = vpop.f32.mrf.mxu0
  %v2000 = vadd.f32 %v1980, %v1999
  %2001 = vmatmul.f32.gmra.mxu0 %v1955
  %v2002 = vpop.f32.mrf.mxu0
  %v2003 = vadd.f32 %v1980, %v2002
  %2004 = vmatmul.f32.gmra.mxu0 %v1956
  %v2005 = vpop.f32.mrf.mxu0
  %v2006 = vadd.f32 %v1980, %v2005
  %2007 = vmatmul.f32.gmra.mxu0 %v1957
  %v2008 = vpop.f32.mrf.mxu0
  %v2009 = vadd.f32 %v1980, %v2008
  %2010 = vmatmul.f32.gmra.mxu0 %v1958
  %v2011 = vpop.f32.mrf.mxu0
  %v2012 = vadd.f32 %v1980, %v2011
  %2013 = vmatmul.f32.gmra.mxu0 %v1959
  %v2014 = vpop.f32.mrf.mxu0
  %v2015 = vadd.f32 %v1980, %v2014
  %2016 = vmatmul.f32.gmra.mxu0 %v1960
  %v2017 = vpop.f32.mrf.mxu0
  %v2018 = vadd.f32 %v1980, %v2017
  %2019 = vmatmul.f32.gmra.mxu0 %v1961
  %v2020 = vpop.f32.mrf.mxu0
  %v2021 = vadd.f32 %v1980, %v2020
  %2022 = vdwg.mxu0
  %2023 = vst [vmem:[%s8] sm:$0xff] %v2000
  %2024 = vst [vmem:[%s8 + $0x8] sm:$0xff] %v2003
  %2025 = vst [vmem:[%s8 + $0x10] sm:$0xff] %v2006
  %2026 = vst [vmem:[%s8 + $0x18] sm:$0xff] %v2009
  %2027 = vst [vmem:[%s8 + $0x20] sm:$0xff] %v2012
  %2028 = vst [vmem:[%s8 + $0x28] sm:$0xff] %v2015
  %2029 = vst [vmem:[%s8 + $0x30] sm:$0xff] %v2018
  %2030 = vst [vmem:[%s8 + $0x38] sm:$0xff] %v2021
  // Predicated region
  $region34: #{rnn_forward.1} parent=0 // pred_check
    _
  $region35: #{rnn_forward.1} parent=0 // pred_check_branch
    %2032 = sbr.rel (0) target = $region37
  $region36: #{rnn_forward.1} parent=0 // pred_region
    _
  $region37: #{rnn_forward.1} parent=0 // pred_fallthru
    _
  // Predicated region
  $region38: #{rnn_forward.1} parent=0 // pred_check
    _
  $region39: #{rnn_forward.1} parent=0 // pred_check_branch
    %2034 = sbr.rel (0) target = $region41
  $region40: #{rnn_forward.1} parent=0 // pred_region
    _
  $region41: #{rnn_forward.1} parent=0 // pred_fallthru
    _
  // Predicated region
  $region42: #{rnn_forward.1} parent=0 // pred_check
    _
  $region43: #{rnn_forward.1} parent=0 // pred_check_branch
    %2036 = sbr.rel (0) target = $region45
  $region44: #{rnn_forward.1} parent=0 // pred_region
    _
  $region45: #{rnn_forward.1} parent=0 // pred_fallthru
    _
  // Predicated region
  $region46: #{rnn_forward.1} parent=0 // pred_check
    _
  $region47: #{rnn_forward.1} parent=0 // pred_check_branch
    %2038 = sbr.rel (0) target = $region49
  $region48: #{rnn_forward.1} parent=0 // pred_region
    _
  $region49: #{rnn_forward.1} parent=0 // pred_fallthru
    _

</llo_original>
